<compile_context>
chip_gen: v7x
topology: tpu7x:2x2x1
jax: 0.10.0
libtpu: 0.0.40
codegen_flags: <defaults>
</compile_context>

<pallas_src>
import functools

import jax
import jax.numpy as jnp
from jax.experimental import pallas as pl
from jax.experimental.pallas import tpu as pltpu


def _round_up(x, m):
    return ((x + m - 1) // m) * m


# ----------------------------------------------------------------------------
# Fused: Conv3x3 (pad=1) + folded BatchNorm + ReLU (+ optional fused 2x2 maxpool)
# ----------------------------------------------------------------------------
# The padded image lives in a VMEM scratch with the real image stored at a
# sublane-aligned column offset (_PAD_COL); per-tap windows are then read with
# cheap unaligned f32 vector loads at offsets _PAD_COL-1 .. _PAD_COL+1.
#
# TODO(synk): for realistic resolutions (>=224x224) tile the grid over output
#             row blocks (1-row halo) / Cout and raise vmem_limit_bytes
#             (v7x: 64 MiB physical, v5e: 16 MiB default scoped VMEM).
# TODO(synk): first layer (Cin=3) could im2col the 27 taps into one K=27 matmul.

_PAD_COL = 8  # sublane-aligned column where the real image starts inside the scratch


def _conv3x3_bn_relu_kernel(x_ref, w_ref, scale_ref, bias_ref, o_ref, xp_ref,
                            *pool_scratch, pool):
    # x_ref    : (1, H, W, Cin)   bf16
    # w_ref    : (3, 3, Cin, Cout) bf16 (HWIO)
    # scale_ref: (1, Cout) f32    folded BN scale
    # bias_ref : (1, Cout) f32    folded (conv bias + BN) bias
    # o_ref    : (1, H, W, Cout) or (1, H//2, W//2, Cout)  bf16
    # xp_ref   : (H+2, WP, Cin) f32 scratch (zero-padded image)
    # pool_scratch: optional (H, Wd, Cout) f32 scratch for the fused maxpool
    _, H, W, Cin = x_ref.shape
    Cout = o_ref.shape[-1]
    Wd = _round_up(W, 8)  # matmul row-block width; mult of 8 -> layout-no-op reshape

    # Build the zero-padded image in VMEM (border rows/cols stay zero).
    xp_ref[...] = jnp.zeros_like(xp_ref)
    xp_ref[pl.ds(1, H), pl.ds(_PAD_COL, W), :] = x_ref[0].astype(jnp.float32)

    # 9 taps -> 9 large matmuls, accumulated in f32 registers.
    acc = jnp.zeros((H * Wd, Cout), jnp.float32)
    for dy in range(3):
        for dx in range(3):
            lhs = xp_ref[pl.ds(dy, H), pl.ds(_PAD_COL - 1 + dx, Wd), :]  # (H, Wd, Cin)
            lhs = lhs.reshape(H * Wd, Cin).astype(jnp.bfloat16)
            acc = acc + jnp.dot(lhs, w_ref[dy, dx],
                                preferred_element_type=jnp.float32)

    # Folded BatchNorm + ReLU in f32.
    y = jnp.maximum(acc * scale_ref[0] + bias_ref[0], 0.0)
    y = y.reshape(H, Wd, Cout)

    if not pool:
        o_ref[0] = y[:, :W, :].astype(o_ref.dtype)
    else:
        (p_ref,) = pool_scratch
        Ho, Wo = H // 2, W // 2
        # 2x2 / stride-2 maxpool fused into the epilogue, fully vectorized with
        # strided VMEM loads and a single dense (Ho, Wo, Cout) output store.
        p_ref[...] = y
        rmax = jnp.maximum(p_ref[pl.ds(0, Ho, stride=2)],
                           p_ref[pl.ds(1, Ho, stride=2)])          # (Ho, Wd, Cout)
        p_ref[pl.ds(0, Ho)] = rmax
        o_ref[0] = jnp.maximum(
            p_ref[pl.ds(0, Ho), pl.ds(0, Wo, stride=2), :],
            p_ref[pl.ds(0, Ho), pl.ds(1, Wo, stride=2), :]).astype(o_ref.dtype)


def conv3x3_bn_relu(x, w, scale, bias, *, pool=False):
    # x: (N, H, W, Cin) bf16 ; w: (3,3,Cin,Cout) bf16 ; scale/bias: (Cout,) f32
    N, H, W, Cin = x.shape
    Cout = w.shape[-1]
    Wd = _round_up(W, 8)
    WP = _PAD_COL + Wd + 2  # image at col _PAD_COL, tap windows read cols 7..Wd+8

    if pool:
        assert H % 2 == 0 and W % 2 == 0
        out_h, out_w = H // 2, W // 2
    else:
        out_h, out_w = H, W

    scratch = [pltpu.VMEM((H + 2, WP, Cin), jnp.float32)]
    if pool:
        scratch.append(pltpu.VMEM((H, Wd, Cout), jnp.float32))

    kernel = functools.partial(_conv3x3_bn_relu_kernel, pool=pool)
    return pl.pallas_call(
        kernel,
        out_shape=jax.ShapeDtypeStruct((N, out_h, out_w, Cout), jnp.bfloat16),
        grid=(N,),
        in_specs=[
            pl.BlockSpec((1, H, W, Cin), lambda n: (n, 0, 0, 0)),
            pl.BlockSpec((3, 3, Cin, Cout), lambda n: (0, 0, 0, 0)),
            pl.BlockSpec((1, Cout), lambda n: (0, 0)),
            pl.BlockSpec((1, Cout), lambda n: (0, 0)),
        ],
        out_specs=pl.BlockSpec((1, out_h, out_w, Cout), lambda n: (n, 0, 0, 0)),
        scratch_shapes=scratch,
        compiler_params=pltpu.CompilerParams(dimension_semantics=("parallel",)),
    )(x, w, scale.reshape(1, Cout), bias.reshape(1, Cout))


# ----------------------------------------------------------------------------
# Linear (x @ W + b), optional ReLU, tiled over (N, K) with K-accumulation
# ----------------------------------------------------------------------------
def _linear_kernel(x_ref, w_ref, b_ref, o_ref, acc_ref, *, relu):
    k = pl.program_id(1)

    @pl.when(k == 0)
    def _init():
        acc_ref[...] = jnp.zeros_like(acc_ref)

    acc_ref[...] += jnp.dot(x_ref[...], w_ref[...],
                            preferred_element_type=jnp.float32)

    @pl.when(k == pl.num_programs(1) - 1)
    def _fin():
        y = acc_ref[...] + b_ref[...]
        if relu:
            y = jnp.maximum(y, 0.0)
        o_ref[...] = y.astype(o_ref.dtype)


def linear(x, w, b, *, relu, tk, tn, out_dtype):
    # x: (M, K) bf16 ; w: (K, Nf) bf16 (pre-transposed vs. torch) ; b: (Nf,) f32
    M, K = x.shape
    Nf = w.shape[1]
    assert K % tk == 0 and Nf % tn == 0
    kernel = functools.partial(_linear_kernel, relu=relu)
    return pl.pallas_call(
        kernel,
        out_shape=jax.ShapeDtypeStruct((M, Nf), out_dtype),
        grid=(Nf // tn, K // tk),
        in_specs=[
            pl.BlockSpec((M, tk), lambda j, k: (0, k)),
            pl.BlockSpec((tk, tn), lambda j, k: (k, j)),
            # bias block index only depends on j, so it is not re-DMA'd per K step
            pl.BlockSpec((1, tn), lambda j, k: (0, j)),
        ],
        out_specs=pl.BlockSpec((M, tn), lambda j, k: (0, j)),
        scratch_shapes=[pltpu.VMEM((M, tn), jnp.float32)],
        compiler_params=pltpu.CompilerParams(
            dimension_semantics=("parallel", "arbitrary")),
    )(x, w, b.reshape(1, Nf))


# ----------------------------------------------------------------------------
# AdaptiveAvgPool2d((7,7)) + Flatten (torch NCHW flatten order) — tiny jnp glue
# ----------------------------------------------------------------------------
def adaptive_avg_pool_flatten(x, oh=7, ow=7):
    N, H, W, C = x.shape
    xf = x.astype(jnp.float32)
    rows = []
    for i in range(oh):
        hs, he = (i * H) // oh, -(-((i + 1) * H) // oh)
        cols = []
        for j in range(ow):
            ws, we = (j * W) // ow, -(-((j + 1) * W) // ow)
            cols.append(jnp.mean(xf[:, hs:he, ws:we, :], axis=(1, 2)))   # (N, C)
        rows.append(jnp.stack(cols, axis=1))                             # (N, ow, C)
    p = jnp.stack(rows, axis=1)                                          # (N, oh, ow, C)
    p = jnp.transpose(p, (0, 3, 1, 2))                                   # (N, C, oh, ow)
    return p.reshape(N, C * oh * ow)


# ----------------------------------------------------------------------------
# Parameter init (deterministic, synthetic) + forward
# ----------------------------------------------------------------------------
_BN_EPS = 1e-5
_CFG = [64, 64, "M", 128, 128, "M", 256, 256, "M", 512, 512, "M"]


def _init_conv_bn(key, cin, cout):
    k1, k2, k3, k4, k5, k6 = jax.random.split(key, 6)
    w = jax.random.normal(k1, (3, 3, cin, cout), jnp.float32) / jnp.sqrt(9.0 * cin)
    conv_b = 0.01 * jax.random.normal(k2, (cout,), jnp.float32)
    gamma = 1.0 + 0.1 * jax.random.normal(k3, (cout,), jnp.float32)
    beta = 0.1 * jax.random.normal(k4, (cout,), jnp.float32)
    run_mean = 0.1 * jax.random.normal(k5, (cout,), jnp.float32)
    run_var = jnp.abs(1.0 + 0.1 * jax.random.normal(k6, (cout,), jnp.float32))
    scale = gamma / jnp.sqrt(run_var + _BN_EPS)
    bias = (conv_b - run_mean) * scale + beta
    return w.astype(jnp.bfloat16), scale, bias


def _init_linear(key, cin, cout):
    k1, k2 = jax.random.split(key)
    w = jax.random.normal(k1, (cin, cout), jnp.float32) / jnp.sqrt(float(cin))
    b = 0.01 * jax.random.normal(k2, (cout,), jnp.float32)
    return w.astype(jnp.bfloat16), b


def init_params(key, num_classes=2):
    params = {"convs": []}
    cin = 3
    for c in _CFG:
        if c == "M":
            continue
        key, sub = jax.random.split(key)
        params["convs"].append(_init_conv_bn(sub, cin, c))
        cin = c
    key, k1 = jax.random.split(key)
    params["fc1"] = _init_linear(k1, 512 * 7 * 7, 4096)
    key, k2 = jax.random.split(key)
    params["fc2"] = _init_linear(k2, 4096, 4096)
    key, k3 = jax.random.split(key)
    params["fc3"] = _init_linear(k3, 4096, num_classes)
    return params


def crowd_detection_forward(x_nchw, params):
    # x_nchw: (N, 3, H, W) float32 — same convention as the PyTorch module.
    x = jnp.transpose(x_nchw, (0, 2, 3, 1)).astype(jnp.bfloat16)  # -> NHWC bf16
    ci = 0
    i = 0
    while i < len(_CFG):
        w, s, b = params["convs"][ci]
        ci += 1
        pool = (i + 1 < len(_CFG)) and (_CFG[i + 1] == "M")
        x = conv3x3_bn_relu(x, w, s, b, pool=pool)   # maxpool fused when present
        i += 2 if pool else 1

    x = adaptive_avg_pool_flatten(x, 7, 7).astype(jnp.bfloat16)   # (N, 512*49)
    w1, b1 = params["fc1"]
    w2, b2 = params["fc2"]
    w3, b3 = params["fc3"]
    x = linear(x, w1, b1, relu=True, tk=1792, tn=1024, out_dtype=jnp.bfloat16)
    # Dropout(0.5): identity in eval mode.
    x = linear(x, w2, b2, relu=True, tk=2048, tn=1024, out_dtype=jnp.bfloat16)
    # Dropout(0.5): identity in eval mode.
    x = linear(x, w3, b3, relu=False, tk=2048, tn=w3.shape[1], out_dtype=jnp.float32)
    return x


if __name__ == "__main__":
    key = jax.random.PRNGKey(0)
    key, pkey, xkey = jax.random.split(key, 3)
    params = init_params(pkey, num_classes=2)
    x = jax.random.normal(xkey, (2, 3, 16, 16), jnp.float32)  # NCHW like PyTorch
    out = crowd_detection_forward(x, params)
    out = jax.block_until_ready(out)
    assert out.shape == (2, 2) and out.dtype == jnp.float32
    print("KERNEL_OK")
</pallas_src>

<mosaic_0001>
module attributes {stable_mosaic.version = 11 : i64} {
  func.func @_conv3x3_bn_relu_kernel(%arg0: i32, %arg1: memref<1x16x16x3xbf16, #tpu.memory_space<vmem>>, %arg2: memref<3x3x3x64xbf16, #tpu.memory_space<vmem>>, %arg3: memref<1x64xf32, #tpu.memory_space<vmem>>, %arg4: memref<1x64xf32, #tpu.memory_space<vmem>>, %arg5: memref<1x16x16x64xbf16, #tpu.memory_space<vmem>>, %arg6: memref<18x26x3xf32, #tpu.memory_space<vmem>>) attributes {dimension_semantics = [#tpu.dimension_semantics<parallel>], iteration_bounds = array<i64: 2>, scalar_prefetch = 0 : i64, scratch_operands = 1 : i64, tpu.core_type = #tpu.core_type<tc>, window_params = [{transform_indices = @transform_0, window_bounds = array<i64: 1, 16, 16, 3>}, {pipeline_mode = #tpu.pipeline_mode<synchronous>, transform_indices = @transform_1, window_bounds = array<i64: 3, 3, 3, 64>}, {pipeline_mode = #tpu.pipeline_mode<synchronous>, transform_indices = @transform_2, window_bounds = array<i64: 1, 64>}, {pipeline_mode = #tpu.pipeline_mode<synchronous>, transform_indices = @transform_3, window_bounds = array<i64: 1, 64>}, {transform_indices = @transform_4, window_bounds = array<i64: 1, 16, 16, 64>}]} {
    %cst = arith.constant 0.000000e+00 : f32
    %0 = vector.broadcast %cst : f32 to vector<18x26x3xf32>
    %c0 = arith.constant 0 : index
    %c0_0 = arith.constant 0 : index
    %c0_1 = arith.constant 0 : index
    %1 = vector.load %arg6[%c0, %c0_0, %c0_1] : memref<18x26x3xf32, #tpu.memory_space<vmem>>, vector<18x26x3xf32>
    tpu.vector_store %arg6[%c0, %c0_0, %c0_1], %0 {strides = array<i32>} : memref<18x26x3xf32, #tpu.memory_space<vmem>>, vector<18x26x3xf32>,
    %c0_2 = arith.constant 0 : index
    %c0_3 = arith.constant 0 : index
    %c0_4 = arith.constant 0 : index
    %c0_5 = arith.constant 0 : index
    %2 = vector.load %arg1[%c0_2, %c0_3, %c0_4, %c0_5] : memref<1x16x16x3xbf16, #tpu.memory_space<vmem>>, vector<1x16x16x3xbf16>
    %3 = vector.shape_cast %2 : vector<1x16x16x3xbf16> to vector<16x16x3xbf16>
    %4 = arith.extf %3 : vector<16x16x3xbf16> to vector<16x16x3xf32>
    %c1 = arith.constant 1 : index
    %c8 = arith.constant 8 : index
    %c0_6 = arith.constant 0 : index
    %5 = vector.load %arg6[%c1, %c8, %c0_6] : memref<18x26x3xf32, #tpu.memory_space<vmem>>, vector<16x16x3xf32>
    tpu.vector_store %arg6[%c1, %c8, %c0_6], %4 {strides = array<i32>} : memref<18x26x3xf32, #tpu.memory_space<vmem>>, vector<16x16x3xf32>,
    %cst_7 = arith.constant 0.000000e+00 : f32
    %6 = vector.broadcast %cst_7 : f32 to vector<256x64xf32>
    %c0_8 = arith.constant 0 : index
    %c7 = arith.constant 7 : index
    %c0_9 = arith.constant 0 : index
    %7 = vector.load %arg6[%c0_8, %c7, %c0_9] : memref<18x26x3xf32, #tpu.memory_space<vmem>>, vector<16x16x3xf32>
    %8 = vector.shape_cast %7 : vector<16x16x3xf32> to vector<256x3xf32>
    %9 = arith.truncf %8 : vector<256x3xf32> to vector<256x3xbf16>
    %c0_10 = arith.constant 0 : index
    %c0_11 = arith.constant 0 : index
    %c0_12 = arith.constant 0 : index
    %c0_13 = arith.constant 0 : index
    %10 = vector.load %arg2[%c0_10, %c0_11, %c0_12, %c0_13] : memref<3x3x3x64xbf16, #tpu.memory_space<vmem>>, vector<1x1x3x64xbf16>
    %11 = vector.shape_cast %10 : vector<1x1x3x64xbf16> to vector<3x64xbf16>
    %cst_14 = arith.constant dense<0.000000e+00> : vector<256x64xf32>
    %12 = tpu.matmul %9, %11, %cst_14 {dimension_numbers = #tpu.dot_dimension_numbers<[1], [0], [0], [1], [0, 0, 1, 1], [], []>} : vector<256x3xbf16>, vector<3x64xbf16>, vector<256x64xf32> -> vector<256x64xf32>
    %13 = arith.addf %6, %12 : vector<256x64xf32>
    %c0_15 = arith.constant 0 : index
    %c8_16 = arith.constant 8 : index
    %c0_17 = arith.constant 0 : index
    %14 = vector.load %arg6[%c0_15, %c8_16, %c0_17] : memref<18x26x3xf32, #tpu.memory_space<vmem>>, vector<16x16x3xf32>
    %15 = vector.shape_cast %14 : vector<16x16x3xf32> to vector<256x3xf32>
    %16 = arith.truncf %15 : vector<256x3xf32> to vector<256x3xbf16>
    %c0_18 = arith.constant 0 : index
    %c1_19 = arith.constant 1 : index
    %c0_20 = arith.constant 0 : index
    %c0_21 = arith.constant 0 : index
    %17 = vector.load %arg2[%c0_18, %c1_19, %c0_20, %c0_21] : memref<3x3x3x64xbf16, #tpu.memory_space<vmem>>, vector<1x1x3x64xbf16>
    %18 = vector.shape_cast %17 : vector<1x1x3x64xbf16> to vector<3x64xbf16>
    %cst_22 = arith.constant dense<0.000000e+00> : vector<256x64xf32>
    %19 = tpu.matmul %16, %18, %cst_22 {dimension_numbers = #tpu.dot_dimension_numbers<[1], [0], [0], [1], [0, 0, 1, 1], [], []>} : vector<256x3xbf16>, vector<3x64xbf16>, vector<256x64xf32> -> vector<256x64xf32>
    %20 = arith.addf %13, %19 : vector<256x64xf32>
    %c0_23 = arith.constant 0 : index
    %c9 = arith.constant 9 : index
    %c0_24 = arith.constant 0 : index
    %21 = vector.load %arg6[%c0_23, %c9, %c0_24] : memref<18x26x3xf32, #tpu.memory_space<vmem>>, vector<16x16x3xf32>
    %22 = vector.shape_cast %21 : vector<16x16x3xf32> to vector<256x3xf32>
    %23 = arith.truncf %22 : vector<256x3xf32> to vector<256x3xbf16>
    %c0_25 = arith.constant 0 : index
    %c2 = arith.constant 2 : index
    %c0_26 = arith.constant 0 : index
    %c0_27 = arith.constant 0 : index
    %24 = vector.load %arg2[%c0_25, %c2, %c0_26, %c0_27] : memref<3x3x3x64xbf16, #tpu.memory_space<vmem>>, vector<1x1x3x64xbf16>
    %25 = vector.shape_cast %24 : vector<1x1x3x64xbf16> to vector<3x64xbf16>
    %cst_28 = arith.constant dense<0.000000e+00> : vector<256x64xf32>
    %26 = tpu.matmul %23, %25, %cst_28 {dimension_numbers = #tpu.dot_dimension_numbers<[1], [0], [0], [1], [0, 0, 1, 1], [], []>} : vector<256x3xbf16>, vector<3x64xbf16>, vector<256x64xf32> -> vector<256x64xf32>
    %27 = arith.addf %20, %26 : vector<256x64xf32>
    %c1_29 = arith.constant 1 : index
    %c7_30 = arith.constant 7 : index
    %c0_31 = arith.constant 0 : index
    %28 = vector.load %arg6[%c1_29, %c7_30, %c0_31] : memref<18x26x3xf32, #tpu.memory_space<vmem>>, vector<16x16x3xf32>
    %29 = vector.shape_cast %28 : vector<16x16x3xf32> to vector<256x3xf32>
    %30 = arith.truncf %29 : vector<256x3xf32> to vector<256x3xbf16>
    %c1_32 = arith.constant 1 : index
    %c0_33 = arith.constant 0 : index
    %c0_34 = arith.constant 0 : index
    %c0_35 = arith.constant 0 : index
    %31 = vector.load %arg2[%c1_32, %c0_33, %c0_34, %c0_35] : memref<3x3x3x64xbf16, #tpu.memory_space<vmem>>, vector<1x1x3x64xbf16>
    %32 = vector.shape_cast %31 : vector<1x1x3x64xbf16> to vector<3x64xbf16>
    %cst_36 = arith.constant dense<0.000000e+00> : vector<256x64xf32>
    %33 = tpu.matmul %30, %32, %cst_36 {dimension_numbers = #tpu.dot_dimension_numbers<[1], [0], [0], [1], [0, 0, 1, 1], [], []>} : vector<256x3xbf16>, vector<3x64xbf16>, vector<256x64xf32> -> vector<256x64xf32>
    %34 = arith.addf %27, %33 : vector<256x64xf32>
    %c1_37 = arith.constant 1 : index
    %c8_38 = arith.constant 8 : index
    %c0_39 = arith.constant 0 : index
    %35 = vector.load %arg6[%c1_37, %c8_38, %c0_39] : memref<18x26x3xf32, #tpu.memory_space<vmem>>, vector<16x16x3xf32>
    %36 = vector.shape_cast %35 : vector<16x16x3xf32> to vector<256x3xf32>
    %37 = arith.truncf %36 : vector<256x3xf32> to vector<256x3xbf16>
    %c1_40 = arith.constant 1 : index
    %c1_41 = arith.constant 1 : index
    %c0_42 = arith.constant 0 : index
    %c0_43 = arith.constant 0 : index
    %38 = vector.load %arg2[%c1_40, %c1_41, %c0_42, %c0_43] : memref<3x3x3x64xbf16, #tpu.memory_space<vmem>>, vector<1x1x3x64xbf16>
    %39 = vector.shape_cast %38 : vector<1x1x3x64xbf16> to vector<3x64xbf16>
    %cst_44 = arith.constant dense<0.000000e+00> : vector<256x64xf32>
    %40 = tpu.matmul %37, %39, %cst_44 {dimension_numbers = #tpu.dot_dimension_numbers<[1], [0], [0], [1], [0, 0, 1, 1], [], []>} : vector<256x3xbf16>, vector<3x64xbf16>, vector<256x64xf32> -> vector<256x64xf32>
    %41 = arith.addf %34, %40 : vector<256x64xf32>
    %c1_45 = arith.constant 1 : index
    %c9_46 = arith.constant 9 : index
    %c0_47 = arith.constant 0 : index
    %42 = vector.load %arg6[%c1_45, %c9_46, %c0_47] : memref<18x26x3xf32, #tpu.memory_space<vmem>>, vector<16x16x3xf32>
    %43 = vector.shape_cast %42 : vector<16x16x3xf32> to vector<256x3xf32>
    %44 = arith.truncf %43 : vector<256x3xf32> to vector<256x3xbf16>
    %c1_48 = arith.constant 1 : index
    %c2_49 = arith.constant 2 : index
    %c0_50 = arith.constant 0 : index
    %c0_51 = arith.constant 0 : index
    %45 = vector.load %arg2[%c1_48, %c2_49, %c0_50, %c0_51] : memref<3x3x3x64xbf16, #tpu.memory_space<vmem>>, vector<1x1x3x64xbf16>
    %46 = vector.shape_cast %45 : vector<1x1x3x64xbf16> to vector<3x64xbf16>
    %cst_52 = arith.constant dense<0.000000e+00> : vector<256x64xf32>
    %47 = tpu.matmul %44, %46, %cst_52 {dimension_numbers = #tpu.dot_dimension_numbers<[1], [0], [0], [1], [0, 0, 1, 1], [], []>} : vector<256x3xbf16>, vector<3x64xbf16>, vector<256x64xf32> -> vector<256x64xf32>
    %48 = arith.addf %41, %47 : vector<256x64xf32>
    %c2_53 = arith.constant 2 : index
    %c7_54 = arith.constant 7 : index
    %c0_55 = arith.constant 0 : index
    %49 = vector.load %arg6[%c2_53, %c7_54, %c0_55] : memref<18x26x3xf32, #tpu.memory_space<vmem>>, vector<16x16x3xf32>
    %50 = vector.shape_cast %49 : vector<16x16x3xf32> to vector<256x3xf32>
    %51 = arith.truncf %50 : vector<256x3xf32> to vector<256x3xbf16>
    %c2_56 = arith.constant 2 : index
    %c0_57 = arith.constant 0 : index
    %c0_58 = arith.constant 0 : index
    %c0_59 = arith.constant 0 : index
    %52 = vector.load %arg2[%c2_56, %c0_57, %c0_58, %c0_59] : memref<3x3x3x64xbf16, #tpu.memory_space<vmem>>, vector<1x1x3x64xbf16>
    %53 = vector.shape_cast %52 : vector<1x1x3x64xbf16> to vector<3x64xbf16>
    %cst_60 = arith.constant dense<0.000000e+00> : vector<256x64xf32>
    %54 = tpu.matmul %51, %53, %cst_60 {dimension_numbers = #tpu.dot_dimension_numbers<[1], [0], [0], [1], [0, 0, 1, 1], [], []>} : vector<256x3xbf16>, vector<3x64xbf16>, vector<256x64xf32> -> vector<256x64xf32>
    %55 = arith.addf %48, %54 : vector<256x64xf32>
    %c2_61 = arith.constant 2 : index
    %c8_62 = arith.constant 8 : index
    %c0_63 = arith.constant 0 : index
    %56 = vector.load %arg6[%c2_61, %c8_62, %c0_63] : memref<18x26x3xf32, #tpu.memory_space<vmem>>, vector<16x16x3xf32>
    %57 = vector.shape_cast %56 : vector<16x16x3xf32> to vector<256x3xf32>
    %58 = arith.truncf %57 : vector<256x3xf32> to vector<256x3xbf16>
    %c2_64 = arith.constant 2 : index
    %c1_65 = arith.constant 1 : index
    %c0_66 = arith.constant 0 : index
    %c0_67 = arith.constant 0 : index
    %59 = vector.load %arg2[%c2_64, %c1_65, %c0_66, %c0_67] : memref<3x3x3x64xbf16, #tpu.memory_space<vmem>>, vector<1x1x3x64xbf16>
    %60 = vector.shape_cast %59 : vector<1x1x3x64xbf16> to vector<3x64xbf16>
    %cst_68 = arith.constant dense<0.000000e+00> : vector<256x64xf32>
    %61 = tpu.matmul %58, %60, %cst_68 {dimension_numbers = #tpu.dot_dimension_numbers<[1], [0], [0], [1], [0, 0, 1, 1], [], []>} : vector<256x3xbf16>, vector<3x64xbf16>, vector<256x64xf32> -> vector<256x64xf32>
    %62 = arith.addf %55, %61 : vector<256x64xf32>
    %c2_69 = arith.constant 2 : index
    %c9_70 = arith.constant 9 : index
    %c0_71 = arith.constant 0 : index
    %63 = vector.load %arg6[%c2_69, %c9_70, %c0_71] : memref<18x26x3xf32, #tpu.memory_space<vmem>>, vector<16x16x3xf32>
    %64 = vector.shape_cast %63 : vector<16x16x3xf32> to vector<256x3xf32>
    %65 = arith.truncf %64 : vector<256x3xf32> to vector<256x3xbf16>
    %c2_72 = arith.constant 2 : index
    %c2_73 = arith.constant 2 : index
    %c0_74 = arith.constant 0 : index
    %c0_75 = arith.constant 0 : index
    %66 = vector.load %arg2[%c2_72, %c2_73, %c0_74, %c0_75] : memref<3x3x3x64xbf16, #tpu.memory_space<vmem>>, vector<1x1x3x64xbf16>
    %67 = vector.shape_cast %66 : vector<1x1x3x64xbf16> to vector<3x64xbf16>
    %cst_76 = arith.constant dense<0.000000e+00> : vector<256x64xf32>
    %68 = tpu.matmul %65, %67, %cst_76 {dimension_numbers = #tpu.dot_dimension_numbers<[1], [0], [0], [1], [0, 0, 1, 1], [], []>} : vector<256x3xbf16>, vector<3x64xbf16>, vector<256x64xf32> -> vector<256x64xf32>
    %69 = arith.addf %62, %68 : vector<256x64xf32>
    %c0_77 = arith.constant 0 : index
    %c0_78 = arith.constant 0 : index
    %70 = vector.load %arg3[%c0_77, %c0_78] : memref<1x64xf32, #tpu.memory_space<vmem>>, vector<1x64xf32>
    %71 = vector.shape_cast %70 : vector<1x64xf32> to vector<64xf32>
    %72 = vector.shape_cast %71 : vector<64xf32> to vector<1x64xf32>
    %73 = vector.broadcast %72 : vector<1x64xf32> to vector<256x64xf32>
    %74 = arith.mulf %69, %73 : vector<256x64xf32>
    %c0_79 = arith.constant 0 : index
    %c0_80 = arith.constant 0 : index
    %75 = vector.load %arg4[%c0_79, %c0_80] : memref<1x64xf32, #tpu.memory_space<vmem>>, vector<1x64xf32>
    %76 = vector.shape_cast %75 : vector<1x64xf32> to vector<64xf32>
    %77 = vector.shape_cast %76 : vector<64xf32> to vector<1x64xf32>
    %78 = vector.broadcast %77 : vector<1x64xf32> to vector<256x64xf32>
    %79 = arith.addf %74, %78 : vector<256x64xf32>
    %cst_81 = arith.constant 0.000000e+00 : f32
    %80 = vector.broadcast %cst_81 : f32 to vector<256x64xf32>
    %81 = arith.maximumf %79, %80 : vector<256x64xf32>
    %82 = vector.shape_cast %81 : vector<256x64xf32> to vector<16x16x64xf32>
    %83 = arith.truncf %82 : vector<16x16x64xf32> to vector<16x16x64xbf16>
    %c0_82 = arith.constant 0 : index
    %c0_83 = arith.constant 0 : index
    %c0_84 = arith.constant 0 : index
    %c0_85 = arith.constant 0 : index
    %84 = vector.load %arg5[%c0_82, %c0_83, %c0_84, %c0_85] : memref<1x16x16x64xbf16, #tpu.memory_space<vmem>>, vector<1x16x16x64xbf16>
    %85 = vector.shape_cast %84 : vector<1x16x16x64xbf16> to vector<16x16x64xbf16>
    %86 = vector.shape_cast %83 : vector<16x16x64xbf16> to vector<1x16x16x64xbf16>
    tpu.vector_store %arg5[%c0_82, %c0_83, %c0_84, %c0_85], %86 {strides = array<i32>} : memref<1x16x16x64xbf16, #tpu.memory_space<vmem>>, vector<1x16x16x64xbf16>,
    return
  }
  func.func @transform_0(%arg0: i32) -> (i32, i32, i32, i32) {
    %c0_i32 = arith.constant 0 : i32
    %c0_i32_0 = arith.constant 0 : i32
    %c0_i32_1 = arith.constant 0 : i32
    %c0_i32_2 = arith.constant 0 : i32
    return %arg0, %c0_i32, %c0_i32_0, %c0_i32_1 : i32, i32, i32, i32
  }
  func.func @transform_1(%arg0: i32) -> (i32, i32, i32, i32) {
    %c0_i32 = arith.constant 0 : i32
    %c0_i32_0 = arith.constant 0 : i32
    %c0_i32_1 = arith.constant 0 : i32
    %c0_i32_2 = arith.constant 0 : i32
    %c0_i32_3 = arith.constant 0 : i32
    return %c0_i32, %c0_i32_0, %c0_i32_1, %c0_i32_2 : i32, i32, i32, i32
  }
  func.func @transform_2(%arg0: i32) -> (i32, i32) {
    %c0_i32 = arith.constant 0 : i32
    %c0_i32_0 = arith.constant 0 : i32
    %c0_i32_1 = arith.constant 0 : i32
    return %c0_i32, %c0_i32_0 : i32, i32
  }
  func.func @transform_3(%arg0: i32) -> (i32, i32) {
    %c0_i32 = arith.constant 0 : i32
    %c0_i32_0 = arith.constant 0 : i32
    %c0_i32_1 = arith.constant 0 : i32
    return %c0_i32, %c0_i32_0 : i32, i32
  }
  func.func @transform_4(%arg0: i32) -> (i32, i32, i32, i32) {
    %c0_i32 = arith.constant 0 : i32
    %c0_i32_0 = arith.constant 0 : i32
    %c0_i32_1 = arith.constant 0 : i32
    %c0_i32_2 = arith.constant 0 : i32
    return %arg0, %c0_i32, %c0_i32_0, %c0_i32_1 : i32, i32, i32, i32
  }
}

</mosaic_0001>

<llo_original>
// kernel: tpu_custom_call.1
$region0: #{tpu_custom_call.1}
  #allocation0 [shape = 'u32[]', space=smem, size = 0x4, offset = 0x4, fixed_abs, tag = 'smem constant byte address 0x4 - core index']
  #allocation1 [shape = 'u32[144,128]{1,0:T(1,128)}', space=vmem, size = 0x12000, scoped, tag = 'internal scratch']
  #allocation2 [shape = 'f32[18,26,3]{2,1,0:T(8,128)}', space=vmem, size = 0x48000, scoped, tag = 'scratch operand']
  %s0 = inlined_call_operand.vmem [shape: bf16[2,16,16,3], index: 0, kind: input, shape index: {}]
  %s1 = inlined_call_operand.vmem [shape: bf16[3,3,3,64], index: 1, kind: input, shape index: {}]
  %s2 = inlined_call_operand.vmem [shape: f32[1,64], index: 2, kind: input, shape index: {}]
  %s3 = inlined_call_operand.vmem [shape: f32[1,64], index: 3, kind: input, shape index: {}]
  %s4 = inlined_call_operand.hbm [shape: bf16[2,16,16,64], index: 4, kind: output, shape index: {}]
  %s5 = sld [smem:[#allocation0]]
  $region49: #{tpu_custom_call.1} parent=0
    _
  %s7 = ssub.s32 1, %s5
  %s8 = scalar_select 0, %s7, %s5
  $region1: #{tpu_custom_call.1} parent=0
    #allocation3 [shape = 'u8[131072]{0}', space=vmem, size = 0x20000, scoped, tag = 'output window, operand 0']
    #allocation4 [shape = 's32[2]{0}', space=sflag, size = 0x8, scoped, tag = 'scoped memory for tpu_custom_call.1']
    %9 = vsyncpa [#allocation4], 0
    %s10 = scalar_lea.sflag [#allocation4], 1
    %11 = vsyncpa %s10, 0
    loop: start=0, step=1, limit=4
    $region2: #{tpu_custom_call.1} parent=1 // loop_pre_header
      _
    $region3: #{tpu_custom_call.1} parent=1 // loop_header
      %s13 = sphi 0, %s17
      %p14 = scmp.ge.s32.totalorder %s13, 4
      %s23 = sphi 0, %s25
      %s26 = sphi 0, %s23
      %s27 = sphi 0, %s26
      %s43 = sphi 0, %s27
      %s47 = sphi 0, %s47
      %s49 = sphi 0, %s47
      %s50 = sphi 0, %s49
      %s64 = sphi 0, %s50
      %s68 = sphi 0, %s68
      %s70 = sphi 0, %s68
      %s71 = sphi 0, %s70
      %s85 = sphi 0, %s71
      %s89 = sphi 0, %s89
      %s91 = sphi 0, %s89
      %s92 = sphi 0, %s91
      %s106 = sphi 0, %s92
      %s112 = sphi 0, %s114
      %s115 = sphi 0, %s112
      %s116 = sphi 0, %s115
      %s132 = sphi 0, %s116
    $region4: #{tpu_custom_call.1} parent=1 // loop_header_branch
      %16 = sbr.rel (%p14) target = $region8
    $region5: #{tpu_custom_call.1} parent=1 // loop_body
      %s18 = ssub.s32 %s13, 1
      %s19 = ssub.s32 %s13, 2
      %s20 = sadd.s32 %s13, 1
      %s21 = ssub.s32 %s13, %s20
      %p22 = scmp.eq.s32.totalorder %s21, 0
      %s24 = sadd.s32 %s23, 1
      %s25 = scalar_select %p22, %s23, %s24
      %p28 = pneg %p22
      %p29 = scmp.eq.s32.totalorder %s13, 1
      %p30 = por %p28, %p29
      %p31 = scmp.ne.s32.totalorder %s23, %s26
      %p32 = scmp.eq.s32.totalorder %s13, 0
      %p33 = por %p31, %p32
      %p34 = scmp.ne.s32.totalorder %s23, %s26
      %p35 = scmp.eq.s32.totalorder %s18, 1
      %p36 = por %p34, %p35
      %p37 = scmp.ne.s32.totalorder %s26, %s27
      %p38 = scmp.eq.s32.totalorder %s18, 0
      %p39 = por %p37, %p38
      %p40 = scmp.ne.s32.totalorder %s26, %s27
      %p41 = scmp.eq.s32.totalorder %s19, 1
      %p42 = por %p40, %p41
      %p44 = scmp.ne.s32.totalorder %s27, %s43
      %p45 = scmp.eq.s32.totalorder %s19, 0
      %p46 = por %p44, %p45
      %s48 = sadd.s32 %s47, 1
      %p51 = scmp.eq.s32.totalorder %s13, 1
      %p52 = scmp.ne.s32.totalorder %s47, %s49
      %p53 = scmp.eq.s32.totalorder %s13, 0
      %p54 = por %p52, %p53
      %p55 = scmp.ne.s32.totalorder %s47, %s49
      %p56 = scmp.eq.s32.totalorder %s18, 1
      %p57 = por %p55, %p56
      %p58 = scmp.ne.s32.totalorder %s49, %s50
      %p59 = scmp.eq.s32.totalorder %s18, 0
      %p60 = por %p58, %p59
      %p61 = scmp.ne.s32.totalorder %s49, %s50
      %p62 = scmp.eq.s32.totalorder %s19, 1
      %p63 = por %p61, %p62
      %p65 = scmp.ne.s32.totalorder %s50, %s64
      %p66 = scmp.eq.s32.totalorder %s19, 0
      %p67 = por %p65, %p66
      %s69 = sadd.s32 %s68, 1
      %p72 = scmp.eq.s32.totalorder %s13, 1
      %p73 = scmp.ne.s32.totalorder %s68, %s70
      %p74 = scmp.eq.s32.totalorder %s13, 0
      %p75 = por %p73, %p74
      %p76 = scmp.ne.s32.totalorder %s68, %s70
      %p77 = scmp.eq.s32.totalorder %s18, 1
      %p78 = por %p76, %p77
      %p79 = scmp.ne.s32.totalorder %s70, %s71
      %p80 = scmp.eq.s32.totalorder %s18, 0
      %p81 = por %p79, %p80
      %p82 = scmp.ne.s32.totalorder %s70, %s71
      %p83 = scmp.eq.s32.totalorder %s19, 1
      %p84 = por %p82, %p83
      %p86 = scmp.ne.s32.totalorder %s71, %s85
      %p87 = scmp.eq.s32.totalorder %s19, 0
      %p88 = por %p86, %p87
      %s90 = sadd.s32 %s89, 1
      %p93 = scmp.eq.s32.totalorder %s13, 1
      %p94 = scmp.ne.s32.totalorder %s89, %s91
      %p95 = scmp.eq.s32.totalorder %s13, 0
      %p96 = por %p94, %p95
      %p97 = scmp.ne.s32.totalorder %s89, %s91
      %p98 = scmp.eq.s32.totalorder %s18, 1
      %p99 = por %p97, %p98
      %p100 = scmp.ne.s32.totalorder %s91, %s92
      %p101 = scmp.eq.s32.totalorder %s18, 0
      %p102 = por %p100, %p101
      %p103 = scmp.ne.s32.totalorder %s91, %s92
      %p104 = scmp.eq.s32.totalorder %s19, 1
      %p105 = por %p103, %p104
      %p107 = scmp.ne.s32.totalorder %s92, %s106
      %p108 = scmp.eq.s32.totalorder %s19, 0
      %p109 = por %p107, %p108
      %s110 = ssub.s32 %s13, %s20
      %p111 = scmp.eq.s32.totalorder %s110, 0
      %s113 = sadd.s32 %s112, 1
      %s114 = scalar_select %p111, %s112, %s113
      %p117 = pneg %p111
      %p118 = scmp.eq.s32.totalorder %s13, 1
      %p119 = por %p117, %p118
      %p120 = scmp.ne.s32.totalorder %s112, %s115
      %p121 = scmp.eq.s32.totalorder %s13, 0
      %p122 = por %p120, %p121
      %p123 = scmp.ne.s32.totalorder %s112, %s115
      %p124 = scmp.eq.s32.totalorder %s18, 1
      %p125 = por %p123, %p124
      %p126 = scmp.ne.s32.totalorder %s115, %s116
      %p127 = scmp.eq.s32.totalorder %s18, 0
      %p128 = por %p126, %p127
      %p129 = scmp.ne.s32.totalorder %s115, %s116
      %p130 = scmp.eq.s32.totalorder %s19, 1
      %p131 = por %p129, %p130
      %p133 = scmp.ne.s32.totalorder %s116, %s132
      %p134 = scmp.eq.s32.totalorder %s19, 0
      %p135 = por %p133, %p134
      %p136 = scmp.le.s32.totalorder 1, %s13
      %p137 = scmp.lt.s32.totalorder %s13, 3
      %p138 = pnand %p136, %p137
      %p139 = pneg %p138
      // Predicated region
      $region9: #{tpu_custom_call.1} parent=5 // pred_check
        _
      $region10: #{tpu_custom_call.1} parent=5 // pred_check_branch
        %141 = sbr.rel (%p138) target = $region12
      $region11: #{tpu_custom_call.1} parent=5 // pred_region
        %s142 = ssub.s32 %s13, 1
        // Predicated region
        $region13: #{tpu_custom_call.1} parent=11 // pred_check
          %p143 = pneg %p60
        $region14: #{tpu_custom_call.1} parent=11 // pred_check_branch
          %145 = sbr.rel (%p143) target = $region16
        $region15: #{tpu_custom_call.1} parent=11 // pred_region
          _
        $region16: #{tpu_custom_call.1} parent=11 // pred_fallthru
          _
        // Predicated region
        $region17: #{tpu_custom_call.1} parent=11 // pred_check
          %p146 = pneg %p81
        $region18: #{tpu_custom_call.1} parent=11 // pred_check_branch
          %148 = sbr.rel (%p146) target = $region20
        $region19: #{tpu_custom_call.1} parent=11 // pred_region
          _
        $region20: #{tpu_custom_call.1} parent=11 // pred_fallthru
          _
        // Predicated region
        $region21: #{tpu_custom_call.1} parent=11 // pred_check
          %p149 = pneg %p102
        $region22: #{tpu_custom_call.1} parent=11 // pred_check_branch
          %151 = sbr.rel (%p149) target = $region24
        $region23: #{tpu_custom_call.1} parent=11 // pred_region
          _
        $region24: #{tpu_custom_call.1} parent=11 // pred_fallthru
          _
      $region12: #{tpu_custom_call.1} parent=5 // pred_fallthru
        _
      %p152 = scmp.lt.s32.totalorder %s13, 2
      // Predicated region
      $region25: #{tpu_custom_call.1} parent=5 // pred_check
        %p153 = pneg %p152
      $region26: #{tpu_custom_call.1} parent=5 // pred_check_branch
        %155 = sbr.rel (%p153) target = $region28
      $region27: #{tpu_custom_call.1} parent=5 // pred_region
        // Predicated region
        $region29: #{tpu_custom_call.1} parent=27 // pred_check
          %p156 = pneg %p33
        $region30: #{tpu_custom_call.1} parent=27 // pred_check_branch
          %158 = sbr.rel (%p156) target = $region32
        $region31: #{tpu_custom_call.1} parent=27 // pred_region
          %p159 = scmp.lt.s32.totalorder %s13, 1
          %s160 = scalar_select %p159, %s13, 1
          %s161 = smul.addr %s160, 32
          %s162 = smul.addr %s161, 4
          %s163 = scalar_lea.vmem %s0, %s162
        $region32: #{tpu_custom_call.1} parent=27 // pred_fallthru
          _
      $region28: #{tpu_custom_call.1} parent=5 // pred_fallthru
        _
      %p164 = scmp.le.s32.totalorder 1, %s13
      %p165 = scmp.lt.s32.totalorder %s13, 3
      %p166 = pnand %p164, %p165
      %p167 = pneg %p166
      // Predicated region
      $region33: #{tpu_custom_call.1} parent=5 // pred_check
        _
      $region34: #{tpu_custom_call.1} parent=5 // pred_check_branch
        %169 = sbr.rel (%p166) target = $region36
      $region35: #{tpu_custom_call.1} parent=5 // pred_region
        %s170 = ssub.s32 %s13, 1
        %p171 = scmp.lt.s32.totalorder %s18, 1
        %s172 = scalar_select %p171, %s18, 1
        %s173 = smul.addr %s172, 32
        %s174 = smul.addr %s173, 4
        %s175 = scalar_lea.vmem %s0, %s174
        %p176 = pneg %p39
        %p177 = pneg %p36
        %p178 = pneg %p60
        %p179 = pneg %p57
        %p180 = pneg %p81
        %p181 = pneg %p78
        %p182 = pneg %p102
        %p183 = pneg %p99
        %p184 = pneg %p128
        %p185 = pneg %p125
        %s186 = sand.u32 %s115, 1
        %s187 = scalar_lea.sflag [#allocation4], %s186
        %s188 = sand.u32 %s115, 1
        %s189 = smul.addr %s188, 128
        %s190 = scalar_lea.vmem [#allocation3], %s189
        %p191 = scmp.lt.s32.totalorder %s18, 1
        %s192 = scalar_select %p191, %s18, 1
        %s193 = smul.addr %s192, 32
        %s194 = smul.addr %s193, 4
        %s195 = scalar_lea.vmem %s0, %s194
        %vm197 = vcmask 23552
        %198 = vst.msk [vmem:[#allocation2] sm:$0xff] %vm197, 0.0
        %199 = vst.msk [vmem:[#allocation2 + $0x8] sm:$0xff] %vm197, 0.0
        %200 = vst.msk [vmem:[#allocation2 + $0x10] sm:$0xff] %vm197, 0.0
        %vm201 = vcmask 17408
        %202 = vst.msk [vmem:[#allocation2 + $0x18] sm:$0x3] %vm201, 0.0
        %203 = vst.msk [vmem:[#allocation2 + $0x20] sm:$0xff] %vm197, 0.0
        %204 = vst.msk [vmem:[#allocation2 + $0x28] sm:$0xff] %vm197, 0.0
        %205 = vst.msk [vmem:[#allocation2 + $0x30] sm:$0xff] %vm197, 0.0
        %206 = vst.msk [vmem:[#allocation2 + $0x38] sm:$0x3] %vm201, 0.0
        %207 = vst.msk [vmem:[#allocation2 + $0x40] sm:$0xff] %vm197, 0.0
        %208 = vst.msk [vmem:[#allocation2 + $0x48] sm:$0xff] %vm197, 0.0
        %209 = vst.msk [vmem:[#allocation2 + $0x50] sm:$0xff] %vm197, 0.0
        %210 = vst.msk [vmem:[#allocation2 + $0x58] sm:$0x3] %vm201, 0.0
        %211 = vst.msk [vmem:[#allocation2 + $0x60] sm:$0xff] %vm197, 0.0
        %212 = vst.msk [vmem:[#allocation2 + $0x68] sm:$0xff] %vm197, 0.0
        %213 = vst.msk [vmem:[#allocation2 + $0x70] sm:$0xff] %vm197, 0.0
        %214 = vst.msk [vmem:[#allocation2 + $0x78] sm:$0x3] %vm201, 0.0
        %215 = vst.msk [vmem:[#allocation2 + $0x80] sm:$0xff] %vm197, 0.0
        %216 = vst.msk [vmem:[#allocation2 + $0x88] sm:$0xff] %vm197, 0.0
        %217 = vst.msk [vmem:[#allocation2 + $0x90] sm:$0xff] %vm197, 0.0
        %218 = vst.msk [vmem:[#allocation2 + $0x98] sm:$0x3] %vm201, 0.0
        %219 = vst.msk [vmem:[#allocation2 + $0xa0] sm:$0xff] %vm197, 0.0
        %220 = vst.msk [vmem:[#allocation2 + $0xa8] sm:$0xff] %vm197, 0.0
        %221 = vst.msk [vmem:[#allocation2 + $0xb0] sm:$0xff] %vm197, 0.0
        %222 = vst.msk [vmem:[#allocation2 + $0xb8] sm:$0x3] %vm201, 0.0
        %223 = vst.msk [vmem:[#allocation2 + $0xc0] sm:$0xff] %vm197, 0.0
        %224 = vst.msk [vmem:[#allocation2 + $0xc8] sm:$0xff] %vm197, 0.0
        %225 = vst.msk [vmem:[#allocation2 + $0xd0] sm:$0xff] %vm197, 0.0
        %226 = vst.msk [vmem:[#allocation2 + $0xd8] sm:$0x3] %vm201, 0.0
        %227 = vst.msk [vmem:[#allocation2 + $0xe0] sm:$0xff] %vm197, 0.0
        %228 = vst.msk [vmem:[#allocation2 + $0xe8] sm:$0xff] %vm197, 0.0
        %229 = vst.msk [vmem:[#allocation2 + $0xf0] sm:$0xff] %vm197, 0.0
        %230 = vst.msk [vmem:[#allocation2 + $0xf8] sm:$0x3] %vm201, 0.0
        %231 = vst.msk [vmem:[#allocation2 + $0x100] sm:$0xff] %vm197, 0.0
        %232 = vst.msk [vmem:[#allocation2 + $0x108] sm:$0xff] %vm197, 0.0
        %233 = vst.msk [vmem:[#allocation2 + $0x110] sm:$0xff] %vm197, 0.0
        %234 = vst.msk [vmem:[#allocation2 + $0x118] sm:$0x3] %vm201, 0.0
        %235 = vst.msk [vmem:[#allocation2 + $0x120] sm:$0xff] %vm197, 0.0
        %236 = vst.msk [vmem:[#allocation2 + $0x128] sm:$0xff] %vm197, 0.0
        %237 = vst.msk [vmem:[#allocation2 + $0x130] sm:$0xff] %vm197, 0.0
        %238 = vst.msk [vmem:[#allocation2 + $0x138] sm:$0x3] %vm201, 0.0
        %239 = vst.msk [vmem:[#allocation2 + $0x140] sm:$0xff] %vm197, 0.0
        %240 = vst.msk [vmem:[#allocation2 + $0x148] sm:$0xff] %vm197, 0.0
        %241 = vst.msk [vmem:[#allocation2 + $0x150] sm:$0xff] %vm197, 0.0
        %242 = vst.msk [vmem:[#allocation2 + $0x158] sm:$0x3] %vm201, 0.0
        %243 = vst.msk [vmem:[#allocation2 + $0x160] sm:$0xff] %vm197, 0.0
        %244 = vst.msk [vmem:[#allocation2 + $0x168] sm:$0xff] %vm197, 0.0
        %245 = vst.msk [vmem:[#allocation2 + $0x170] sm:$0xff] %vm197, 0.0
        %246 = vst.msk [vmem:[#allocation2 + $0x178] sm:$0x3] %vm201, 0.0
        %247 = vst.msk [vmem:[#allocation2 + $0x180] sm:$0xff] %vm197, 0.0
        %248 = vst.msk [vmem:[#allocation2 + $0x188] sm:$0xff] %vm197, 0.0
        %249 = vst.msk [vmem:[#allocation2 + $0x190] sm:$0xff] %vm197, 0.0
        %250 = vst.msk [vmem:[#allocation2 + $0x198] sm:$0x3] %vm201, 0.0
        %251 = vst.msk [vmem:[#allocation2 + $0x1a0] sm:$0xff] %vm197, 0.0
        %252 = vst.msk [vmem:[#allocation2 + $0x1a8] sm:$0xff] %vm197, 0.0
        %253 = vst.msk [vmem:[#allocation2 + $0x1b0] sm:$0xff] %vm197, 0.0
        %254 = vst.msk [vmem:[#allocation2 + $0x1b8] sm:$0x3] %vm201, 0.0
        %255 = vst.msk [vmem:[#allocation2 + $0x1c0] sm:$0xff] %vm197, 0.0
        %256 = vst.msk [vmem:[#allocation2 + $0x1c8] sm:$0xff] %vm197, 0.0
        %257 = vst.msk [vmem:[#allocation2 + $0x1d0] sm:$0xff] %vm197, 0.0
        %258 = vst.msk [vmem:[#allocation2 + $0x1d8] sm:$0x3] %vm201, 0.0
        %259 = vst.msk [vmem:[#allocation2 + $0x1e0] sm:$0xff] %vm197, 0.0
        %260 = vst.msk [vmem:[#allocation2 + $0x1e8] sm:$0xff] %vm197, 0.0
        %261 = vst.msk [vmem:[#allocation2 + $0x1f0] sm:$0xff] %vm197, 0.0
        %262 = vst.msk [vmem:[#allocation2 + $0x1f8] sm:$0x3] %vm201, 0.0
        %263 = vst.msk [vmem:[#allocation2 + $0x200] sm:$0xff] %vm197, 0.0
        %264 = vst.msk [vmem:[#allocation2 + $0x208] sm:$0xff] %vm197, 0.0
        %265 = vst.msk [vmem:[#allocation2 + $0x210] sm:$0xff] %vm197, 0.0
        %266 = vst.msk [vmem:[#allocation2 + $0x218] sm:$0x3] %vm201, 0.0
        %267 = vst.msk [vmem:[#allocation2 + $0x220] sm:$0xff] %vm197, 0.0
        %268 = vst.msk [vmem:[#allocation2 + $0x228] sm:$0xff] %vm197, 0.0
        %269 = vst.msk [vmem:[#allocation2 + $0x230] sm:$0xff] %vm197, 0.0
        %270 = vst.msk [vmem:[#allocation2 + $0x238] sm:$0x3] %vm201, 0.0
        %v271 = vld [vmem:[%s195] sm:$0xf]
        %v272 = vld [vmem:[%s195 + $0x4] sm:$0xf]
        %v273 = vld [vmem:[%s195 + $0x8] sm:$0xf]
        %v274 = vld [vmem:[%s195 + $0xc] sm:$0xf]
        %v275 = vld [vmem:[%s195 + $0x10] sm:$0xf]
        %v276 = vld [vmem:[%s195 + $0x14] sm:$0xf]
        %v277 = vld [vmem:[%s195 + $0x18] sm:$0xf]
        %v278 = vld [vmem:[%s195 + $0x1c] sm:$0xf]
        %v279 = vld [vmem:[%s195 + $0x20] sm:$0xf]
        %v280 = vld [vmem:[%s195 + $0x24] sm:$0xf]
        %v281 = vld [vmem:[%s195 + $0x28] sm:$0xf]
        %v282 = vld [vmem:[%s195 + $0x2c] sm:$0xf]
        %v283 = vld [vmem:[%s195 + $0x30] sm:$0xf]
        %v284 = vld [vmem:[%s195 + $0x34] sm:$0xf]
        %v285 = vld [vmem:[%s195 + $0x38] sm:$0xf]
        %v286 = vld [vmem:[%s195 + $0x3c] sm:$0xf]
        %v287 = vld [vmem:[%s195 + $0x40] sm:$0xf]
        %v288 = vld [vmem:[%s195 + $0x44] sm:$0xf]
        %v289 = vld [vmem:[%s195 + $0x48] sm:$0xf]
        %v290 = vld [vmem:[%s195 + $0x4c] sm:$0xf]
        %v291 = vld [vmem:[%s195 + $0x50] sm:$0xf]
        %v292 = vld [vmem:[%s195 + $0x54] sm:$0xf]
        %v293 = vld [vmem:[%s195 + $0x58] sm:$0xf]
        %v294 = vld [vmem:[%s195 + $0x5c] sm:$0xf]
        %v295 = vld [vmem:[%s195 + $0x60] sm:$0xf]
        %v296 = vld [vmem:[%s195 + $0x64] sm:$0xf]
        %v297 = vld [vmem:[%s195 + $0x68] sm:$0xf]
        %v298 = vld [vmem:[%s195 + $0x6c] sm:$0xf]
        %v299 = vld [vmem:[%s195 + $0x70] sm:$0xf]
        %v300 = vld [vmem:[%s195 + $0x74] sm:$0xf]
        %v301 = vld [vmem:[%s195 + $0x78] sm:$0xf]
        %v302 = vld [vmem:[%s195 + $0x7c] sm:$0xf]
        %v303 = vunpack.c.l.bf16 %v271
        %v304 = vunpack.c.l.bf16 %v272
        %v305 = vunpack.c.l.bf16 %v273
        %v306 = vunpack.c.l.bf16 %v274
        %v307 = vunpack.c.l.bf16 %v275
        %v308 = vunpack.c.l.bf16 %v276
        %v309 = vunpack.c.l.bf16 %v277
        %v310 = vunpack.c.l.bf16 %v278
        %v311 = vunpack.c.l.bf16 %v279
        %v312 = vunpack.c.l.bf16 %v280
        %v313 = vunpack.c.l.bf16 %v281
        %v314 = vunpack.c.l.bf16 %v282
        %v315 = vunpack.c.l.bf16 %v283
        %v316 = vunpack.c.l.bf16 %v284
        %v317 = vunpack.c.l.bf16 %v285
        %v318 = vunpack.c.l.bf16 %v286
        %v319 = vunpack.c.l.bf16 %v287
        %v320 = vunpack.c.l.bf16 %v288
        %v321 = vunpack.c.l.bf16 %v289
        %v322 = vunpack.c.l.bf16 %v290
        %v323 = vunpack.c.l.bf16 %v291
        %v324 = vunpack.c.l.bf16 %v292
        %v325 = vunpack.c.l.bf16 %v293
        %v326 = vunpack.c.l.bf16 %v294
        %v327 = vunpack.c.l.bf16 %v295
        %v328 = vunpack.c.l.bf16 %v296
        %v329 = vunpack.c.l.bf16 %v297
        %v330 = vunpack.c.l.bf16 %v298
        %v331 = vunpack.c.l.bf16 %v299
        %v332 = vunpack.c.l.bf16 %v300
        %v333 = vunpack.c.l.bf16 %v301
        %v334 = vunpack.c.l.bf16 %v302
        %s335 = scalar_lea.vmem [#allocation2], 32
        %336 = vst.msk [vmem:[%s335 + $0x8] sm:$0xff] %vm197, %v303
        %337 = vst.msk [vmem:[%s335 + $0x10] sm:$0xff] %vm197, %v304
        %338 = vst.msk [vmem:[%s335 + $0x28] sm:$0xff] %vm197, %v305
        %339 = vst.msk [vmem:[%s335 + $0x30] sm:$0xff] %vm197, %v306
        %340 = vst.msk [vmem:[%s335 + $0x48] sm:$0xff] %vm197, %v307
        %341 = vst.msk [vmem:[%s335 + $0x50] sm:$0xff] %vm197, %v308
        %342 = vst.msk [vmem:[%s335 + $0x68] sm:$0xff] %vm197, %v309
        %343 = vst.msk [vmem:[%s335 + $0x70] sm:$0xff] %vm197, %v310
        %344 = vst.msk [vmem:[%s335 + $0x88] sm:$0xff] %vm197, %v311
        %345 = vst.msk [vmem:[%s335 + $0x90] sm:$0xff] %vm197, %v312
        %346 = vst.msk [vmem:[%s335 + $0xa8] sm:$0xff] %vm197, %v313
        %347 = vst.msk [vmem:[%s335 + $0xb0] sm:$0xff] %vm197, %v314
        %348 = vst.msk [vmem:[%s335 + $0xc8] sm:$0xff] %vm197, %v315
        %349 = vst.msk [vmem:[%s335 + $0xd0] sm:$0xff] %vm197, %v316
        %350 = vst.msk [vmem:[%s335 + $0xe8] sm:$0xff] %vm197, %v317
        %351 = vst.msk [vmem:[%s335 + $0xf0] sm:$0xff] %vm197, %v318
        %352 = vst.msk [vmem:[%s335 + $0x108] sm:$0xff] %vm197, %v319
        %353 = vst.msk [vmem:[%s335 + $0x110] sm:$0xff] %vm197, %v320
        %354 = vst.msk [vmem:[%s335 + $0x128] sm:$0xff] %vm197, %v321
        %355 = vst.msk [vmem:[%s335 + $0x130] sm:$0xff] %vm197, %v322
        %356 = vst.msk [vmem:[%s335 + $0x148] sm:$0xff] %vm197, %v323
        %357 = vst.msk [vmem:[%s335 + $0x150] sm:$0xff] %vm197, %v324
        %358 = vst.msk [vmem:[%s335 + $0x168] sm:$0xff] %vm197, %v325
        %359 = vst.msk [vmem:[%s335 + $0x170] sm:$0xff] %vm197, %v326
        %360 = vst.msk [vmem:[%s335 + $0x188] sm:$0xff] %vm197, %v327
        %361 = vst.msk [vmem:[%s335 + $0x190] sm:$0xff] %vm197, %v328
        %362 = vst.msk [vmem:[%s335 + $0x1a8] sm:$0xff] %vm197, %v329
        %363 = vst.msk [vmem:[%s335 + $0x1b0] sm:$0xff] %vm197, %v330
        %364 = vst.msk [vmem:[%s335 + $0x1c8] sm:$0xff] %vm197, %v331
        %365 = vst.msk [vmem:[%s335 + $0x1d0] sm:$0xff] %vm197, %v332
        %366 = vst.msk [vmem:[%s335 + $0x1e8] sm:$0xff] %vm197, %v333
        %367 = vst.msk [vmem:[%s335 + $0x1f0] sm:$0xff] %vm197, %v334
        %v368 = vld [vmem:[#allocation2 + $0x7] sm:$0xff]
        %v369 = vld [vmem:[#allocation2 + $0xf] sm:$0xff]
        %v370 = vld [vmem:[#allocation2 + $0x27] sm:$0xff]
        %v371 = vld [vmem:[#allocation2 + $0x2f] sm:$0xff]
        %v372 = vld [vmem:[#allocation2 + $0x47] sm:$0xff]
        %v373 = vld [vmem:[#allocation2 + $0x4f] sm:$0xff]
        %v374 = vld [vmem:[#allocation2 + $0x67] sm:$0xff]
        %v375 = vld [vmem:[#allocation2 + $0x6f] sm:$0xff]
        %v376 = vld [vmem:[#allocation2 + $0x87] sm:$0xff]
        %v377 = vld [vmem:[#allocation2 + $0x8f] sm:$0xff]
        %v378 = vld [vmem:[#allocation2 + $0xa7] sm:$0xff]
        %v379 = vld [vmem:[#allocation2 + $0xaf] sm:$0xff]
        %v380 = vld [vmem:[#allocation2 + $0xc7] sm:$0xff]
        %v381 = vld [vmem:[#allocation2 + $0xcf] sm:$0xff]
        %v382 = vld [vmem:[#allocation2 + $0xe7] sm:$0xff]
        %v383 = vld [vmem:[#allocation2 + $0xef] sm:$0xff]
        %v384 = vld [vmem:[#allocation2 + $0x107] sm:$0xff]
        %v385 = vld [vmem:[#allocation2 + $0x10f] sm:$0xff]
        %v386 = vld [vmem:[#allocation2 + $0x127] sm:$0xff]
        %v387 = vld [vmem:[#allocation2 + $0x12f] sm:$0xff]
        %v388 = vld [vmem:[#allocation2 + $0x147] sm:$0xff]
        %v389 = vld [vmem:[#allocation2 + $0x14f] sm:$0xff]
        %v390 = vld [vmem:[#allocation2 + $0x167] sm:$0xff]
        %v391 = vld [vmem:[#allocation2 + $0x16f] sm:$0xff]
        %v392 = vld [vmem:[#allocation2 + $0x187] sm:$0xff]
        %v393 = vld [vmem:[#allocation2 + $0x18f] sm:$0xff]
        %v394 = vld [vmem:[#allocation2 + $0x1a7] sm:$0xff]
        %v395 = vld [vmem:[#allocation2 + $0x1af] sm:$0xff]
        %v396 = vld [vmem:[#allocation2 + $0x1c7] sm:$0xff]
        %v397 = vld [vmem:[#allocation2 + $0x1cf] sm:$0xff]
        %v398 = vld [vmem:[#allocation2 + $0x1e7] sm:$0xff]
        %v399 = vld [vmem:[#allocation2 + $0x1ef] sm:$0xff]
        %v400 = vpack.c.bf16 %v369, %v368
        %v401 = vpack.c.bf16 %v371, %v370
        %v402 = vpack.c.bf16 %v373, %v372
        %v403 = vpack.c.bf16 %v375, %v374
        %v404 = vpack.c.bf16 %v377, %v376
        %v405 = vpack.c.bf16 %v379, %v378
        %v406 = vpack.c.bf16 %v381, %v380
        %v407 = vpack.c.bf16 %v383, %v382
        %v408 = vpack.c.bf16 %v385, %v384
        %v409 = vpack.c.bf16 %v387, %v386
        %v410 = vpack.c.bf16 %v389, %v388
        %v411 = vpack.c.bf16 %v391, %v390
        %v412 = vpack.c.bf16 %v393, %v392
        %v413 = vpack.c.bf16 %v395, %v394
        %v414 = vpack.c.bf16 %v397, %v396
        %v415 = vpack.c.bf16 %v399, %v398
        %v416 = vld [vmem:[%s1] sm:$0x3]
        %v417 = vld [vmem:[#allocation2 + $0x8] sm:$0xff]
        %v418 = vld [vmem:[#allocation2 + $0x10] sm:$0xff]
        %v419 = vld [vmem:[#allocation2 + $0x28] sm:$0xff]
        %v420 = vld [vmem:[#allocation2 + $0x30] sm:$0xff]
        %v421 = vld [vmem:[#allocation2 + $0x48] sm:$0xff]
        %v422 = vld [vmem:[#allocation2 + $0x50] sm:$0xff]
        %v423 = vld [vmem:[#allocation2 + $0x68] sm:$0xff]
        %v424 = vld [vmem:[#allocation2 + $0x70] sm:$0xff]
        %v425 = vld [vmem:[#allocation2 + $0x88] sm:$0xff]
        %v426 = vld [vmem:[#allocation2 + $0x90] sm:$0xff]
        %v427 = vld [vmem:[#allocation2 + $0xa8] sm:$0xff]
        %v428 = vld [vmem:[#allocation2 + $0xb0] sm:$0xff]
        %v429 = vld [vmem:[#allocation2 + $0xc8] sm:$0xff]
        %v430 = vld [vmem:[#allocation2 + $0xd0] sm:$0xff]
        %v431 = vld [vmem:[#allocation2 + $0xe8] sm:$0xff]
        %v432 = vld [vmem:[#allocation2 + $0xf0] sm:$0xff]
        %v433 = vld [vmem:[#allocation2 + $0x108] sm:$0xff]
        %v434 = vld [vmem:[#allocation2 + $0x110] sm:$0xff]
        %v435 = vld [vmem:[#allocation2 + $0x128] sm:$0xff]
        %v436 = vld [vmem:[#allocation2 + $0x130] sm:$0xff]
        %v437 = vld [vmem:[#allocation2 + $0x148] sm:$0xff]
        %v438 = vld [vmem:[#allocation2 + $0x150] sm:$0xff]
        %v439 = vld [vmem:[#allocation2 + $0x168] sm:$0xff]
        %v440 = vld [vmem:[#allocation2 + $0x170] sm:$0xff]
        %v441 = vld [vmem:[#allocation2 + $0x188] sm:$0xff]
        %v442 = vld [vmem:[#allocation2 + $0x190] sm:$0xff]
        %v443 = vld [vmem:[#allocation2 + $0x1a8] sm:$0xff]
        %v444 = vld [vmem:[#allocation2 + $0x1b0] sm:$0xff]
        %v445 = vld [vmem:[#allocation2 + $0x1c8] sm:$0xff]
        %v446 = vld [vmem:[#allocation2 + $0x1d0] sm:$0xff]
        %v447 = vld [vmem:[#allocation2 + $0x1e8] sm:$0xff]
        %v448 = vld [vmem:[#allocation2 + $0x1f0] sm:$0xff]
        %v449 = vpack.c.bf16 %v418, %v417
        %v450 = vpack.c.bf16 %v420, %v419
        %v451 = vpack.c.bf16 %v422, %v421
        %v452 = vpack.c.bf16 %v424, %v423
        %v453 = vpack.c.bf16 %v426, %v425
        %v454 = vpack.c.bf16 %v428, %v427
        %v455 = vpack.c.bf16 %v430, %v429
        %v456 = vpack.c.bf16 %v432, %v431
        %v457 = vpack.c.bf16 %v434, %v433
        %v458 = vpack.c.bf16 %v436, %v435
        %v459 = vpack.c.bf16 %v438, %v437
        %v460 = vpack.c.bf16 %v440, %v439
        %v461 = vpack.c.bf16 %v442, %v441
        %v462 = vpack.c.bf16 %v444, %v443
        %v463 = vpack.c.bf16 %v446, %v445
        %v464 = vpack.c.bf16 %v448, %v447
        %s465 = scalar_lea.vmem %s1, 2
        %v466 = vld [vmem:[%s465] sm:$0x3]
        %v468 = vsel %vm197, %v449, 0
        %v471 = vsel %vm197, %v450, 0
        %v474 = vsel %vm197, %v451, 0
        %v477 = vsel %vm197, %v452, 0
        %v480 = vsel %vm197, %v453, 0
        %v483 = vsel %vm197, %v454, 0
        %v486 = vsel %vm197, %v455, 0
        %v489 = vsel %vm197, %v456, 0
        %v492 = vsel %vm197, %v457, 0
        %v495 = vsel %vm197, %v458, 0
        %v498 = vsel %vm197, %v459, 0
        %v501 = vsel %vm197, %v460, 0
        %v504 = vsel %vm197, %v461, 0
        %v507 = vsel %vm197, %v462, 0
        %v510 = vsel %vm197, %v463, 0
        %v513 = vsel %vm197, %v464, 0
        %vm515 = vcmask 1040384
        %vm516 = vcmask 1041408
        %v517 = vsel %vm515, 4294967295, 65535
        %v518 = vsel %vm516, %v517, 0
        %v520 = vand.u32 %v466, %v518
        %522 = vmatprep.subr.bf16.mxu0 0
        %523 = vmatpush1.bf16.msra.mxu0 %v520
        %524 = vmatprep.subr.bf16.mxu0 0
        %525 = vmatpush1.bf16.msra.mxu0 0
        %526 = vmatprep.subr.bf16.mxu0 0
        %527 = vmatpush1.bf16.msra.mxu0 0
        %528 = vmatprep.subr.bf16.mxu0 0
        %529 = vmatpush1.bf16.msra.mxu0 0
        %530 = vmatprep.subr.bf16.mxu0 0
        %531 = vmatpush1.bf16.msra.mxu0 0
        %532 = vmatprep.subr.bf16.mxu0 0
        %533 = vmatpush1.bf16.msra.mxu0 0
        %534 = vmatprep.subr.bf16.mxu0 0
        %535 = vmatpush1.bf16.msra.mxu0 0
        %536 = vmatprep.subr.bf16.mxu0 0
        %537 = vmatpush1.bf16.msra.mxu0 0
        %538 = vmatprep.subr.bf16.mxu0 0
        %539 = vmatpush1.bf16.msra.mxu0 0
        %540 = vmatprep.subr.bf16.mxu0 0
        %541 = vmatpush1.bf16.msra.mxu0 0
        %542 = vmatprep.subr.bf16.mxu0 0
        %543 = vmatpush1.bf16.msra.mxu0 0
        %544 = vmatprep.subr.bf16.mxu0 0
        %545 = vmatpush1.bf16.msra.mxu0 0
        %546 = vmatprep.subr.bf16.mxu0 0
        %547 = vmatpush1.bf16.msra.mxu0 0
        %548 = vmatprep.subr.bf16.mxu0 0
        %549 = vmatpush1.bf16.msra.mxu0 0
        %550 = vmatprep.subr.bf16.mxu0 0
        %551 = vmatpush1.bf16.msra.mxu0 0
        %552 = vmatprep.subr.bf16.mxu0 0
        %553 = vmatpush1.bf16.msra.mxu0 0
        %554 = vmatprep.mubr.bf16.mxu0 0
        %555 = vmatmul.mubr.bf16.gmra.mrb[0].mxu0 %v468
        %v556 = vpop.f32.mrb[0].mxu0
        %v557 = vadd.f32 0.0, %v556
        %v558 = vpop.f32.mrb[0].mxu0
        %v559 = vpop.f32.mrb[0].mxu0
        %v560 = vadd.f32 0.0, %v559
        %v561 = vpop.f32.mrb[0].mxu0
        %562 = vmatprep.mubr.bf16.mxu0 0
        %563 = vmatmul.mubr.bf16.gmra.mrb[0].mxu0 %v471
        %v564 = vpop.f32.mrb[0].mxu0
        %v565 = vadd.f32 0.0, %v564
        %v566 = vpop.f32.mrb[0].mxu0
        %v567 = vpop.f32.mrb[0].mxu0
        %v568 = vadd.f32 0.0, %v567
        %v569 = vpop.f32.mrb[0].mxu0
        %570 = vmatprep.mubr.bf16.mxu0 0
        %571 = vmatmul.mubr.bf16.gmra.mrb[0].mxu0 %v474
        %v572 = vpop.f32.mrb[0].mxu0
        %v573 = vadd.f32 0.0, %v572
        %v574 = vpop.f32.mrb[0].mxu0
        %v575 = vpop.f32.mrb[0].mxu0
        %v576 = vadd.f32 0.0, %v575
        %v577 = vpop.f32.mrb[0].mxu0
        %578 = vmatprep.mubr.bf16.mxu0 0
        %579 = vmatmul.mubr.bf16.gmra.mrb[0].mxu0 %v477
        %v580 = vpop.f32.mrb[0].mxu0
        %v581 = vadd.f32 0.0, %v580
        %v582 = vpop.f32.mrb[0].mxu0
        %v583 = vpop.f32.mrb[0].mxu0
        %v584 = vadd.f32 0.0, %v583
        %v585 = vpop.f32.mrb[0].mxu0
        %586 = vmatprep.mubr.bf16.mxu0 0
        %587 = vmatmul.mubr.bf16.gmra.mrb[0].mxu0 %v480
        %v588 = vpop.f32.mrb[0].mxu0
        %v589 = vadd.f32 0.0, %v588
        %v590 = vpop.f32.mrb[0].mxu0
        %v591 = vpop.f32.mrb[0].mxu0
        %v592 = vadd.f32 0.0, %v591
        %v593 = vpop.f32.mrb[0].mxu0
        %594 = vmatprep.mubr.bf16.mxu0 0
        %595 = vmatmul.mubr.bf16.gmra.mrb[0].mxu0 %v483
        %v596 = vpop.f32.mrb[0].mxu0
        %v597 = vadd.f32 0.0, %v596
        %v598 = vpop.f32.mrb[0].mxu0
        %v599 = vpop.f32.mrb[0].mxu0
        %v600 = vadd.f32 0.0, %v599
        %v601 = vpop.f32.mrb[0].mxu0
        %602 = vmatprep.mubr.bf16.mxu0 0
        %603 = vmatmul.mubr.bf16.gmra.mrb[0].mxu0 %v486
        %v604 = vpop.f32.mrb[0].mxu0
        %v605 = vadd.f32 0.0, %v604
        %v606 = vpop.f32.mrb[0].mxu0
        %v607 = vpop.f32.mrb[0].mxu0
        %v608 = vadd.f32 0.0, %v607
        %v609 = vpop.f32.mrb[0].mxu0
        %610 = vmatprep.mubr.bf16.mxu0 0
        %611 = vmatmul.mubr.bf16.gmra.mrb[0].mxu0 %v489
        %v612 = vpop.f32.mrb[0].mxu0
        %v613 = vadd.f32 0.0, %v612
        %v614 = vpop.f32.mrb[0].mxu0
        %v615 = vpop.f32.mrb[0].mxu0
        %v616 = vadd.f32 0.0, %v615
        %v617 = vpop.f32.mrb[0].mxu0
        %618 = vmatprep.mubr.bf16.mxu0 0
        %619 = vmatmul.mubr.bf16.gmra.mrb[0].mxu0 %v492
        %v620 = vpop.f32.mrb[0].mxu0
        %v621 = vadd.f32 0.0, %v620
        %v622 = vpop.f32.mrb[0].mxu0
        %v623 = vpop.f32.mrb[0].mxu0
        %v624 = vadd.f32 0.0, %v623
        %v625 = vpop.f32.mrb[0].mxu0
        %626 = vmatprep.mubr.bf16.mxu0 0
        %627 = vmatmul.mubr.bf16.gmra.mrb[0].mxu0 %v495
        %v628 = vpop.f32.mrb[0].mxu0
        %v629 = vadd.f32 0.0, %v628
        %v630 = vpop.f32.mrb[0].mxu0
        %v631 = vpop.f32.mrb[0].mxu0
        %v632 = vadd.f32 0.0, %v631
        %v633 = vpop.f32.mrb[0].mxu0
        %634 = vmatprep.mubr.bf16.mxu0 0
        %635 = vmatmul.mubr.bf16.gmra.mrb[0].mxu0 %v498
        %v636 = vpop.f32.mrb[0].mxu0
        %v637 = vadd.f32 0.0, %v636
        %v638 = vpop.f32.mrb[0].mxu0
        %v639 = vpop.f32.mrb[0].mxu0
        %v640 = vadd.f32 0.0, %v639
        %v641 = vpop.f32.mrb[0].mxu0
        %642 = vmatprep.mubr.bf16.mxu0 0
        %643 = vmatmul.mubr.bf16.gmra.mrb[0].mxu0 %v501
        %v644 = vpop.f32.mrb[0].mxu0
        %v645 = vadd.f32 0.0, %v644
        %v646 = vpop.f32.mrb[0].mxu0
        %v647 = vpop.f32.mrb[0].mxu0
        %v648 = vadd.f32 0.0, %v647
        %v649 = vpop.f32.mrb[0].mxu0
        %650 = vmatprep.mubr.bf16.mxu0 0
        %651 = vmatmul.mubr.bf16.gmra.mrb[0].mxu0 %v504
        %v652 = vpop.f32.mrb[0].mxu0
        %v653 = vadd.f32 0.0, %v652
        %v654 = vpop.f32.mrb[0].mxu0
        %v655 = vpop.f32.mrb[0].mxu0
        %v656 = vadd.f32 0.0, %v655
        %v657 = vpop.f32.mrb[0].mxu0
        %658 = vmatprep.mubr.bf16.mxu0 0
        %659 = vmatmul.mubr.bf16.gmra.mrb[0].mxu0 %v507
        %v660 = vpop.f32.mrb[0].mxu0
        %v661 = vadd.f32 0.0, %v660
        %v662 = vpop.f32.mrb[0].mxu0
        %v663 = vpop.f32.mrb[0].mxu0
        %v664 = vadd.f32 0.0, %v663
        %v665 = vpop.f32.mrb[0].mxu0
        %666 = vmatprep.mubr.bf16.mxu0 0
        %667 = vmatmul.mubr.bf16.gmra.mrb[0].mxu0 %v510
        %v668 = vpop.f32.mrb[0].mxu0
        %v669 = vadd.f32 0.0, %v668
        %v670 = vpop.f32.mrb[0].mxu0
        %v671 = vpop.f32.mrb[0].mxu0
        %v672 = vadd.f32 0.0, %v671
        %v673 = vpop.f32.mrb[0].mxu0
        %674 = vmatprep.mubr.bf16.mxu0 0
        %675 = vmatmul.mubr.bf16.gmra.mrb[0].mxu0 %v513
        %v676 = vpop.f32.mrb[0].mxu0
        %v677 = vadd.f32 0.0, %v676
        %v678 = vpop.f32.mrb[0].mxu0
        %v679 = vpop.f32.mrb[0].mxu0
        %v680 = vadd.f32 0.0, %v679
        %v681 = vpop.f32.mrb[0].mxu0
        %682 = vdwg.mxu0
        %v684 = vsel %vm197, %v400, 0
        %v687 = vsel %vm197, %v401, 0
        %v690 = vsel %vm197, %v402, 0
        %v693 = vsel %vm197, %v403, 0
        %v696 = vsel %vm197, %v404, 0
        %v699 = vsel %vm197, %v405, 0
        %v702 = vsel %vm197, %v406, 0
        %v705 = vsel %vm197, %v407, 0
        %v708 = vsel %vm197, %v408, 0
        %v711 = vsel %vm197, %v409, 0
        %v714 = vsel %vm197, %v410, 0
        %v717 = vsel %vm197, %v411, 0
        %v720 = vsel %vm197, %v412, 0
        %v723 = vsel %vm197, %v413, 0
        %v726 = vsel %vm197, %v414, 0
        %v729 = vsel %vm197, %v415, 0
        %v732 = vand.u32 %v416, %v518
        %734 = vmatprep.subr.bf16.mxu0 0
        %735 = vmatpush1.bf16.msra.mxu0 %v732
        %736 = vmatprep.subr.bf16.mxu0 0
        %737 = vmatpush1.bf16.msra.mxu0 0
        %738 = vmatprep.subr.bf16.mxu0 0
        %739 = vmatpush1.bf16.msra.mxu0 0
        %740 = vmatprep.subr.bf16.mxu0 0
        %741 = vmatpush1.bf16.msra.mxu0 0
        %742 = vmatprep.subr.bf16.mxu0 0
        %743 = vmatpush1.bf16.msra.mxu0 0
        %744 = vmatprep.subr.bf16.mxu0 0
        %745 = vmatpush1.bf16.msra.mxu0 0
        %746 = vmatprep.subr.bf16.mxu0 0
        %747 = vmatpush1.bf16.msra.mxu0 0
        %748 = vmatprep.subr.bf16.mxu0 0
        %749 = vmatpush1.bf16.msra.mxu0 0
        %750 = vmatprep.subr.bf16.mxu0 0
        %751 = vmatpush1.bf16.msra.mxu0 0
        %752 = vmatprep.subr.bf16.mxu0 0
        %753 = vmatpush1.bf16.msra.mxu0 0
        %754 = vmatprep.subr.bf16.mxu0 0
        %755 = vmatpush1.bf16.msra.mxu0 0
        %756 = vmatprep.subr.bf16.mxu0 0
        %757 = vmatpush1.bf16.msra.mxu0 0
        %758 = vmatprep.subr.bf16.mxu0 0
        %759 = vmatpush1.bf16.msra.mxu0 0
        %760 = vmatprep.subr.bf16.mxu0 0
        %761 = vmatpush1.bf16.msra.mxu0 0
        %762 = vmatprep.subr.bf16.mxu0 0
        %763 = vmatpush1.bf16.msra.mxu0 0
        %764 = vmatprep.subr.bf16.mxu0 0
        %765 = vmatpush1.bf16.msra.mxu0 0
        %766 = vmatprep.mubr.bf16.mxu0 0
        %767 = vmatmul.mubr.bf16.gmra.mrb[0].mxu0 %v684
        %v768 = vpop.f32.mrb[0].mxu0
        %v769 = vadd.f32 %v557, %v768
        %v770 = vpop.f32.mrb[0].mxu0
        %v771 = vpop.f32.mrb[0].mxu0
        %v772 = vadd.f32 %v560, %v771
        %v773 = vpop.f32.mrb[0].mxu0
        %774 = vmatprep.mubr.bf16.mxu0 0
        %775 = vmatmul.mubr.bf16.gmra.mrb[0].mxu0 %v687
        %v776 = vpop.f32.mrb[0].mxu0
        %v777 = vadd.f32 %v565, %v776
        %v778 = vpop.f32.mrb[0].mxu0
        %v779 = vpop.f32.mrb[0].mxu0
        %v780 = vadd.f32 %v568, %v779
        %v781 = vpop.f32.mrb[0].mxu0
        %782 = vmatprep.mubr.bf16.mxu0 0
        %783 = vmatmul.mubr.bf16.gmra.mrb[0].mxu0 %v690
        %v784 = vpop.f32.mrb[0].mxu0
        %v785 = vadd.f32 %v573, %v784
        %v786 = vpop.f32.mrb[0].mxu0
        %v787 = vpop.f32.mrb[0].mxu0
        %v788 = vadd.f32 %v576, %v787
        %v789 = vpop.f32.mrb[0].mxu0
        %790 = vmatprep.mubr.bf16.mxu0 0
        %791 = vmatmul.mubr.bf16.gmra.mrb[0].mxu0 %v693
        %v792 = vpop.f32.mrb[0].mxu0
        %v793 = vadd.f32 %v581, %v792
        %v794 = vpop.f32.mrb[0].mxu0
        %v795 = vpop.f32.mrb[0].mxu0
        %v796 = vadd.f32 %v584, %v795
        %v797 = vpop.f32.mrb[0].mxu0
        %798 = vmatprep.mubr.bf16.mxu0 0
        %799 = vmatmul.mubr.bf16.gmra.mrb[0].mxu0 %v696
        %v800 = vpop.f32.mrb[0].mxu0
        %v801 = vadd.f32 %v589, %v800
        %v802 = vpop.f32.mrb[0].mxu0
        %v803 = vpop.f32.mrb[0].mxu0
        %v804 = vadd.f32 %v592, %v803
        %v805 = vpop.f32.mrb[0].mxu0
        %806 = vmatprep.mubr.bf16.mxu0 0
        %807 = vmatmul.mubr.bf16.gmra.mrb[0].mxu0 %v699
        %v808 = vpop.f32.mrb[0].mxu0
        %v809 = vadd.f32 %v597, %v808
        %v810 = vpop.f32.mrb[0].mxu0
        %v811 = vpop.f32.mrb[0].mxu0
        %v812 = vadd.f32 %v600, %v811
        %v813 = vpop.f32.mrb[0].mxu0
        %814 = vmatprep.mubr.bf16.mxu0 0
        %815 = vmatmul.mubr.bf16.gmra.mrb[0].mxu0 %v702
        %v816 = vpop.f32.mrb[0].mxu0
        %v817 = vadd.f32 %v605, %v816
        %v818 = vpop.f32.mrb[0].mxu0
        %v819 = vpop.f32.mrb[0].mxu0
        %v820 = vadd.f32 %v608, %v819
        %v821 = vpop.f32.mrb[0].mxu0
        %822 = vmatprep.mubr.bf16.mxu0 0
        %823 = vmatmul.mubr.bf16.gmra.mrb[0].mxu0 %v705
        %v824 = vpop.f32.mrb[0].mxu0
        %v825 = vadd.f32 %v613, %v824
        %v826 = vpop.f32.mrb[0].mxu0
        %v827 = vpop.f32.mrb[0].mxu0
        %v828 = vadd.f32 %v616, %v827
        %v829 = vpop.f32.mrb[0].mxu0
        %830 = vmatprep.mubr.bf16.mxu0 0
        %831 = vmatmul.mubr.bf16.gmra.mrb[0].mxu0 %v708
        %v832 = vpop.f32.mrb[0].mxu0
        %v833 = vadd.f32 %v621, %v832
        %v834 = vpop.f32.mrb[0].mxu0
        %v835 = vpop.f32.mrb[0].mxu0
        %v836 = vadd.f32 %v624, %v835
        %v837 = vpop.f32.mrb[0].mxu0
        %838 = vmatprep.mubr.bf16.mxu0 0
        %839 = vmatmul.mubr.bf16.gmra.mrb[0].mxu0 %v711
        %v840 = vpop.f32.mrb[0].mxu0
        %v841 = vadd.f32 %v629, %v840
        %v842 = vpop.f32.mrb[0].mxu0
        %v843 = vpop.f32.mrb[0].mxu0
        %v844 = vadd.f32 %v632, %v843
        %v845 = vpop.f32.mrb[0].mxu0
        %846 = vmatprep.mubr.bf16.mxu0 0
        %847 = vmatmul.mubr.bf16.gmra.mrb[0].mxu0 %v714
        %v848 = vpop.f32.mrb[0].mxu0
        %v849 = vadd.f32 %v637, %v848
        %v850 = vpop.f32.mrb[0].mxu0
        %v851 = vpop.f32.mrb[0].mxu0
        %v852 = vadd.f32 %v640, %v851
        %v853 = vpop.f32.mrb[0].mxu0
        %854 = vmatprep.mubr.bf16.mxu0 0
        %855 = vmatmul.mubr.bf16.gmra.mrb[0].mxu0 %v717
        %v856 = vpop.f32.mrb[0].mxu0
        %v857 = vadd.f32 %v645, %v856
        %v858 = vpop.f32.mrb[0].mxu0
        %v859 = vpop.f32.mrb[0].mxu0
        %v860 = vadd.f32 %v648, %v859
        %v861 = vpop.f32.mrb[0].mxu0
        %862 = vmatprep.mubr.bf16.mxu0 0
        %863 = vmatmul.mubr.bf16.gmra.mrb[0].mxu0 %v720
        %v864 = vpop.f32.mrb[0].mxu0
        %v865 = vadd.f32 %v653, %v864
        %v866 = vpop.f32.mrb[0].mxu0
        %v867 = vpop.f32.mrb[0].mxu0
        %v868 = vadd.f32 %v656, %v867
        %v869 = vpop.f32.mrb[0].mxu0
        %870 = vmatprep.mubr.bf16.mxu0 0
        %871 = vmatmul.mubr.bf16.gmra.mrb[0].mxu0 %v723
        %v872 = vpop.f32.mrb[0].mxu0
        %v873 = vadd.f32 %v661, %v872
        %v874 = vpop.f32.mrb[0].mxu0
        %v875 = vpop.f32.mrb[0].mxu0
        %v876 = vadd.f32 %v664, %v875
        %v877 = vpop.f32.mrb[0].mxu0
        %878 = vmatprep.mubr.bf16.mxu0 0
        %879 = vmatmul.mubr.bf16.gmra.mrb[0].mxu0 %v726
        %v880 = vpop.f32.mrb[0].mxu0
        %v881 = vadd.f32 %v669, %v880
        %v882 = vpop.f32.mrb[0].mxu0
        %v883 = vpop.f32.mrb[0].mxu0
        %v884 = vadd.f32 %v672, %v883
        %v885 = vpop.f32.mrb[0].mxu0
        %886 = vmatprep.mubr.bf16.mxu0 0
        %887 = vmatmul.mubr.bf16.gmra.mrb[0].mxu0 %v729
        %v888 = vpop.f32.mrb[0].mxu0
        %v889 = vadd.f32 %v677, %v888
        %v890 = vpop.f32.mrb[0].mxu0
        %v891 = vpop.f32.mrb[0].mxu0
        %v892 = vadd.f32 %v680, %v891
        %v893 = vpop.f32.mrb[0].mxu0
        %894 = vdwg.mxu0
        %v895 = vld [vmem:[#allocation2 + $0x9] sm:$0xff]
        %v896 = vld [vmem:[#allocation2 + $0x11] sm:$0xff]
        %v897 = vld [vmem:[#allocation2 + $0x29] sm:$0xff]
        %v898 = vld [vmem:[#allocation2 + $0x31] sm:$0xff]
        %v899 = vld [vmem:[#allocation2 + $0x49] sm:$0xff]
        %v900 = vld [vmem:[#allocation2 + $0x51] sm:$0xff]
        %v901 = vld [vmem:[#allocation2 + $0x69] sm:$0xff]
        %v902 = vld [vmem:[#allocation2 + $0x71] sm:$0xff]
        %v903 = vld [vmem:[#allocation2 + $0x89] sm:$0xff]
        %v904 = vld [vmem:[#allocation2 + $0x91] sm:$0xff]
        %v905 = vld [vmem:[#allocation2 + $0xa9] sm:$0xff]
        %v906 = vld [vmem:[#allocation2 + $0xb1] sm:$0xff]
        %v907 = vld [vmem:[#allocation2 + $0xc9] sm:$0xff]
        %v908 = vld [vmem:[#allocation2 + $0xd1] sm:$0xff]
        %v909 = vld [vmem:[#allocation2 + $0xe9] sm:$0xff]
        %v910 = vld [vmem:[#allocation2 + $0xf1] sm:$0xff]
        %v911 = vld [vmem:[#allocation2 + $0x109] sm:$0xff]
        %v912 = vld [vmem:[#allocation2 + $0x111] sm:$0xff]
        %v913 = vld [vmem:[#allocation2 + $0x129] sm:$0xff]
        %v914 = vld [vmem:[#allocation2 + $0x131] sm:$0xff]
        %v915 = vld [vmem:[#allocation2 + $0x149] sm:$0xff]
        %v916 = vld [vmem:[#allocation2 + $0x151] sm:$0xff]
        %v917 = vld [vmem:[#allocation2 + $0x169] sm:$0xff]
        %v918 = vld [vmem:[#allocation2 + $0x171] sm:$0xff]
        %v919 = vld [vmem:[#allocation2 + $0x189] sm:$0xff]
        %v920 = vld [vmem:[#allocation2 + $0x191] sm:$0xff]
        %v921 = vld [vmem:[#allocation2 + $0x1a9] sm:$0xff]
        %v922 = vld [vmem:[#allocation2 + $0x1b1] sm:$0xff]
        %v923 = vld [vmem:[#allocation2 + $0x1c9] sm:$0xff]
        %v924 = vld [vmem:[#allocation2 + $0x1d1] sm:$0xff]
        %v925 = vld [vmem:[#allocation2 + $0x1e9] sm:$0xff]
        %v926 = vld [vmem:[#allocation2 + $0x1f1] sm:$0xff]
        %v927 = vpack.c.bf16 %v896, %v895
        %v928 = vpack.c.bf16 %v898, %v897
        %v929 = vpack.c.bf16 %v900, %v899
        %v930 = vpack.c.bf16 %v902, %v901
        %v931 = vpack.c.bf16 %v904, %v903
        %v932 = vpack.c.bf16 %v906, %v905
        %v933 = vpack.c.bf16 %v908, %v907
        %v934 = vpack.c.bf16 %v910, %v909
        %v935 = vpack.c.bf16 %v912, %v911
        %v936 = vpack.c.bf16 %v914, %v913
        %v937 = vpack.c.bf16 %v916, %v915
        %v938 = vpack.c.bf16 %v918, %v917
        %v939 = vpack.c.bf16 %v920, %v919
        %v940 = vpack.c.bf16 %v922, %v921
        %v941 = vpack.c.bf16 %v924, %v923
        %v942 = vpack.c.bf16 %v926, %v925
        %s943 = scalar_lea.vmem %s1, 4
        %v944 = vld [vmem:[%s943] sm:$0x3]
        %v946 = vsel %vm197, %v927, 0
        %v949 = vsel %vm197, %v928, 0
        %v952 = vsel %vm197, %v929, 0
        %v955 = vsel %vm197, %v930, 0
        %v958 = vsel %vm197, %v931, 0
        %v961 = vsel %vm197, %v932, 0
        %v964 = vsel %vm197, %v933, 0
        %v967 = vsel %vm197, %v934, 0
        %v970 = vsel %vm197, %v935, 0
        %v973 = vsel %vm197, %v936, 0
        %v976 = vsel %vm197, %v937, 0
        %v979 = vsel %vm197, %v938, 0
        %v982 = vsel %vm197, %v939, 0
        %v985 = vsel %vm197, %v940, 0
        %v988 = vsel %vm197, %v941, 0
        %v991 = vsel %vm197, %v942, 0
        %v994 = vand.u32 %v944, %v518
        %996 = vmatprep.subr.bf16.mxu0 0
        %997 = vmatpush1.bf16.msra.mxu0 %v994
        %998 = vmatprep.subr.bf16.mxu0 0
        %999 = vmatpush1.bf16.msra.mxu0 0
        %1000 = vmatprep.subr.bf16.mxu0 0
        %1001 = vmatpush1.bf16.msra.mxu0 0
        %1002 = vmatprep.subr.bf16.mxu0 0
        %1003 = vmatpush1.bf16.msra.mxu0 0
        %1004 = vmatprep.subr.bf16.mxu0 0
        %1005 = vmatpush1.bf16.msra.mxu0 0
        %1006 = vmatprep.subr.bf16.mxu0 0
        %1007 = vmatpush1.bf16.msra.mxu0 0
        %1008 = vmatprep.subr.bf16.mxu0 0
        %1009 = vmatpush1.bf16.msra.mxu0 0
        %1010 = vmatprep.subr.bf16.mxu0 0
        %1011 = vmatpush1.bf16.msra.mxu0 0
        %1012 = vmatprep.subr.bf16.mxu0 0
        %1013 = vmatpush1.bf16.msra.mxu0 0
        %1014 = vmatprep.subr.bf16.mxu0 0
        %1015 = vmatpush1.bf16.msra.mxu0 0
        %1016 = vmatprep.subr.bf16.mxu0 0
        %1017 = vmatpush1.bf16.msra.mxu0 0
        %1018 = vmatprep.subr.bf16.mxu0 0
        %1019 = vmatpush1.bf16.msra.mxu0 0
        %1020 = vmatprep.subr.bf16.mxu0 0
        %1021 = vmatpush1.bf16.msra.mxu0 0
        %1022 = vmatprep.subr.bf16.mxu0 0
        %1023 = vmatpush1.bf16.msra.mxu0 0
        %1024 = vmatprep.subr.bf16.mxu0 0
        %1025 = vmatpush1.bf16.msra.mxu0 0
        %1026 = vmatprep.subr.bf16.mxu0 0
        %1027 = vmatpush1.bf16.msra.mxu0 0
        %1028 = vmatprep.mubr.bf16.mxu0 0
        %1029 = vmatmul.mubr.bf16.gmra.mrb[0].mxu0 %v946
        %v1030 = vpop.f32.mrb[0].mxu0
        %v1031 = vadd.f32 0.0, %v1030
        %v1032 = vpop.f32.mrb[0].mxu0
        %v1033 = vpop.f32.mrb[0].mxu0
        %v1034 = vadd.f32 0.0, %v1033
        %v1035 = vpop.f32.mrb[0].mxu0
        %1036 = vmatprep.mubr.bf16.mxu0 0
        %1037 = vmatmul.mubr.bf16.gmra.mrb[0].mxu0 %v949
        %v1038 = vpop.f32.mrb[0].mxu0
        %v1039 = vadd.f32 0.0, %v1038
        %v1040 = vpop.f32.mrb[0].mxu0
        %v1041 = vpop.f32.mrb[0].mxu0
        %v1042 = vadd.f32 0.0, %v1041
        %v1043 = vpop.f32.mrb[0].mxu0
        %1044 = vmatprep.mubr.bf16.mxu0 0
        %1045 = vmatmul.mubr.bf16.gmra.mrb[0].mxu0 %v952
        %v1046 = vpop.f32.mrb[0].mxu0
        %v1047 = vadd.f32 0.0, %v1046
        %v1048 = vpop.f32.mrb[0].mxu0
        %v1049 = vpop.f32.mrb[0].mxu0
        %v1050 = vadd.f32 0.0, %v1049
        %v1051 = vpop.f32.mrb[0].mxu0
        %1052 = vmatprep.mubr.bf16.mxu0 0
        %1053 = vmatmul.mubr.bf16.gmra.mrb[0].mxu0 %v955
        %v1054 = vpop.f32.mrb[0].mxu0
        %v1055 = vadd.f32 0.0, %v1054
        %v1056 = vpop.f32.mrb[0].mxu0
        %v1057 = vpop.f32.mrb[0].mxu0
        %v1058 = vadd.f32 0.0, %v1057
        %v1059 = vpop.f32.mrb[0].mxu0
        %1060 = vmatprep.mubr.bf16.mxu0 0
        %1061 = vmatmul.mubr.bf16.gmra.mrb[0].mxu0 %v958
        %v1062 = vpop.f32.mrb[0].mxu0
        %v1063 = vadd.f32 0.0, %v1062
        %v1064 = vpop.f32.mrb[0].mxu0
        %v1065 = vpop.f32.mrb[0].mxu0
        %v1066 = vadd.f32 0.0, %v1065
        %v1067 = vpop.f32.mrb[0].mxu0
        %1068 = vmatprep.mubr.bf16.mxu0 0
        %1069 = vmatmul.mubr.bf16.gmra.mrb[0].mxu0 %v961
        %v1070 = vpop.f32.mrb[0].mxu0
        %v1071 = vadd.f32 0.0, %v1070
        %v1072 = vpop.f32.mrb[0].mxu0
        %v1073 = vpop.f32.mrb[0].mxu0
        %v1074 = vadd.f32 0.0, %v1073
        %v1075 = vpop.f32.mrb[0].mxu0
        %1076 = vmatprep.mubr.bf16.mxu0 0
        %1077 = vmatmul.mubr.bf16.gmra.mrb[0].mxu0 %v964
        %v1078 = vpop.f32.mrb[0].mxu0
        %v1079 = vadd.f32 0.0, %v1078
        %v1080 = vpop.f32.mrb[0].mxu0
        %v1081 = vpop.f32.mrb[0].mxu0
        %v1082 = vadd.f32 0.0, %v1081
        %v1083 = vpop.f32.mrb[0].mxu0
        %1084 = vmatprep.mubr.bf16.mxu0 0
        %1085 = vmatmul.mubr.bf16.gmra.mrb[0].mxu0 %v967
        %v1086 = vpop.f32.mrb[0].mxu0
        %v1087 = vadd.f32 0.0, %v1086
        %v1088 = vpop.f32.mrb[0].mxu0
        %v1089 = vpop.f32.mrb[0].mxu0
        %v1090 = vadd.f32 0.0, %v1089
        %v1091 = vpop.f32.mrb[0].mxu0
        %1092 = vmatprep.mubr.bf16.mxu0 0
        %1093 = vmatmul.mubr.bf16.gmra.mrb[0].mxu0 %v970
        %v1094 = vpop.f32.mrb[0].mxu0
        %v1095 = vadd.f32 0.0, %v1094
        %v1096 = vpop.f32.mrb[0].mxu0
        %v1097 = vpop.f32.mrb[0].mxu0
        %v1098 = vadd.f32 0.0, %v1097
        %v1099 = vpop.f32.mrb[0].mxu0
        %1100 = vmatprep.mubr.bf16.mxu0 0
        %1101 = vmatmul.mubr.bf16.gmra.mrb[0].mxu0 %v973
        %v1102 = vpop.f32.mrb[0].mxu0
        %v1103 = vadd.f32 0.0, %v1102
        %v1104 = vpop.f32.mrb[0].mxu0
        %v1105 = vpop.f32.mrb[0].mxu0
        %v1106 = vadd.f32 0.0, %v1105
        %v1107 = vpop.f32.mrb[0].mxu0
        %1108 = vmatprep.mubr.bf16.mxu0 0
        %1109 = vmatmul.mubr.bf16.gmra.mrb[0].mxu0 %v976
        %v1110 = vpop.f32.mrb[0].mxu0
        %v1111 = vadd.f32 0.0, %v1110
        %v1112 = vpop.f32.mrb[0].mxu0
        %v1113 = vpop.f32.mrb[0].mxu0
        %v1114 = vadd.f32 0.0, %v1113
        %v1115 = vpop.f32.mrb[0].mxu0
        %1116 = vmatprep.mubr.bf16.mxu0 0
        %1117 = vmatmul.mubr.bf16.gmra.mrb[0].mxu0 %v979
        %v1118 = vpop.f32.mrb[0].mxu0
        %v1119 = vadd.f32 0.0, %v1118
        %v1120 = vpop.f32.mrb[0].mxu0
        %v1121 = vpop.f32.mrb[0].mxu0
        %v1122 = vadd.f32 0.0, %v1121
        %v1123 = vpop.f32.mrb[0].mxu0
        %1124 = vmatprep.mubr.bf16.mxu0 0
        %1125 = vmatmul.mubr.bf16.gmra.mrb[0].mxu0 %v982
        %v1126 = vpop.f32.mrb[0].mxu0
        %v1127 = vadd.f32 0.0, %v1126
        %v1128 = vpop.f32.mrb[0].mxu0
        %v1129 = vpop.f32.mrb[0].mxu0
        %v1130 = vadd.f32 0.0, %v1129
        %v1131 = vpop.f32.mrb[0].mxu0
        %1132 = vmatprep.mubr.bf16.mxu0 0
        %1133 = vmatmul.mubr.bf16.gmra.mrb[0].mxu0 %v985
        %v1134 = vpop.f32.mrb[0].mxu0
        %v1135 = vadd.f32 0.0, %v1134
        %v1136 = vpop.f32.mrb[0].mxu0
        %v1137 = vpop.f32.mrb[0].mxu0
        %v1138 = vadd.f32 0.0, %v1137
        %v1139 = vpop.f32.mrb[0].mxu0
        %1140 = vmatprep.mubr.bf16.mxu0 0
        %1141 = vmatmul.mubr.bf16.gmra.mrb[0].mxu0 %v988
        %v1142 = vpop.f32.mrb[0].mxu0
        %v1143 = vadd.f32 0.0, %v1142
        %v1144 = vpop.f32.mrb[0].mxu0
        %v1145 = vpop.f32.mrb[0].mxu0
        %v1146 = vadd.f32 0.0, %v1145
        %v1147 = vpop.f32.mrb[0].mxu0
        %1148 = vmatprep.mubr.bf16.mxu0 0
        %1149 = vmatmul.mubr.bf16.gmra.mrb[0].mxu0 %v991
        %v1150 = vpop.f32.mrb[0].mxu0
        %v1151 = vadd.f32 0.0, %v1150
        %v1152 = vpop.f32.mrb[0].mxu0
        %v1153 = vpop.f32.mrb[0].mxu0
        %v1154 = vadd.f32 0.0, %v1153
        %v1155 = vpop.f32.mrb[0].mxu0
        %1156 = vdwg.mxu0
        %v1157 = vadd.f32 %v769, %v1031
        %v1158 = vadd.f32 %v772, %v1034
        %v1159 = vadd.f32 %v777, %v1039
        %v1160 = vadd.f32 %v780, %v1042
        %v1161 = vadd.f32 %v785, %v1047
        %v1162 = vadd.f32 %v788, %v1050
        %v1163 = vadd.f32 %v793, %v1055
        %v1164 = vadd.f32 %v796, %v1058
        %v1165 = vadd.f32 %v801, %v1063
        %v1166 = vadd.f32 %v804, %v1066
        %v1167 = vadd.f32 %v809, %v1071
        %v1168 = vadd.f32 %v812, %v1074
        %v1169 = vadd.f32 %v817, %v1079
        %v1170 = vadd.f32 %v820, %v1082
        %v1171 = vadd.f32 %v825, %v1087
        %v1172 = vadd.f32 %v828, %v1090
        %v1173 = vadd.f32 %v833, %v1095
        %v1174 = vadd.f32 %v836, %v1098
        %v1175 = vadd.f32 %v841, %v1103
        %v1176 = vadd.f32 %v844, %v1106
        %v1177 = vadd.f32 %v849, %v1111
        %v1178 = vadd.f32 %v852, %v1114
        %v1179 = vadd.f32 %v857, %v1119
        %v1180 = vadd.f32 %v860, %v1122
        %v1181 = vadd.f32 %v865, %v1127
        %v1182 = vadd.f32 %v868, %v1130
        %v1183 = vadd.f32 %v873, %v1135
        %v1184 = vadd.f32 %v876, %v1138
        %v1185 = vadd.f32 %v881, %v1143
        %v1186 = vadd.f32 %v884, %v1146
        %v1187 = vadd.f32 %v889, %v1151
        %v1188 = vadd.f32 %v892, %v1154
        %v1189 = vld [vmem:[%s335 + $0x7] sm:$0xff]
        %v1190 = vld [vmem:[%s335 + $0xf] sm:$0xff]
        %v1191 = vld [vmem:[%s335 + $0x27] sm:$0xff]
        %v1192 = vld [vmem:[%s335 + $0x2f] sm:$0xff]
        %v1193 = vld [vmem:[%s335 + $0x47] sm:$0xff]
        %v1194 = vld [vmem:[%s335 + $0x4f] sm:$0xff]
        %v1195 = vld [vmem:[%s335 + $0x67] sm:$0xff]
        %v1196 = vld [vmem:[%s335 + $0x6f] sm:$0xff]
        %v1197 = vld [vmem:[%s335 + $0x87] sm:$0xff]
        %v1198 = vld [vmem:[%s335 + $0x8f] sm:$0xff]
        %v1199 = vld [vmem:[%s335 + $0xa7] sm:$0xff]
        %v1200 = vld [vmem:[%s335 + $0xaf] sm:$0xff]
        %v1201 = vld [vmem:[%s335 + $0xc7] sm:$0xff]
        %v1202 = vld [vmem:[%s335 + $0xcf] sm:$0xff]
        %v1203 = vld [vmem:[%s335 + $0xe7] sm:$0xff]
        %v1204 = vld [vmem:[%s335 + $0xef] sm:$0xff]
        %v1205 = vld [vmem:[%s335 + $0x107] sm:$0xff]
        %v1206 = vld [vmem:[%s335 + $0x10f] sm:$0xff]
        %v1207 = vld [vmem:[%s335 + $0x127] sm:$0xff]
        %v1208 = vld [vmem:[%s335 + $0x12f] sm:$0xff]
        %v1209 = vld [vmem:[%s335 + $0x147] sm:$0xff]
        %v1210 = vld [vmem:[%s335 + $0x14f] sm:$0xff]
        %v1211 = vld [vmem:[%s335 + $0x167] sm:$0xff]
        %v1212 = vld [vmem:[%s335 + $0x16f] sm:$0xff]
        %v1213 = vld [vmem:[%s335 + $0x187] sm:$0xff]
        %v1214 = vld [vmem:[%s335 + $0x18f] sm:$0xff]
        %v1215 = vld [vmem:[%s335 + $0x1a7] sm:$0xff]
        %v1216 = vld [vmem:[%s335 + $0x1af] sm:$0xff]
        %v1217 = vld [vmem:[%s335 + $0x1c7] sm:$0xff]
        %v1218 = vld [vmem:[%s335 + $0x1cf] sm:$0xff]
        %v1219 = vld [vmem:[%s335 + $0x1e7] sm:$0xff]
        %v1220 = vld [vmem:[%s335 + $0x1ef] sm:$0xff]
        %v1221 = vpack.c.bf16 %v1190, %v1189
        %v1222 = vpack.c.bf16 %v1192, %v1191
        %v1223 = vpack.c.bf16 %v1194, %v1193
        %v1224 = vpack.c.bf16 %v1196, %v1195
        %v1225 = vpack.c.bf16 %v1198, %v1197
        %v1226 = vpack.c.bf16 %v1200, %v1199
        %v1227 = vpack.c.bf16 %v1202, %v1201
        %v1228 = vpack.c.bf16 %v1204, %v1203
        %v1229 = vpack.c.bf16 %v1206, %v1205
        %v1230 = vpack.c.bf16 %v1208, %v1207
        %v1231 = vpack.c.bf16 %v1210, %v1209
        %v1232 = vpack.c.bf16 %v1212, %v1211
        %v1233 = vpack.c.bf16 %v1214, %v1213
        %v1234 = vpack.c.bf16 %v1216, %v1215
        %v1235 = vpack.c.bf16 %v1218, %v1217
        %v1236 = vpack.c.bf16 %v1220, %v1219
        %s1237 = scalar_lea.vmem %s1, 6
        %v1238 = vld [vmem:[%s1237] sm:$0x3]
        %v1240 = vsel %vm197, %v1221, 0
        %v1243 = vsel %vm197, %v1222, 0
        %v1246 = vsel %vm197, %v1223, 0
        %v1249 = vsel %vm197, %v1224, 0
        %v1252 = vsel %vm197, %v1225, 0
        %v1255 = vsel %vm197, %v1226, 0
        %v1258 = vsel %vm197, %v1227, 0
        %v1261 = vsel %vm197, %v1228, 0
        %v1264 = vsel %vm197, %v1229, 0
        %v1267 = vsel %vm197, %v1230, 0
        %v1270 = vsel %vm197, %v1231, 0
        %v1273 = vsel %vm197, %v1232, 0
        %v1276 = vsel %vm197, %v1233, 0
        %v1279 = vsel %vm197, %v1234, 0
        %v1282 = vsel %vm197, %v1235, 0
        %v1285 = vsel %vm197, %v1236, 0
        %v1288 = vand.u32 %v1238, %v518
        %1290 = vmatprep.subr.bf16.mxu0 0
        %1291 = vmatpush1.bf16.msra.mxu0 %v1288
        %1292 = vmatprep.subr.bf16.mxu0 0
        %1293 = vmatpush1.bf16.msra.mxu0 0
        %1294 = vmatprep.subr.bf16.mxu0 0
        %1295 = vmatpush1.bf16.msra.mxu0 0
        %1296 = vmatprep.subr.bf16.mxu0 0
        %1297 = vmatpush1.bf16.msra.mxu0 0
        %1298 = vmatprep.subr.bf16.mxu0 0
        %1299 = vmatpush1.bf16.msra.mxu0 0
        %1300 = vmatprep.subr.bf16.mxu0 0
        %1301 = vmatpush1.bf16.msra.mxu0 0
        %1302 = vmatprep.subr.bf16.mxu0 0
        %1303 = vmatpush1.bf16.msra.mxu0 0
        %1304 = vmatprep.subr.bf16.mxu0 0
        %1305 = vmatpush1.bf16.msra.mxu0 0
        %1306 = vmatprep.subr.bf16.mxu0 0
        %1307 = vmatpush1.bf16.msra.mxu0 0
        %1308 = vmatprep.subr.bf16.mxu0 0
        %1309 = vmatpush1.bf16.msra.mxu0 0
        %1310 = vmatprep.subr.bf16.mxu0 0
        %1311 = vmatpush1.bf16.msra.mxu0 0
        %1312 = vmatprep.subr.bf16.mxu0 0
        %1313 = vmatpush1.bf16.msra.mxu0 0
        %1314 = vmatprep.subr.bf16.mxu0 0
        %1315 = vmatpush1.bf16.msra.mxu0 0
        %1316 = vmatprep.subr.bf16.mxu0 0
        %1317 = vmatpush1.bf16.msra.mxu0 0
        %1318 = vmatprep.subr.bf16.mxu0 0
        %1319 = vmatpush1.bf16.msra.mxu0 0
        %1320 = vmatprep.subr.bf16.mxu0 0
        %1321 = vmatpush1.bf16.msra.mxu0 0
        %1322 = vmatprep.mubr.bf16.mxu0 0
        %1323 = vmatmul.mubr.bf16.gmra.mrb[0].mxu0 %v1240
        %v1324 = vpop.f32.mrb[0].mxu0
        %v1325 = vadd.f32 0.0, %v1324
        %v1326 = vpop.f32.mrb[0].mxu0
        %v1327 = vpop.f32.mrb[0].mxu0
        %v1328 = vadd.f32 0.0, %v1327
        %v1329 = vpop.f32.mrb[0].mxu0
        %1330 = vmatprep.mubr.bf16.mxu0 0
        %1331 = vmatmul.mubr.bf16.gmra.mrb[0].mxu0 %v1243
        %v1332 = vpop.f32.mrb[0].mxu0
        %v1333 = vadd.f32 0.0, %v1332
        %v1334 = vpop.f32.mrb[0].mxu0
        %v1335 = vpop.f32.mrb[0].mxu0
        %v1336 = vadd.f32 0.0, %v1335
        %v1337 = vpop.f32.mrb[0].mxu0
        %1338 = vmatprep.mubr.bf16.mxu0 0
        %1339 = vmatmul.mubr.bf16.gmra.mrb[0].mxu0 %v1246
        %v1340 = vpop.f32.mrb[0].mxu0
        %v1341 = vadd.f32 0.0, %v1340
        %v1342 = vpop.f32.mrb[0].mxu0
        %v1343 = vpop.f32.mrb[0].mxu0
        %v1344 = vadd.f32 0.0, %v1343
        %v1345 = vpop.f32.mrb[0].mxu0
        %1346 = vmatprep.mubr.bf16.mxu0 0
        %1347 = vmatmul.mubr.bf16.gmra.mrb[0].mxu0 %v1249
        %v1348 = vpop.f32.mrb[0].mxu0
        %v1349 = vadd.f32 0.0, %v1348
        %v1350 = vpop.f32.mrb[0].mxu0
        %v1351 = vpop.f32.mrb[0].mxu0
        %v1352 = vadd.f32 0.0, %v1351
        %v1353 = vpop.f32.mrb[0].mxu0
        %1354 = vmatprep.mubr.bf16.mxu0 0
        %1355 = vmatmul.mubr.bf16.gmra.mrb[0].mxu0 %v1252
        %v1356 = vpop.f32.mrb[0].mxu0
        %v1357 = vadd.f32 0.0, %v1356
        %v1358 = vpop.f32.mrb[0].mxu0
        %v1359 = vpop.f32.mrb[0].mxu0
        %v1360 = vadd.f32 0.0, %v1359
        %v1361 = vpop.f32.mrb[0].mxu0
        %1362 = vmatprep.mubr.bf16.mxu0 0
        %1363 = vmatmul.mubr.bf16.gmra.mrb[0].mxu0 %v1255
        %v1364 = vpop.f32.mrb[0].mxu0
        %v1365 = vadd.f32 0.0, %v1364
        %v1366 = vpop.f32.mrb[0].mxu0
        %v1367 = vpop.f32.mrb[0].mxu0
        %v1368 = vadd.f32 0.0, %v1367
        %v1369 = vpop.f32.mrb[0].mxu0
        %1370 = vmatprep.mubr.bf16.mxu0 0
        %1371 = vmatmul.mubr.bf16.gmra.mrb[0].mxu0 %v1258
        %v1372 = vpop.f32.mrb[0].mxu0
        %v1373 = vadd.f32 0.0, %v1372
        %v1374 = vpop.f32.mrb[0].mxu0
        %v1375 = vpop.f32.mrb[0].mxu0
        %v1376 = vadd.f32 0.0, %v1375
        %v1377 = vpop.f32.mrb[0].mxu0
        %1378 = vmatprep.mubr.bf16.mxu0 0
        %1379 = vmatmul.mubr.bf16.gmra.mrb[0].mxu0 %v1261
        %v1380 = vpop.f32.mrb[0].mxu0
        %v1381 = vadd.f32 0.0, %v1380
        %v1382 = vpop.f32.mrb[0].mxu0
        %v1383 = vpop.f32.mrb[0].mxu0
        %v1384 = vadd.f32 0.0, %v1383
        %v1385 = vpop.f32.mrb[0].mxu0
        %1386 = vmatprep.mubr.bf16.mxu0 0
        %1387 = vmatmul.mubr.bf16.gmra.mrb[0].mxu0 %v1264
        %v1388 = vpop.f32.mrb[0].mxu0
        %v1389 = vadd.f32 0.0, %v1388
        %v1390 = vpop.f32.mrb[0].mxu0
        %v1391 = vpop.f32.mrb[0].mxu0
        %v1392 = vadd.f32 0.0, %v1391
        %v1393 = vpop.f32.mrb[0].mxu0
        %1394 = vmatprep.mubr.bf16.mxu0 0
        %1395 = vmatmul.mubr.bf16.gmra.mrb[0].mxu0 %v1267
        %v1396 = vpop.f32.mrb[0].mxu0
        %v1397 = vadd.f32 0.0, %v1396
        %v1398 = vpop.f32.mrb[0].mxu0
        %v1399 = vpop.f32.mrb[0].mxu0
        %v1400 = vadd.f32 0.0, %v1399
        %v1401 = vpop.f32.mrb[0].mxu0
        %1402 = vmatprep.mubr.bf16.mxu0 0
        %1403 = vmatmul.mubr.bf16.gmra.mrb[0].mxu0 %v1270
        %v1404 = vpop.f32.mrb[0].mxu0
        %v1405 = vadd.f32 0.0, %v1404
        %v1406 = vpop.f32.mrb[0].mxu0
        %v1407 = vpop.f32.mrb[0].mxu0
        %v1408 = vadd.f32 0.0, %v1407
        %v1409 = vpop.f32.mrb[0].mxu0
        %1410 = vmatprep.mubr.bf16.mxu0 0
        %1411 = vmatmul.mubr.bf16.gmra.mrb[0].mxu0 %v1273
        %v1412 = vpop.f32.mrb[0].mxu0
        %v1413 = vadd.f32 0.0, %v1412
        %v1414 = vpop.f32.mrb[0].mxu0
        %v1415 = vpop.f32.mrb[0].mxu0
        %v1416 = vadd.f32 0.0, %v1415
        %v1417 = vpop.f32.mrb[0].mxu0
        %1418 = vmatprep.mubr.bf16.mxu0 0
        %1419 = vmatmul.mubr.bf16.gmra.mrb[0].mxu0 %v1276
        %v1420 = vpop.f32.mrb[0].mxu0
        %v1421 = vadd.f32 0.0, %v1420
        %v1422 = vpop.f32.mrb[0].mxu0
        %v1423 = vpop.f32.mrb[0].mxu0
        %v1424 = vadd.f32 0.0, %v1423
        %v1425 = vpop.f32.mrb[0].mxu0
        %1426 = vmatprep.mubr.bf16.mxu0 0
        %1427 = vmatmul.mubr.bf16.gmra.mrb[0].mxu0 %v1279
        %v1428 = vpop.f32.mrb[0].mxu0
        %v1429 = vadd.f32 0.0, %v1428
        %v1430 = vpop.f32.mrb[0].mxu0
        %v1431 = vpop.f32.mrb[0].mxu0
        %v1432 = vadd.f32 0.0, %v1431
        %v1433 = vpop.f32.mrb[0].mxu0
        %1434 = vmatprep.mubr.bf16.mxu0 0
        %1435 = vmatmul.mubr.bf16.gmra.mrb[0].mxu0 %v1282
        %v1436 = vpop.f32.mrb[0].mxu0
        %v1437 = vadd.f32 0.0, %v1436
        %v1438 = vpop.f32.mrb[0].mxu0
        %v1439 = vpop.f32.mrb[0].mxu0
        %v1440 = vadd.f32 0.0, %v1439
        %v1441 = vpop.f32.mrb[0].mxu0
        %1442 = vmatprep.mubr.bf16.mxu0 0
        %1443 = vmatmul.mubr.bf16.gmra.mrb[0].mxu0 %v1285
        %v1444 = vpop.f32.mrb[0].mxu0
        %v1445 = vadd.f32 0.0, %v1444
        %v1446 = vpop.f32.mrb[0].mxu0
        %v1447 = vpop.f32.mrb[0].mxu0
        %v1448 = vadd.f32 0.0, %v1447
        %v1449 = vpop.f32.mrb[0].mxu0
        %1450 = vdwg.mxu0
        %v1451 = vadd.f32 %v1157, %v1325
        %v1452 = vadd.f32 %v1158, %v1328
        %v1453 = vadd.f32 %v1159, %v1333
        %v1454 = vadd.f32 %v1160, %v1336
        %v1455 = vadd.f32 %v1161, %v1341
        %v1456 = vadd.f32 %v1162, %v1344
        %v1457 = vadd.f32 %v1163, %v1349
        %v1458 = vadd.f32 %v1164, %v1352
        %v1459 = vadd.f32 %v1165, %v1357
        %v1460 = vadd.f32 %v1166, %v1360
        %v1461 = vadd.f32 %v1167, %v1365
        %v1462 = vadd.f32 %v1168, %v1368
        %v1463 = vadd.f32 %v1169, %v1373
        %v1464 = vadd.f32 %v1170, %v1376
        %v1465 = vadd.f32 %v1171, %v1381
        %v1466 = vadd.f32 %v1172, %v1384
        %v1467 = vadd.f32 %v1173, %v1389
        %v1468 = vadd.f32 %v1174, %v1392
        %v1469 = vadd.f32 %v1175, %v1397
        %v1470 = vadd.f32 %v1176, %v1400
        %v1471 = vadd.f32 %v1177, %v1405
        %v1472 = vadd.f32 %v1178, %v1408
        %v1473 = vadd.f32 %v1179, %v1413
        %v1474 = vadd.f32 %v1180, %v1416
        %v1475 = vadd.f32 %v1181, %v1421
        %v1476 = vadd.f32 %v1182, %v1424
        %v1477 = vadd.f32 %v1183, %v1429
        %v1478 = vadd.f32 %v1184, %v1432
        %v1479 = vadd.f32 %v1185, %v1437
        %v1480 = vadd.f32 %v1186, %v1440
        %v1481 = vadd.f32 %v1187, %v1445
        %v1482 = vadd.f32 %v1188, %v1448
        %v1483 = vld [vmem:[%s335 + $0x8] sm:$0xff]
        %v1484 = vld [vmem:[%s335 + $0x10] sm:$0xff]
        %v1485 = vld [vmem:[%s335 + $0x28] sm:$0xff]
        %v1486 = vld [vmem:[%s335 + $0x30] sm:$0xff]
        %v1487 = vld [vmem:[%s335 + $0x48] sm:$0xff]
        %v1488 = vld [vmem:[%s335 + $0x50] sm:$0xff]
        %v1489 = vld [vmem:[%s335 + $0x68] sm:$0xff]
        %v1490 = vld [vmem:[%s335 + $0x70] sm:$0xff]
        %v1491 = vld [vmem:[%s335 + $0x88] sm:$0xff]
        %v1492 = vld [vmem:[%s335 + $0x90] sm:$0xff]
        %v1493 = vld [vmem:[%s335 + $0xa8] sm:$0xff]
        %v1494 = vld [vmem:[%s335 + $0xb0] sm:$0xff]
        %v1495 = vld [vmem:[%s335 + $0xc8] sm:$0xff]
        %v1496 = vld [vmem:[%s335 + $0xd0] sm:$0xff]
        %v1497 = vld [vmem:[%s335 + $0xe8] sm:$0xff]
        %v1498 = vld [vmem:[%s335 + $0xf0] sm:$0xff]
        %v1499 = vld [vmem:[%s335 + $0x108] sm:$0xff]
        %v1500 = vld [vmem:[%s335 + $0x110] sm:$0xff]
        %v1501 = vld [vmem:[%s335 + $0x128] sm:$0xff]
        %v1502 = vld [vmem:[%s335 + $0x130] sm:$0xff]
        %v1503 = vld [vmem:[%s335 + $0x148] sm:$0xff]
        %v1504 = vld [vmem:[%s335 + $0x150] sm:$0xff]
        %v1505 = vld [vmem:[%s335 + $0x168] sm:$0xff]
        %v1506 = vld [vmem:[%s335 + $0x170] sm:$0xff]
        %v1507 = vld [vmem:[%s335 + $0x188] sm:$0xff]
        %v1508 = vld [vmem:[%s335 + $0x190] sm:$0xff]
        %v1509 = vld [vmem:[%s335 + $0x1a8] sm:$0xff]
        %v1510 = vld [vmem:[%s335 + $0x1b0] sm:$0xff]
        %v1511 = vld [vmem:[%s335 + $0x1c8] sm:$0xff]
        %v1512 = vld [vmem:[%s335 + $0x1d0] sm:$0xff]
        %v1513 = vld [vmem:[%s335 + $0x1e8] sm:$0xff]
        %v1514 = vld [vmem:[%s335 + $0x1f0] sm:$0xff]
        %v1515 = vpack.c.bf16 %v1484, %v1483
        %v1516 = vpack.c.bf16 %v1486, %v1485
        %v1517 = vpack.c.bf16 %v1488, %v1487
        %v1518 = vpack.c.bf16 %v1490, %v1489
        %v1519 = vpack.c.bf16 %v1492, %v1491
        %v1520 = vpack.c.bf16 %v1494, %v1493
        %v1521 = vpack.c.bf16 %v1496, %v1495
        %v1522 = vpack.c.bf16 %v1498, %v1497
        %v1523 = vpack.c.bf16 %v1500, %v1499
        %v1524 = vpack.c.bf16 %v1502, %v1501
        %v1525 = vpack.c.bf16 %v1504, %v1503
        %v1526 = vpack.c.bf16 %v1506, %v1505
        %v1527 = vpack.c.bf16 %v1508, %v1507
        %v1528 = vpack.c.bf16 %v1510, %v1509
        %v1529 = vpack.c.bf16 %v1512, %v1511
        %v1530 = vpack.c.bf16 %v1514, %v1513
        %s1531 = scalar_lea.vmem %s1, 8
        %v1532 = vld [vmem:[%s1531] sm:$0x3]
        %v1534 = vsel %vm197, %v1515, 0
        %v1537 = vsel %vm197, %v1516, 0
        %v1540 = vsel %vm197, %v1517, 0
        %v1543 = vsel %vm197, %v1518, 0
        %v1546 = vsel %vm197, %v1519, 0
        %v1549 = vsel %vm197, %v1520, 0
        %v1552 = vsel %vm197, %v1521, 0
        %v1555 = vsel %vm197, %v1522, 0
        %v1558 = vsel %vm197, %v1523, 0
        %v1561 = vsel %vm197, %v1524, 0
        %v1564 = vsel %vm197, %v1525, 0
        %v1567 = vsel %vm197, %v1526, 0
        %v1570 = vsel %vm197, %v1527, 0
        %v1573 = vsel %vm197, %v1528, 0
        %v1576 = vsel %vm197, %v1529, 0
        %v1579 = vsel %vm197, %v1530, 0
        %v1582 = vand.u32 %v1532, %v518
        %1584 = vmatprep.subr.bf16.mxu0 0
        %1585 = vmatpush1.bf16.msra.mxu0 %v1582
        %1586 = vmatprep.subr.bf16.mxu0 0
        %1587 = vmatpush1.bf16.msra.mxu0 0
        %1588 = vmatprep.subr.bf16.mxu0 0
        %1589 = vmatpush1.bf16.msra.mxu0 0
        %1590 = vmatprep.subr.bf16.mxu0 0
        %1591 = vmatpush1.bf16.msra.mxu0 0
        %1592 = vmatprep.subr.bf16.mxu0 0
        %1593 = vmatpush1.bf16.msra.mxu0 0
        %1594 = vmatprep.subr.bf16.mxu0 0
        %1595 = vmatpush1.bf16.msra.mxu0 0
        %1596 = vmatprep.subr.bf16.mxu0 0
        %1597 = vmatpush1.bf16.msra.mxu0 0
        %1598 = vmatprep.subr.bf16.mxu0 0
        %1599 = vmatpush1.bf16.msra.mxu0 0
        %1600 = vmatprep.subr.bf16.mxu0 0
        %1601 = vmatpush1.bf16.msra.mxu0 0
        %1602 = vmatprep.subr.bf16.mxu0 0
        %1603 = vmatpush1.bf16.msra.mxu0 0
        %1604 = vmatprep.subr.bf16.mxu0 0
        %1605 = vmatpush1.bf16.msra.mxu0 0
        %1606 = vmatprep.subr.bf16.mxu0 0
        %1607 = vmatpush1.bf16.msra.mxu0 0
        %1608 = vmatprep.subr.bf16.mxu0 0
        %1609 = vmatpush1.bf16.msra.mxu0 0
        %1610 = vmatprep.subr.bf16.mxu0 0
        %1611 = vmatpush1.bf16.msra.mxu0 0
        %1612 = vmatprep.subr.bf16.mxu0 0
        %1613 = vmatpush1.bf16.msra.mxu0 0
        %1614 = vmatprep.subr.bf16.mxu0 0
        %1615 = vmatpush1.bf16.msra.mxu0 0
        %1616 = vmatprep.mubr.bf16.mxu0 0
        %1617 = vmatmul.mubr.bf16.gmra.mrb[0].mxu0 %v1534
        %v1618 = vpop.f32.mrb[0].mxu0
        %v1619 = vadd.f32 0.0, %v1618
        %v1620 = vpop.f32.mrb[0].mxu0
        %v1621 = vpop.f32.mrb[0].mxu0
        %v1622 = vadd.f32 0.0, %v1621
        %v1623 = vpop.f32.mrb[0].mxu0
        %1624 = vmatprep.mubr.bf16.mxu0 0
        %1625 = vmatmul.mubr.bf16.gmra.mrb[0].mxu0 %v1537
        %v1626 = vpop.f32.mrb[0].mxu0
        %v1627 = vadd.f32 0.0, %v1626
        %v1628 = vpop.f32.mrb[0].mxu0
        %v1629 = vpop.f32.mrb[0].mxu0
        %v1630 = vadd.f32 0.0, %v1629
        %v1631 = vpop.f32.mrb[0].mxu0
        %1632 = vmatprep.mubr.bf16.mxu0 0
        %1633 = vmatmul.mubr.bf16.gmra.mrb[0].mxu0 %v1540
        %v1634 = vpop.f32.mrb[0].mxu0
        %v1635 = vadd.f32 0.0, %v1634
        %v1636 = vpop.f32.mrb[0].mxu0
        %v1637 = vpop.f32.mrb[0].mxu0
        %v1638 = vadd.f32 0.0, %v1637
        %v1639 = vpop.f32.mrb[0].mxu0
        %1640 = vmatprep.mubr.bf16.mxu0 0
        %1641 = vmatmul.mubr.bf16.gmra.mrb[0].mxu0 %v1543
        %v1642 = vpop.f32.mrb[0].mxu0
        %v1643 = vadd.f32 0.0, %v1642
        %v1644 = vpop.f32.mrb[0].mxu0
        %v1645 = vpop.f32.mrb[0].mxu0
        %v1646 = vadd.f32 0.0, %v1645
        %v1647 = vpop.f32.mrb[0].mxu0
        %1648 = vmatprep.mubr.bf16.mxu0 0
        %1649 = vmatmul.mubr.bf16.gmra.mrb[0].mxu0 %v1546
        %v1650 = vpop.f32.mrb[0].mxu0
        %v1651 = vadd.f32 0.0, %v1650
        %v1652 = vpop.f32.mrb[0].mxu0
        %v1653 = vpop.f32.mrb[0].mxu0
        %v1654 = vadd.f32 0.0, %v1653
        %v1655 = vpop.f32.mrb[0].mxu0
        %1656 = vmatprep.mubr.bf16.mxu0 0
        %1657 = vmatmul.mubr.bf16.gmra.mrb[0].mxu0 %v1549
        %v1658 = vpop.f32.mrb[0].mxu0
        %v1659 = vadd.f32 0.0, %v1658
        %v1660 = vpop.f32.mrb[0].mxu0
        %v1661 = vpop.f32.mrb[0].mxu0
        %v1662 = vadd.f32 0.0, %v1661
        %v1663 = vpop.f32.mrb[0].mxu0
        %1664 = vmatprep.mubr.bf16.mxu0 0
        %1665 = vmatmul.mubr.bf16.gmra.mrb[0].mxu0 %v1552
        %v1666 = vpop.f32.mrb[0].mxu0
        %v1667 = vadd.f32 0.0, %v1666
        %v1668 = vpop.f32.mrb[0].mxu0
        %v1669 = vpop.f32.mrb[0].mxu0
        %v1670 = vadd.f32 0.0, %v1669
        %v1671 = vpop.f32.mrb[0].mxu0
        %1672 = vmatprep.mubr.bf16.mxu0 0
        %1673 = vmatmul.mubr.bf16.gmra.mrb[0].mxu0 %v1555
        %v1674 = vpop.f32.mrb[0].mxu0
        %v1675 = vadd.f32 0.0, %v1674
        %v1676 = vpop.f32.mrb[0].mxu0
        %v1677 = vpop.f32.mrb[0].mxu0
        %v1678 = vadd.f32 0.0, %v1677
        %v1679 = vpop.f32.mrb[0].mxu0
        %1680 = vmatprep.mubr.bf16.mxu0 0
        %1681 = vmatmul.mubr.bf16.gmra.mrb[0].mxu0 %v1558
        %v1682 = vpop.f32.mrb[0].mxu0
        %v1683 = vadd.f32 0.0, %v1682
        %v1684 = vpop.f32.mrb[0].mxu0
        %v1685 = vpop.f32.mrb[0].mxu0
        %v1686 = vadd.f32 0.0, %v1685
        %v1687 = vpop.f32.mrb[0].mxu0
        %1688 = vmatprep.mubr.bf16.mxu0 0
        %1689 = vmatmul.mubr.bf16.gmra.mrb[0].mxu0 %v1561
        %v1690 = vpop.f32.mrb[0].mxu0
        %v1691 = vadd.f32 0.0, %v1690
        %v1692 = vpop.f32.mrb[0].mxu0
        %v1693 = vpop.f32.mrb[0].mxu0
        %v1694 = vadd.f32 0.0, %v1693
        %v1695 = vpop.f32.mrb[0].mxu0
        %1696 = vmatprep.mubr.bf16.mxu0 0
        %1697 = vmatmul.mubr.bf16.gmra.mrb[0].mxu0 %v1564
        %v1698 = vpop.f32.mrb[0].mxu0
        %v1699 = vadd.f32 0.0, %v1698
        %v1700 = vpop.f32.mrb[0].mxu0
        %v1701 = vpop.f32.mrb[0].mxu0
        %v1702 = vadd.f32 0.0, %v1701
        %v1703 = vpop.f32.mrb[0].mxu0
        %1704 = vmatprep.mubr.bf16.mxu0 0
        %1705 = vmatmul.mubr.bf16.gmra.mrb[0].mxu0 %v1567
        %v1706 = vpop.f32.mrb[0].mxu0
        %v1707 = vadd.f32 0.0, %v1706
        %v1708 = vpop.f32.mrb[0].mxu0
        %v1709 = vpop.f32.mrb[0].mxu0
        %v1710 = vadd.f32 0.0, %v1709
        %v1711 = vpop.f32.mrb[0].mxu0
        %1712 = vmatprep.mubr.bf16.mxu0 0
        %1713 = vmatmul.mubr.bf16.gmra.mrb[0].mxu0 %v1570
        %v1714 = vpop.f32.mrb[0].mxu0
        %v1715 = vadd.f32 0.0, %v1714
        %v1716 = vpop.f32.mrb[0].mxu0
        %v1717 = vpop.f32.mrb[0].mxu0
        %v1718 = vadd.f32 0.0, %v1717
        %v1719 = vpop.f32.mrb[0].mxu0
        %1720 = vmatprep.mubr.bf16.mxu0 0
        %1721 = vmatmul.mubr.bf16.gmra.mrb[0].mxu0 %v1573
        %v1722 = vpop.f32.mrb[0].mxu0
        %v1723 = vadd.f32 0.0, %v1722
        %v1724 = vpop.f32.mrb[0].mxu0
        %v1725 = vpop.f32.mrb[0].mxu0
        %v1726 = vadd.f32 0.0, %v1725
        %v1727 = vpop.f32.mrb[0].mxu0
        %1728 = vmatprep.mubr.bf16.mxu0 0
        %1729 = vmatmul.mubr.bf16.gmra.mrb[0].mxu0 %v1576
        %v1730 = vpop.f32.mrb[0].mxu0
        %v1731 = vadd.f32 0.0, %v1730
        %v1732 = vpop.f32.mrb[0].mxu0
        %v1733 = vpop.f32.mrb[0].mxu0
        %v1734 = vadd.f32 0.0, %v1733
        %v1735 = vpop.f32.mrb[0].mxu0
        %1736 = vmatprep.mubr.bf16.mxu0 0
        %1737 = vmatmul.mubr.bf16.gmra.mrb[0].mxu0 %v1579
        %v1738 = vpop.f32.mrb[0].mxu0
        %v1739 = vadd.f32 0.0, %v1738
        %v1740 = vpop.f32.mrb[0].mxu0
        %v1741 = vpop.f32.mrb[0].mxu0
        %v1742 = vadd.f32 0.0, %v1741
        %v1743 = vpop.f32.mrb[0].mxu0
        %1744 = vdwg.mxu0
        %v1745 = vadd.f32 %v1451, %v1619
        %v1746 = vadd.f32 %v1452, %v1622
        %v1747 = vadd.f32 %v1453, %v1627
        %v1748 = vadd.f32 %v1454, %v1630
        %v1749 = vadd.f32 %v1455, %v1635
        %v1750 = vadd.f32 %v1456, %v1638
        %v1751 = vadd.f32 %v1457, %v1643
        %v1752 = vadd.f32 %v1458, %v1646
        %v1753 = vadd.f32 %v1459, %v1651
        %v1754 = vadd.f32 %v1460, %v1654
        %v1755 = vadd.f32 %v1461, %v1659
        %v1756 = vadd.f32 %v1462, %v1662
        %v1757 = vadd.f32 %v1463, %v1667
        %v1758 = vadd.f32 %v1464, %v1670
        %v1759 = vadd.f32 %v1465, %v1675
        %v1760 = vadd.f32 %v1466, %v1678
        %v1761 = vadd.f32 %v1467, %v1683
        %v1762 = vadd.f32 %v1468, %v1686
        %v1763 = vadd.f32 %v1469, %v1691
        %v1764 = vadd.f32 %v1470, %v1694
        %v1765 = vadd.f32 %v1471, %v1699
        %v1766 = vadd.f32 %v1472, %v1702
        %v1767 = vadd.f32 %v1473, %v1707
        %v1768 = vadd.f32 %v1474, %v1710
        %v1769 = vadd.f32 %v1475, %v1715
        %v1770 = vadd.f32 %v1476, %v1718
        %v1771 = vadd.f32 %v1477, %v1723
        %v1772 = vadd.f32 %v1478, %v1726
        %v1773 = vadd.f32 %v1479, %v1731
        %v1774 = vadd.f32 %v1480, %v1734
        %v1775 = vadd.f32 %v1481, %v1739
        %v1776 = vadd.f32 %v1482, %v1742
        %v1777 = vld [vmem:[%s335 + $0x9] sm:$0xff]
        %v1778 = vld [vmem:[%s335 + $0x11] sm:$0xff]
        %v1779 = vld [vmem:[%s335 + $0x29] sm:$0xff]
        %v1780 = vld [vmem:[%s335 + $0x31] sm:$0xff]
        %v1781 = vld [vmem:[%s335 + $0x49] sm:$0xff]
        %v1782 = vld [vmem:[%s335 + $0x51] sm:$0xff]
        %v1783 = vld [vmem:[%s335 + $0x69] sm:$0xff]
        %v1784 = vld [vmem:[%s335 + $0x71] sm:$0xff]
        %v1785 = vld [vmem:[%s335 + $0x89] sm:$0xff]
        %v1786 = vld [vmem:[%s335 + $0x91] sm:$0xff]
        %v1787 = vld [vmem:[%s335 + $0xa9] sm:$0xff]
        %v1788 = vld [vmem:[%s335 + $0xb1] sm:$0xff]
        %v1789 = vld [vmem:[%s335 + $0xc9] sm:$0xff]
        %v1790 = vld [vmem:[%s335 + $0xd1] sm:$0xff]
        %v1791 = vld [vmem:[%s335 + $0xe9] sm:$0xff]
        %v1792 = vld [vmem:[%s335 + $0xf1] sm:$0xff]
        %v1793 = vld [vmem:[%s335 + $0x109] sm:$0xff]
        %v1794 = vld [vmem:[%s335 + $0x111] sm:$0xff]
        %v1795 = vld [vmem:[%s335 + $0x129] sm:$0xff]
        %v1796 = vld [vmem:[%s335 + $0x131] sm:$0xff]
        %v1797 = vld [vmem:[%s335 + $0x149] sm:$0xff]
        %v1798 = vld [vmem:[%s335 + $0x151] sm:$0xff]
        %v1799 = vld [vmem:[%s335 + $0x169] sm:$0xff]
        %v1800 = vld [vmem:[%s335 + $0x171] sm:$0xff]
        %v1801 = vld [vmem:[%s335 + $0x189] sm:$0xff]
        %v1802 = vld [vmem:[%s335 + $0x191] sm:$0xff]
        %v1803 = vld [vmem:[%s335 + $0x1a9] sm:$0xff]
        %v1804 = vld [vmem:[%s335 + $0x1b1] sm:$0xff]
        %v1805 = vld [vmem:[%s335 + $0x1c9] sm:$0xff]
        %v1806 = vld [vmem:[%s335 + $0x1d1] sm:$0xff]
        %v1807 = vld [vmem:[%s335 + $0x1e9] sm:$0xff]
        %v1808 = vld [vmem:[%s335 + $0x1f1] sm:$0xff]
        %v1809 = vpack.c.bf16 %v1778, %v1777
        %v1810 = vpack.c.bf16 %v1780, %v1779
        %v1811 = vpack.c.bf16 %v1782, %v1781
        %v1812 = vpack.c.bf16 %v1784, %v1783
        %v1813 = vpack.c.bf16 %v1786, %v1785
        %v1814 = vpack.c.bf16 %v1788, %v1787
        %v1815 = vpack.c.bf16 %v1790, %v1789
        %v1816 = vpack.c.bf16 %v1792, %v1791
        %v1817 = vpack.c.bf16 %v1794, %v1793
        %v1818 = vpack.c.bf16 %v1796, %v1795
        %v1819 = vpack.c.bf16 %v1798, %v1797
        %v1820 = vpack.c.bf16 %v1800, %v1799
        %v1821 = vpack.c.bf16 %v1802, %v1801
        %v1822 = vpack.c.bf16 %v1804, %v1803
        %v1823 = vpack.c.bf16 %v1806, %v1805
        %v1824 = vpack.c.bf16 %v1808, %v1807
        %s1825 = scalar_lea.vmem %s1, 10
        %v1826 = vld [vmem:[%s1825] sm:$0x3]
        %v1828 = vsel %vm197, %v1809, 0
        %v1831 = vsel %vm197, %v1810, 0
        %v1834 = vsel %vm197, %v1811, 0
        %v1837 = vsel %vm197, %v1812, 0
        %v1840 = vsel %vm197, %v1813, 0
        %v1843 = vsel %vm197, %v1814, 0
        %v1846 = vsel %vm197, %v1815, 0
        %v1849 = vsel %vm197, %v1816, 0
        %v1852 = vsel %vm197, %v1817, 0
        %v1855 = vsel %vm197, %v1818, 0
        %v1858 = vsel %vm197, %v1819, 0
        %v1861 = vsel %vm197, %v1820, 0
        %v1864 = vsel %vm197, %v1821, 0
        %v1867 = vsel %vm197, %v1822, 0
        %v1870 = vsel %vm197, %v1823, 0
        %v1873 = vsel %vm197, %v1824, 0
        %v1876 = vand.u32 %v1826, %v518
        %1878 = vmatprep.subr.bf16.mxu0 0
        %1879 = vmatpush1.bf16.msra.mxu0 %v1876
        %1880 = vmatprep.subr.bf16.mxu0 0
        %1881 = vmatpush1.bf16.msra.mxu0 0
        %1882 = vmatprep.subr.bf16.mxu0 0
        %1883 = vmatpush1.bf16.msra.mxu0 0
        %1884 = vmatprep.subr.bf16.mxu0 0
        %1885 = vmatpush1.bf16.msra.mxu0 0
        %1886 = vmatprep.subr.bf16.mxu0 0
        %1887 = vmatpush1.bf16.msra.mxu0 0
        %1888 = vmatprep.subr.bf16.mxu0 0
        %1889 = vmatpush1.bf16.msra.mxu0 0
        %1890 = vmatprep.subr.bf16.mxu0 0
        %1891 = vmatpush1.bf16.msra.mxu0 0
        %1892 = vmatprep.subr.bf16.mxu0 0
        %1893 = vmatpush1.bf16.msra.mxu0 0
        %1894 = vmatprep.subr.bf16.mxu0 0
        %1895 = vmatpush1.bf16.msra.mxu0 0
        %1896 = vmatprep.subr.bf16.mxu0 0
        %1897 = vmatpush1.bf16.msra.mxu0 0
        %1898 = vmatprep.subr.bf16.mxu0 0
        %1899 = vmatpush1.bf16.msra.mxu0 0
        %1900 = vmatprep.subr.bf16.mxu0 0
        %1901 = vmatpush1.bf16.msra.mxu0 0
        %1902 = vmatprep.subr.bf16.mxu0 0
        %1903 = vmatpush1.bf16.msra.mxu0 0
        %1904 = vmatprep.subr.bf16.mxu0 0
        %1905 = vmatpush1.bf16.msra.mxu0 0
        %1906 = vmatprep.subr.bf16.mxu0 0
        %1907 = vmatpush1.bf16.msra.mxu0 0
        %1908 = vmatprep.subr.bf16.mxu0 0
        %1909 = vmatpush1.bf16.msra.mxu0 0
        %1910 = vmatprep.mubr.bf16.mxu0 0
        %1911 = vmatmul.mubr.bf16.gmra.mrb[0].mxu0 %v1828
        %v1912 = vpop.f32.mrb[0].mxu0
        %v1913 = vadd.f32 0.0, %v1912
        %v1914 = vpop.f32.mrb[0].mxu0
        %v1915 = vpop.f32.mrb[0].mxu0
        %v1916 = vadd.f32 0.0, %v1915
        %v1917 = vpop.f32.mrb[0].mxu0
        %1918 = vmatprep.mubr.bf16.mxu0 0
        %1919 = vmatmul.mubr.bf16.gmra.mrb[0].mxu0 %v1831
        %v1920 = vpop.f32.mrb[0].mxu0
        %v1921 = vadd.f32 0.0, %v1920
        %v1922 = vpop.f32.mrb[0].mxu0
        %v1923 = vpop.f32.mrb[0].mxu0
        %v1924 = vadd.f32 0.0, %v1923
        %v1925 = vpop.f32.mrb[0].mxu0
        %1926 = vmatprep.mubr.bf16.mxu0 0
        %1927 = vmatmul.mubr.bf16.gmra.mrb[0].mxu0 %v1834
        %v1928 = vpop.f32.mrb[0].mxu0
        %v1929 = vadd.f32 0.0, %v1928
        %v1930 = vpop.f32.mrb[0].mxu0
        %v1931 = vpop.f32.mrb[0].mxu0
        %v1932 = vadd.f32 0.0, %v1931
        %v1933 = vpop.f32.mrb[0].mxu0
        %1934 = vmatprep.mubr.bf16.mxu0 0
        %1935 = vmatmul.mubr.bf16.gmra.mrb[0].mxu0 %v1837
        %v1936 = vpop.f32.mrb[0].mxu0
        %v1937 = vadd.f32 0.0, %v1936
        %v1938 = vpop.f32.mrb[0].mxu0
        %v1939 = vpop.f32.mrb[0].mxu0
        %v1940 = vadd.f32 0.0, %v1939
        %v1941 = vpop.f32.mrb[0].mxu0
        %1942 = vmatprep.mubr.bf16.mxu0 0
        %1943 = vmatmul.mubr.bf16.gmra.mrb[0].mxu0 %v1840
        %v1944 = vpop.f32.mrb[0].mxu0
        %v1945 = vadd.f32 0.0, %v1944
        %v1946 = vpop.f32.mrb[0].mxu0
        %v1947 = vpop.f32.mrb[0].mxu0
        %v1948 = vadd.f32 0.0, %v1947
        %v1949 = vpop.f32.mrb[0].mxu0
        %1950 = vmatprep.mubr.bf16.mxu0 0
        %1951 = vmatmul.mubr.bf16.gmra.mrb[0].mxu0 %v1843
        %v1952 = vpop.f32.mrb[0].mxu0
        %v1953 = vadd.f32 0.0, %v1952
        %v1954 = vpop.f32.mrb[0].mxu0
        %v1955 = vpop.f32.mrb[0].mxu0
        %v1956 = vadd.f32 0.0, %v1955
        %v1957 = vpop.f32.mrb[0].mxu0
        %1958 = vmatprep.mubr.bf16.mxu0 0
        %1959 = vmatmul.mubr.bf16.gmra.mrb[0].mxu0 %v1846
        %v1960 = vpop.f32.mrb[0].mxu0
        %v1961 = vadd.f32 0.0, %v1960
        %v1962 = vpop.f32.mrb[0].mxu0
        %v1963 = vpop.f32.mrb[0].mxu0
        %v1964 = vadd.f32 0.0, %v1963
        %v1965 = vpop.f32.mrb[0].mxu0
        %1966 = vmatprep.mubr.bf16.mxu0 0
        %1967 = vmatmul.mubr.bf16.gmra.mrb[0].mxu0 %v1849
        %v1968 = vpop.f32.mrb[0].mxu0
        %v1969 = vadd.f32 0.0, %v1968
        %v1970 = vpop.f32.mrb[0].mxu0
        %v1971 = vpop.f32.mrb[0].mxu0
        %v1972 = vadd.f32 0.0, %v1971
        %v1973 = vpop.f32.mrb[0].mxu0
        %1974 = vmatprep.mubr.bf16.mxu0 0
        %1975 = vmatmul.mubr.bf16.gmra.mrb[0].mxu0 %v1852
        %v1976 = vpop.f32.mrb[0].mxu0
        %v1977 = vadd.f32 0.0, %v1976
        %v1978 = vpop.f32.mrb[0].mxu0
        %v1979 = vpop.f32.mrb[0].mxu0
        %v1980 = vadd.f32 0.0, %v1979
        %v1981 = vpop.f32.mrb[0].mxu0
        %1982 = vmatprep.mubr.bf16.mxu0 0
        %1983 = vmatmul.mubr.bf16.gmra.mrb[0].mxu0 %v1855
        %v1984 = vpop.f32.mrb[0].mxu0
        %v1985 = vadd.f32 0.0, %v1984
        %v1986 = vpop.f32.mrb[0].mxu0
        %v1987 = vpop.f32.mrb[0].mxu0
        %v1988 = vadd.f32 0.0, %v1987
        %v1989 = vpop.f32.mrb[0].mxu0
        %1990 = vmatprep.mubr.bf16.mxu0 0
        %1991 = vmatmul.mubr.bf16.gmra.mrb[0].mxu0 %v1858
        %v1992 = vpop.f32.mrb[0].mxu0
        %v1993 = vadd.f32 0.0, %v1992
        %v1994 = vpop.f32.mrb[0].mxu0
        %v1995 = vpop.f32.mrb[0].mxu0
        %v1996 = vadd.f32 0.0, %v1995
        %v1997 = vpop.f32.mrb[0].mxu0
        %1998 = vmatprep.mubr.bf16.mxu0 0
        %1999 = vmatmul.mubr.bf16.gmra.mrb[0].mxu0 %v1861
        %v2000 = vpop.f32.mrb[0].mxu0
        %v2001 = vadd.f32 0.0, %v2000
        %v2002 = vpop.f32.mrb[0].mxu0
        %v2003 = vpop.f32.mrb[0].mxu0
        %v2004 = vadd.f32 0.0, %v2003
        %v2005 = vpop.f32.mrb[0].mxu0
        %2006 = vmatprep.mubr.bf16.mxu0 0
        %2007 = vmatmul.mubr.bf16.gmra.mrb[0].mxu0 %v1864
        %v2008 = vpop.f32.mrb[0].mxu0
        %v2009 = vadd.f32 0.0, %v2008
        %v2010 = vpop.f32.mrb[0].mxu0
        %v2011 = vpop.f32.mrb[0].mxu0
        %v2012 = vadd.f32 0.0, %v2011
        %v2013 = vpop.f32.mrb[0].mxu0
        %2014 = vmatprep.mubr.bf16.mxu0 0
        %2015 = vmatmul.mubr.bf16.gmra.mrb[0].mxu0 %v1867
        %v2016 = vpop.f32.mrb[0].mxu0
        %v2017 = vadd.f32 0.0, %v2016
        %v2018 = vpop.f32.mrb[0].mxu0
        %v2019 = vpop.f32.mrb[0].mxu0
        %v2020 = vadd.f32 0.0, %v2019
        %v2021 = vpop.f32.mrb[0].mxu0
        %2022 = vmatprep.mubr.bf16.mxu0 0
        %2023 = vmatmul.mubr.bf16.gmra.mrb[0].mxu0 %v1870
        %v2024 = vpop.f32.mrb[0].mxu0
        %v2025 = vadd.f32 0.0, %v2024
        %v2026 = vpop.f32.mrb[0].mxu0
        %v2027 = vpop.f32.mrb[0].mxu0
        %v2028 = vadd.f32 0.0, %v2027
        %v2029 = vpop.f32.mrb[0].mxu0
        %2030 = vmatprep.mubr.bf16.mxu0 0
        %2031 = vmatmul.mubr.bf16.gmra.mrb[0].mxu0 %v1873
        %v2032 = vpop.f32.mrb[0].mxu0
        %v2033 = vadd.f32 0.0, %v2032
        %v2034 = vpop.f32.mrb[0].mxu0
        %v2035 = vpop.f32.mrb[0].mxu0
        %v2036 = vadd.f32 0.0, %v2035
        %v2037 = vpop.f32.mrb[0].mxu0
        %2038 = vdwg.mxu0
        %v2039 = vadd.f32 %v1745, %v1913
        %v2040 = vadd.f32 %v1746, %v1916
        %v2041 = vadd.f32 %v1747, %v1921
        %v2042 = vadd.f32 %v1748, %v1924
        %v2043 = vadd.f32 %v1749, %v1929
        %v2044 = vadd.f32 %v1750, %v1932
        %v2045 = vadd.f32 %v1751, %v1937
        %v2046 = vadd.f32 %v1752, %v1940
        %v2047 = vadd.f32 %v1753, %v1945
        %v2048 = vadd.f32 %v1754, %v1948
        %v2049 = vadd.f32 %v1755, %v1953
        %v2050 = vadd.f32 %v1756, %v1956
        %v2051 = vadd.f32 %v1757, %v1961
        %v2052 = vadd.f32 %v1758, %v1964
        %v2053 = vadd.f32 %v1759, %v1969
        %v2054 = vadd.f32 %v1760, %v1972
        %v2055 = vadd.f32 %v1761, %v1977
        %v2056 = vadd.f32 %v1762, %v1980
        %v2057 = vadd.f32 %v1763, %v1985
        %v2058 = vadd.f32 %v1764, %v1988
        %v2059 = vadd.f32 %v1765, %v1993
        %v2060 = vadd.f32 %v1766, %v1996
        %v2061 = vadd.f32 %v1767, %v2001
        %v2062 = vadd.f32 %v1768, %v2004
        %v2063 = vadd.f32 %v1769, %v2009
        %v2064 = vadd.f32 %v1770, %v2012
        %v2065 = vadd.f32 %v1771, %v2017
        %v2066 = vadd.f32 %v1772, %v2020
        %v2067 = vadd.f32 %v1773, %v2025
        %v2068 = vadd.f32 %v1774, %v2028
        %v2069 = vadd.f32 %v1775, %v2033
        %v2070 = vadd.f32 %v1776, %v2036
        %s2071 = scalar_lea.vmem [#allocation2], 64
        %v2072 = vld [vmem:[%s2071 + $0x7] sm:$0xff]
        %v2073 = vld [vmem:[%s2071 + $0xf] sm:$0xff]
        %v2074 = vld [vmem:[%s2071 + $0x27] sm:$0xff]
        %v2075 = vld [vmem:[%s2071 + $0x2f] sm:$0xff]
        %v2076 = vld [vmem:[%s2071 + $0x47] sm:$0xff]
        %v2077 = vld [vmem:[%s2071 + $0x4f] sm:$0xff]
        %v2078 = vld [vmem:[%s2071 + $0x67] sm:$0xff]
        %v2079 = vld [vmem:[%s2071 + $0x6f] sm:$0xff]
        %v2080 = vld [vmem:[%s2071 + $0x87] sm:$0xff]
        %v2081 = vld [vmem:[%s2071 + $0x8f] sm:$0xff]
        %v2082 = vld [vmem:[%s2071 + $0xa7] sm:$0xff]
        %v2083 = vld [vmem:[%s2071 + $0xaf] sm:$0xff]
        %v2084 = vld [vmem:[%s2071 + $0xc7] sm:$0xff]
        %v2085 = vld [vmem:[%s2071 + $0xcf] sm:$0xff]
        %v2086 = vld [vmem:[%s2071 + $0xe7] sm:$0xff]
        %v2087 = vld [vmem:[%s2071 + $0xef] sm:$0xff]
        %v2088 = vld [vmem:[%s2071 + $0x107] sm:$0xff]
        %v2089 = vld [vmem:[%s2071 + $0x10f] sm:$0xff]
        %v2090 = vld [vmem:[%s2071 + $0x127] sm:$0xff]
        %v2091 = vld [vmem:[%s2071 + $0x12f] sm:$0xff]
        %v2092 = vld [vmem:[%s2071 + $0x147] sm:$0xff]
        %v2093 = vld [vmem:[%s2071 + $0x14f] sm:$0xff]
        %v2094 = vld [vmem:[%s2071 + $0x167] sm:$0xff]
        %v2095 = vld [vmem:[%s2071 + $0x16f] sm:$0xff]
        %v2096 = vld [vmem:[%s2071 + $0x187] sm:$0xff]
        %v2097 = vld [vmem:[%s2071 + $0x18f] sm:$0xff]
        %v2098 = vld [vmem:[%s2071 + $0x1a7] sm:$0xff]
        %v2099 = vld [vmem:[%s2071 + $0x1af] sm:$0xff]
        %v2100 = vld [vmem:[%s2071 + $0x1c7] sm:$0xff]
        %v2101 = vld [vmem:[%s2071 + $0x1cf] sm:$0xff]
        %v2102 = vld [vmem:[%s2071 + $0x1e7] sm:$0xff]
        %v2103 = vld [vmem:[%s2071 + $0x1ef] sm:$0xff]
        %v2104 = vpack.c.bf16 %v2073, %v2072
        %v2105 = vpack.c.bf16 %v2075, %v2074
        %v2106 = vpack.c.bf16 %v2077, %v2076
        %v2107 = vpack.c.bf16 %v2079, %v2078
        %v2108 = vpack.c.bf16 %v2081, %v2080
        %v2109 = vpack.c.bf16 %v2083, %v2082
        %v2110 = vpack.c.bf16 %v2085, %v2084
        %v2111 = vpack.c.bf16 %v2087, %v2086
        %v2112 = vpack.c.bf16 %v2089, %v2088
        %v2113 = vpack.c.bf16 %v2091, %v2090
        %v2114 = vpack.c.bf16 %v2093, %v2092
        %v2115 = vpack.c.bf16 %v2095, %v2094
        %v2116 = vpack.c.bf16 %v2097, %v2096
        %v2117 = vpack.c.bf16 %v2099, %v2098
        %v2118 = vpack.c.bf16 %v2101, %v2100
        %v2119 = vpack.c.bf16 %v2103, %v2102
        %s2120 = scalar_lea.vmem %s1, 12
        %v2121 = vld [vmem:[%s2120] sm:$0x3]
        %v2123 = vsel %vm197, %v2104, 0
        %v2126 = vsel %vm197, %v2105, 0
        %v2129 = vsel %vm197, %v2106, 0
        %v2132 = vsel %vm197, %v2107, 0
        %v2135 = vsel %vm197, %v2108, 0
        %v2138 = vsel %vm197, %v2109, 0
        %v2141 = vsel %vm197, %v2110, 0
        %v2144 = vsel %vm197, %v2111, 0
        %v2147 = vsel %vm197, %v2112, 0
        %v2150 = vsel %vm197, %v2113, 0
        %v2153 = vsel %vm197, %v2114, 0
        %v2156 = vsel %vm197, %v2115, 0
        %v2159 = vsel %vm197, %v2116, 0
        %v2162 = vsel %vm197, %v2117, 0
        %v2165 = vsel %vm197, %v2118, 0
        %v2168 = vsel %vm197, %v2119, 0
        %v2171 = vand.u32 %v2121, %v518
        %2173 = vmatprep.subr.bf16.mxu0 0
        %2174 = vmatpush1.bf16.msra.mxu0 %v2171
        %2175 = vmatprep.subr.bf16.mxu0 0
        %2176 = vmatpush1.bf16.msra.mxu0 0
        %2177 = vmatprep.subr.bf16.mxu0 0
        %2178 = vmatpush1.bf16.msra.mxu0 0
        %2179 = vmatprep.subr.bf16.mxu0 0
        %2180 = vmatpush1.bf16.msra.mxu0 0
        %2181 = vmatprep.subr.bf16.mxu0 0
        %2182 = vmatpush1.bf16.msra.mxu0 0
        %2183 = vmatprep.subr.bf16.mxu0 0
        %2184 = vmatpush1.bf16.msra.mxu0 0
        %2185 = vmatprep.subr.bf16.mxu0 0
        %2186 = vmatpush1.bf16.msra.mxu0 0
        %2187 = vmatprep.subr.bf16.mxu0 0
        %2188 = vmatpush1.bf16.msra.mxu0 0
        %2189 = vmatprep.subr.bf16.mxu0 0
        %2190 = vmatpush1.bf16.msra.mxu0 0
        %2191 = vmatprep.subr.bf16.mxu0 0
        %2192 = vmatpush1.bf16.msra.mxu0 0
        %2193 = vmatprep.subr.bf16.mxu0 0
        %2194 = vmatpush1.bf16.msra.mxu0 0
        %2195 = vmatprep.subr.bf16.mxu0 0
        %2196 = vmatpush1.bf16.msra.mxu0 0
        %2197 = vmatprep.subr.bf16.mxu0 0
        %2198 = vmatpush1.bf16.msra.mxu0 0
        %2199 = vmatprep.subr.bf16.mxu0 0
        %2200 = vmatpush1.bf16.msra.mxu0 0
        %2201 = vmatprep.subr.bf16.mxu0 0
        %2202 = vmatpush1.bf16.msra.mxu0 0
        %2203 = vmatprep.subr.bf16.mxu0 0
        %2204 = vmatpush1.bf16.msra.mxu0 0
        %2205 = vmatprep.mubr.bf16.mxu0 0
        %2206 = vmatmul.mubr.bf16.gmra.mrb[0].mxu0 %v2123
        %v2207 = vpop.f32.mrb[0].mxu0
        %v2208 = vadd.f32 0.0, %v2207
        %v2209 = vpop.f32.mrb[0].mxu0
        %v2210 = vpop.f32.mrb[0].mxu0
        %v2211 = vadd.f32 0.0, %v2210
        %v2212 = vpop.f32.mrb[0].mxu0
        %2213 = vmatprep.mubr.bf16.mxu0 0
        %2214 = vmatmul.mubr.bf16.gmra.mrb[0].mxu0 %v2126
        %v2215 = vpop.f32.mrb[0].mxu0
        %v2216 = vadd.f32 0.0, %v2215
        %v2217 = vpop.f32.mrb[0].mxu0
        %v2218 = vpop.f32.mrb[0].mxu0
        %v2219 = vadd.f32 0.0, %v2218
        %v2220 = vpop.f32.mrb[0].mxu0
        %2221 = vmatprep.mubr.bf16.mxu0 0
        %2222 = vmatmul.mubr.bf16.gmra.mrb[0].mxu0 %v2129
        %v2223 = vpop.f32.mrb[0].mxu0
        %v2224 = vadd.f32 0.0, %v2223
        %v2225 = vpop.f32.mrb[0].mxu0
        %v2226 = vpop.f32.mrb[0].mxu0
        %v2227 = vadd.f32 0.0, %v2226
        %v2228 = vpop.f32.mrb[0].mxu0
        %2229 = vmatprep.mubr.bf16.mxu0 0
        %2230 = vmatmul.mubr.bf16.gmra.mrb[0].mxu0 %v2132
        %v2231 = vpop.f32.mrb[0].mxu0
        %v2232 = vadd.f32 0.0, %v2231
        %v2233 = vpop.f32.mrb[0].mxu0
        %v2234 = vpop.f32.mrb[0].mxu0
        %v2235 = vadd.f32 0.0, %v2234
        %v2236 = vpop.f32.mrb[0].mxu0
        %2237 = vmatprep.mubr.bf16.mxu0 0
        %2238 = vmatmul.mubr.bf16.gmra.mrb[0].mxu0 %v2135
        %v2239 = vpop.f32.mrb[0].mxu0
        %v2240 = vadd.f32 0.0, %v2239
        %v2241 = vpop.f32.mrb[0].mxu0
        %v2242 = vpop.f32.mrb[0].mxu0
        %v2243 = vadd.f32 0.0, %v2242
        %v2244 = vpop.f32.mrb[0].mxu0
        %2245 = vmatprep.mubr.bf16.mxu0 0
        %2246 = vmatmul.mubr.bf16.gmra.mrb[0].mxu0 %v2138
        %v2247 = vpop.f32.mrb[0].mxu0
        %v2248 = vadd.f32 0.0, %v2247
        %v2249 = vpop.f32.mrb[0].mxu0
        %v2250 = vpop.f32.mrb[0].mxu0
        %v2251 = vadd.f32 0.0, %v2250
        %v2252 = vpop.f32.mrb[0].mxu0
        %2253 = vmatprep.mubr.bf16.mxu0 0
        %2254 = vmatmul.mubr.bf16.gmra.mrb[0].mxu0 %v2141
        %v2255 = vpop.f32.mrb[0].mxu0
        %v2256 = vadd.f32 0.0, %v2255
        %v2257 = vpop.f32.mrb[0].mxu0
        %v2258 = vpop.f32.mrb[0].mxu0
        %v2259 = vadd.f32 0.0, %v2258
        %v2260 = vpop.f32.mrb[0].mxu0
        %2261 = vmatprep.mubr.bf16.mxu0 0
        %2262 = vmatmul.mubr.bf16.gmra.mrb[0].mxu0 %v2144
        %v2263 = vpop.f32.mrb[0].mxu0
        %v2264 = vadd.f32 0.0, %v2263
        %v2265 = vpop.f32.mrb[0].mxu0
        %v2266 = vpop.f32.mrb[0].mxu0
        %v2267 = vadd.f32 0.0, %v2266
        %v2268 = vpop.f32.mrb[0].mxu0
        %2269 = vmatprep.mubr.bf16.mxu0 0
        %2270 = vmatmul.mubr.bf16.gmra.mrb[0].mxu0 %v2147
        %v2271 = vpop.f32.mrb[0].mxu0
        %v2272 = vadd.f32 0.0, %v2271
        %v2273 = vpop.f32.mrb[0].mxu0
        %v2274 = vpop.f32.mrb[0].mxu0
        %v2275 = vadd.f32 0.0, %v2274
        %v2276 = vpop.f32.mrb[0].mxu0
        %2277 = vmatprep.mubr.bf16.mxu0 0
        %2278 = vmatmul.mubr.bf16.gmra.mrb[0].mxu0 %v2150
        %v2279 = vpop.f32.mrb[0].mxu0
        %v2280 = vadd.f32 0.0, %v2279
        %v2281 = vpop.f32.mrb[0].mxu0
        %v2282 = vpop.f32.mrb[0].mxu0
        %v2283 = vadd.f32 0.0, %v2282
        %v2284 = vpop.f32.mrb[0].mxu0
        %2285 = vmatprep.mubr.bf16.mxu0 0
        %2286 = vmatmul.mubr.bf16.gmra.mrb[0].mxu0 %v2153
        %v2287 = vpop.f32.mrb[0].mxu0
        %v2288 = vadd.f32 0.0, %v2287
        %v2289 = vpop.f32.mrb[0].mxu0
        %v2290 = vpop.f32.mrb[0].mxu0
        %v2291 = vadd.f32 0.0, %v2290
        %v2292 = vpop.f32.mrb[0].mxu0
        %2293 = vmatprep.mubr.bf16.mxu0 0
        %2294 = vmatmul.mubr.bf16.gmra.mrb[0].mxu0 %v2156
        %v2295 = vpop.f32.mrb[0].mxu0
        %v2296 = vadd.f32 0.0, %v2295
        %v2297 = vpop.f32.mrb[0].mxu0
        %v2298 = vpop.f32.mrb[0].mxu0
        %v2299 = vadd.f32 0.0, %v2298
        %v2300 = vpop.f32.mrb[0].mxu0
        %2301 = vmatprep.mubr.bf16.mxu0 0
        %2302 = vmatmul.mubr.bf16.gmra.mrb[0].mxu0 %v2159
        %v2303 = vpop.f32.mrb[0].mxu0
        %v2304 = vadd.f32 0.0, %v2303
        %v2305 = vpop.f32.mrb[0].mxu0
        %v2306 = vpop.f32.mrb[0].mxu0
        %v2307 = vadd.f32 0.0, %v2306
        %v2308 = vpop.f32.mrb[0].mxu0
        %2309 = vmatprep.mubr.bf16.mxu0 0
        %2310 = vmatmul.mubr.bf16.gmra.mrb[0].mxu0 %v2162
        %v2311 = vpop.f32.mrb[0].mxu0
        %v2312 = vadd.f32 0.0, %v2311
        %v2313 = vpop.f32.mrb[0].mxu0
        %v2314 = vpop.f32.mrb[0].mxu0
        %v2315 = vadd.f32 0.0, %v2314
        %v2316 = vpop.f32.mrb[0].mxu0
        %2317 = vmatprep.mubr.bf16.mxu0 0
        %2318 = vmatmul.mubr.bf16.gmra.mrb[0].mxu0 %v2165
        %v2319 = vpop.f32.mrb[0].mxu0
        %v2320 = vadd.f32 0.0, %v2319
        %v2321 = vpop.f32.mrb[0].mxu0
        %v2322 = vpop.f32.mrb[0].mxu0
        %v2323 = vadd.f32 0.0, %v2322
        %v2324 = vpop.f32.mrb[0].mxu0
        %2325 = vmatprep.mubr.bf16.mxu0 0
        %2326 = vmatmul.mubr.bf16.gmra.mrb[0].mxu0 %v2168
        %v2327 = vpop.f32.mrb[0].mxu0
        %v2328 = vadd.f32 0.0, %v2327
        %v2329 = vpop.f32.mrb[0].mxu0
        %v2330 = vpop.f32.mrb[0].mxu0
        %v2331 = vadd.f32 0.0, %v2330
        %v2332 = vpop.f32.mrb[0].mxu0
        %2333 = vdwg.mxu0
        %v2334 = vadd.f32 %v2039, %v2208
        %v2335 = vadd.f32 %v2040, %v2211
        %v2336 = vadd.f32 %v2041, %v2216
        %v2337 = vadd.f32 %v2042, %v2219
        %v2338 = vadd.f32 %v2043, %v2224
        %v2339 = vadd.f32 %v2044, %v2227
        %v2340 = vadd.f32 %v2045, %v2232
        %v2341 = vadd.f32 %v2046, %v2235
        %v2342 = vadd.f32 %v2047, %v2240
        %v2343 = vadd.f32 %v2048, %v2243
        %v2344 = vadd.f32 %v2049, %v2248
        %v2345 = vadd.f32 %v2050, %v2251
        %v2346 = vadd.f32 %v2051, %v2256
        %v2347 = vadd.f32 %v2052, %v2259
        %v2348 = vadd.f32 %v2053, %v2264
        %v2349 = vadd.f32 %v2054, %v2267
        %v2350 = vadd.f32 %v2055, %v2272
        %v2351 = vadd.f32 %v2056, %v2275
        %v2352 = vadd.f32 %v2057, %v2280
        %v2353 = vadd.f32 %v2058, %v2283
        %v2354 = vadd.f32 %v2059, %v2288
        %v2355 = vadd.f32 %v2060, %v2291
        %v2356 = vadd.f32 %v2061, %v2296
        %v2357 = vadd.f32 %v2062, %v2299
        %v2358 = vadd.f32 %v2063, %v2304
        %v2359 = vadd.f32 %v2064, %v2307
        %v2360 = vadd.f32 %v2065, %v2312
        %v2361 = vadd.f32 %v2066, %v2315
        %v2362 = vadd.f32 %v2067, %v2320
        %v2363 = vadd.f32 %v2068, %v2323
        %v2364 = vadd.f32 %v2069, %v2328
        %v2365 = vadd.f32 %v2070, %v2331
        %v2366 = vld [vmem:[%s2071 + $0x8] sm:$0xff]
        %v2367 = vld [vmem:[%s2071 + $0x10] sm:$0xff]
        %v2368 = vld [vmem:[%s2071 + $0x28] sm:$0xff]
        %v2369 = vld [vmem:[%s2071 + $0x30] sm:$0xff]
        %v2370 = vld [vmem:[%s2071 + $0x48] sm:$0xff]
        %v2371 = vld [vmem:[%s2071 + $0x50] sm:$0xff]
        %v2372 = vld [vmem:[%s2071 + $0x68] sm:$0xff]
        %v2373 = vld [vmem:[%s2071 + $0x70] sm:$0xff]
        %v2374 = vld [vmem:[%s2071 + $0x88] sm:$0xff]
        %v2375 = vld [vmem:[%s2071 + $0x90] sm:$0xff]
        %v2376 = vld [vmem:[%s2071 + $0xa8] sm:$0xff]
        %v2377 = vld [vmem:[%s2071 + $0xb0] sm:$0xff]
        %v2378 = vld [vmem:[%s2071 + $0xc8] sm:$0xff]
        %v2379 = vld [vmem:[%s2071 + $0xd0] sm:$0xff]
        %v2380 = vld [vmem:[%s2071 + $0xe8] sm:$0xff]
        %v2381 = vld [vmem:[%s2071 + $0xf0] sm:$0xff]
        %v2382 = vld [vmem:[%s2071 + $0x108] sm:$0xff]
        %v2383 = vld [vmem:[%s2071 + $0x110] sm:$0xff]
        %v2384 = vld [vmem:[%s2071 + $0x128] sm:$0xff]
        %v2385 = vld [vmem:[%s2071 + $0x130] sm:$0xff]
        %v2386 = vld [vmem:[%s2071 + $0x148] sm:$0xff]
        %v2387 = vld [vmem:[%s2071 + $0x150] sm:$0xff]
        %v2388 = vld [vmem:[%s2071 + $0x168] sm:$0xff]
        %v2389 = vld [vmem:[%s2071 + $0x170] sm:$0xff]
        %v2390 = vld [vmem:[%s2071 + $0x188] sm:$0xff]
        %v2391 = vld [vmem:[%s2071 + $0x190] sm:$0xff]
        %v2392 = vld [vmem:[%s2071 + $0x1a8] sm:$0xff]
        %v2393 = vld [vmem:[%s2071 + $0x1b0] sm:$0xff]
        %v2394 = vld [vmem:[%s2071 + $0x1c8] sm:$0xff]
        %v2395 = vld [vmem:[%s2071 + $0x1d0] sm:$0xff]
        %v2396 = vld [vmem:[%s2071 + $0x1e8] sm:$0xff]
        %v2397 = vld [vmem:[%s2071 + $0x1f0] sm:$0xff]
        %v2398 = vpack.c.bf16 %v2367, %v2366
        %v2399 = vpack.c.bf16 %v2369, %v2368
        %v2400 = vpack.c.bf16 %v2371, %v2370
        %v2401 = vpack.c.bf16 %v2373, %v2372
        %v2402 = vpack.c.bf16 %v2375, %v2374
        %v2403 = vpack.c.bf16 %v2377, %v2376
        %v2404 = vpack.c.bf16 %v2379, %v2378
        %v2405 = vpack.c.bf16 %v2381, %v2380
        %v2406 = vpack.c.bf16 %v2383, %v2382
        %v2407 = vpack.c.bf16 %v2385, %v2384
        %v2408 = vpack.c.bf16 %v2387, %v2386
        %v2409 = vpack.c.bf16 %v2389, %v2388
        %v2410 = vpack.c.bf16 %v2391, %v2390
        %v2411 = vpack.c.bf16 %v2393, %v2392
        %v2412 = vpack.c.bf16 %v2395, %v2394
        %v2413 = vpack.c.bf16 %v2397, %v2396
        %s2414 = scalar_lea.vmem %s1, 14
        %v2415 = vld [vmem:[%s2414] sm:$0x3]
        %v2417 = vsel %vm197, %v2398, 0
        %v2420 = vsel %vm197, %v2399, 0
        %v2423 = vsel %vm197, %v2400, 0
        %v2426 = vsel %vm197, %v2401, 0
        %v2429 = vsel %vm197, %v2402, 0
        %v2432 = vsel %vm197, %v2403, 0
        %v2435 = vsel %vm197, %v2404, 0
        %v2438 = vsel %vm197, %v2405, 0
        %v2441 = vsel %vm197, %v2406, 0
        %v2444 = vsel %vm197, %v2407, 0
        %v2447 = vsel %vm197, %v2408, 0
        %v2450 = vsel %vm197, %v2409, 0
        %v2453 = vsel %vm197, %v2410, 0
        %v2456 = vsel %vm197, %v2411, 0
        %v2459 = vsel %vm197, %v2412, 0
        %v2462 = vsel %vm197, %v2413, 0
        %v2465 = vand.u32 %v2415, %v518
        %2467 = vmatprep.subr.bf16.mxu0 0
        %2468 = vmatpush1.bf16.msra.mxu0 %v2465
        %2469 = vmatprep.subr.bf16.mxu0 0
        %2470 = vmatpush1.bf16.msra.mxu0 0
        %2471 = vmatprep.subr.bf16.mxu0 0
        %2472 = vmatpush1.bf16.msra.mxu0 0
        %2473 = vmatprep.subr.bf16.mxu0 0
        %2474 = vmatpush1.bf16.msra.mxu0 0
        %2475 = vmatprep.subr.bf16.mxu0 0
        %2476 = vmatpush1.bf16.msra.mxu0 0
        %2477 = vmatprep.subr.bf16.mxu0 0
        %2478 = vmatpush1.bf16.msra.mxu0 0
        %2479 = vmatprep.subr.bf16.mxu0 0
        %2480 = vmatpush1.bf16.msra.mxu0 0
        %2481 = vmatprep.subr.bf16.mxu0 0
        %2482 = vmatpush1.bf16.msra.mxu0 0
        %2483 = vmatprep.subr.bf16.mxu0 0
        %2484 = vmatpush1.bf16.msra.mxu0 0
        %2485 = vmatprep.subr.bf16.mxu0 0
        %2486 = vmatpush1.bf16.msra.mxu0 0
        %2487 = vmatprep.subr.bf16.mxu0 0
        %2488 = vmatpush1.bf16.msra.mxu0 0
        %2489 = vmatprep.subr.bf16.mxu0 0
        %2490 = vmatpush1.bf16.msra.mxu0 0
        %2491 = vmatprep.subr.bf16.mxu0 0
        %2492 = vmatpush1.bf16.msra.mxu0 0
        %2493 = vmatprep.subr.bf16.mxu0 0
        %2494 = vmatpush1.bf16.msra.mxu0 0
        %2495 = vmatprep.subr.bf16.mxu0 0
        %2496 = vmatpush1.bf16.msra.mxu0 0
        %2497 = vmatprep.subr.bf16.mxu0 0
        %2498 = vmatpush1.bf16.msra.mxu0 0
        %2499 = vmatprep.mubr.bf16.mxu0 0
        %2500 = vmatmul.mubr.bf16.gmra.mrb[0].mxu0 %v2417
        %v2501 = vpop.f32.mrb[0].mxu0
        %v2502 = vadd.f32 0.0, %v2501
        %v2503 = vpop.f32.mrb[0].mxu0
        %v2504 = vpop.f32.mrb[0].mxu0
        %v2505 = vadd.f32 0.0, %v2504
        %v2506 = vpop.f32.mrb[0].mxu0
        %2507 = vmatprep.mubr.bf16.mxu0 0
        %2508 = vmatmul.mubr.bf16.gmra.mrb[0].mxu0 %v2420
        %v2509 = vpop.f32.mrb[0].mxu0
        %v2510 = vadd.f32 0.0, %v2509
        %v2511 = vpop.f32.mrb[0].mxu0
        %v2512 = vpop.f32.mrb[0].mxu0
        %v2513 = vadd.f32 0.0, %v2512
        %v2514 = vpop.f32.mrb[0].mxu0
        %2515 = vmatprep.mubr.bf16.mxu0 0
        %2516 = vmatmul.mubr.bf16.gmra.mrb[0].mxu0 %v2423
        %v2517 = vpop.f32.mrb[0].mxu0
        %v2518 = vadd.f32 0.0, %v2517
        %v2519 = vpop.f32.mrb[0].mxu0
        %v2520 = vpop.f32.mrb[0].mxu0
        %v2521 = vadd.f32 0.0, %v2520
        %v2522 = vpop.f32.mrb[0].mxu0
        %2523 = vmatprep.mubr.bf16.mxu0 0
        %2524 = vmatmul.mubr.bf16.gmra.mrb[0].mxu0 %v2426
        %v2525 = vpop.f32.mrb[0].mxu0
        %v2526 = vadd.f32 0.0, %v2525
        %v2527 = vpop.f32.mrb[0].mxu0
        %v2528 = vpop.f32.mrb[0].mxu0
        %v2529 = vadd.f32 0.0, %v2528
        %v2530 = vpop.f32.mrb[0].mxu0
        %2531 = vmatprep.mubr.bf16.mxu0 0
        %2532 = vmatmul.mubr.bf16.gmra.mrb[0].mxu0 %v2429
        %v2533 = vpop.f32.mrb[0].mxu0
        %v2534 = vadd.f32 0.0, %v2533
        %v2535 = vpop.f32.mrb[0].mxu0
        %v2536 = vpop.f32.mrb[0].mxu0
        %v2537 = vadd.f32 0.0, %v2536
        %v2538 = vpop.f32.mrb[0].mxu0
        %2539 = vmatprep.mubr.bf16.mxu0 0
        %2540 = vmatmul.mubr.bf16.gmra.mrb[0].mxu0 %v2432
        %v2541 = vpop.f32.mrb[0].mxu0
        %v2542 = vadd.f32 0.0, %v2541
        %v2543 = vpop.f32.mrb[0].mxu0
        %v2544 = vpop.f32.mrb[0].mxu0
        %v2545 = vadd.f32 0.0, %v2544
        %v2546 = vpop.f32.mrb[0].mxu0
        %2547 = vmatprep.mubr.bf16.mxu0 0
        %2548 = vmatmul.mubr.bf16.gmra.mrb[0].mxu0 %v2435
        %v2549 = vpop.f32.mrb[0].mxu0
        %v2550 = vadd.f32 0.0, %v2549
        %v2551 = vpop.f32.mrb[0].mxu0
        %v2552 = vpop.f32.mrb[0].mxu0
        %v2553 = vadd.f32 0.0, %v2552
        %v2554 = vpop.f32.mrb[0].mxu0
        %2555 = vmatprep.mubr.bf16.mxu0 0
        %2556 = vmatmul.mubr.bf16.gmra.mrb[0].mxu0 %v2438
        %v2557 = vpop.f32.mrb[0].mxu0
        %v2558 = vadd.f32 0.0, %v2557
        %v2559 = vpop.f32.mrb[0].mxu0
        %v2560 = vpop.f32.mrb[0].mxu0
        %v2561 = vadd.f32 0.0, %v2560
        %v2562 = vpop.f32.mrb[0].mxu0
        %2563 = vmatprep.mubr.bf16.mxu0 0
        %2564 = vmatmul.mubr.bf16.gmra.mrb[0].mxu0 %v2441
        %v2565 = vpop.f32.mrb[0].mxu0
        %v2566 = vadd.f32 0.0, %v2565
        %v2567 = vpop.f32.mrb[0].mxu0
        %v2568 = vpop.f32.mrb[0].mxu0
        %v2569 = vadd.f32 0.0, %v2568
        %v2570 = vpop.f32.mrb[0].mxu0
        %2571 = vmatprep.mubr.bf16.mxu0 0
        %2572 = vmatmul.mubr.bf16.gmra.mrb[0].mxu0 %v2444
        %v2573 = vpop.f32.mrb[0].mxu0
        %v2574 = vadd.f32 0.0, %v2573
        %v2575 = vpop.f32.mrb[0].mxu0
        %v2576 = vpop.f32.mrb[0].mxu0
        %v2577 = vadd.f32 0.0, %v2576
        %v2578 = vpop.f32.mrb[0].mxu0
        %2579 = vmatprep.mubr.bf16.mxu0 0
        %2580 = vmatmul.mubr.bf16.gmra.mrb[0].mxu0 %v2447
        %v2581 = vpop.f32.mrb[0].mxu0
        %v2582 = vadd.f32 0.0, %v2581
        %v2583 = vpop.f32.mrb[0].mxu0
        %v2584 = vpop.f32.mrb[0].mxu0
        %v2585 = vadd.f32 0.0, %v2584
        %v2586 = vpop.f32.mrb[0].mxu0
        %2587 = vmatprep.mubr.bf16.mxu0 0
        %2588 = vmatmul.mubr.bf16.gmra.mrb[0].mxu0 %v2450
        %v2589 = vpop.f32.mrb[0].mxu0
        %v2590 = vadd.f32 0.0, %v2589
        %v2591 = vpop.f32.mrb[0].mxu0
        %v2592 = vpop.f32.mrb[0].mxu0
        %v2593 = vadd.f32 0.0, %v2592
        %v2594 = vpop.f32.mrb[0].mxu0
        %2595 = vmatprep.mubr.bf16.mxu0 0
        %2596 = vmatmul.mubr.bf16.gmra.mrb[0].mxu0 %v2453
        %v2597 = vpop.f32.mrb[0].mxu0
        %v2598 = vadd.f32 0.0, %v2597
        %v2599 = vpop.f32.mrb[0].mxu0
        %v2600 = vpop.f32.mrb[0].mxu0
        %v2601 = vadd.f32 0.0, %v2600
        %v2602 = vpop.f32.mrb[0].mxu0
        %2603 = vmatprep.mubr.bf16.mxu0 0
        %2604 = vmatmul.mubr.bf16.gmra.mrb[0].mxu0 %v2456
        %v2605 = vpop.f32.mrb[0].mxu0
        %v2606 = vadd.f32 0.0, %v2605
        %v2607 = vpop.f32.mrb[0].mxu0
        %v2608 = vpop.f32.mrb[0].mxu0
        %v2609 = vadd.f32 0.0, %v2608
        %v2610 = vpop.f32.mrb[0].mxu0
        %2611 = vmatprep.mubr.bf16.mxu0 0
        %2612 = vmatmul.mubr.bf16.gmra.mrb[0].mxu0 %v2459
        %v2613 = vpop.f32.mrb[0].mxu0
        %v2614 = vadd.f32 0.0, %v2613
        %v2615 = vpop.f32.mrb[0].mxu0
        %v2616 = vpop.f32.mrb[0].mxu0
        %v2617 = vadd.f32 0.0, %v2616
        %v2618 = vpop.f32.mrb[0].mxu0
        %2619 = vmatprep.mubr.bf16.mxu0 0
        %2620 = vmatmul.mubr.bf16.gmra.mrb[0].mxu0 %v2462
        %v2621 = vpop.f32.mrb[0].mxu0
        %v2622 = vadd.f32 0.0, %v2621
        %v2623 = vpop.f32.mrb[0].mxu0
        %v2624 = vpop.f32.mrb[0].mxu0
        %v2625 = vadd.f32 0.0, %v2624
        %v2626 = vpop.f32.mrb[0].mxu0
        %2627 = vdwg.mxu0
        %v2628 = vadd.f32 %v2334, %v2502
        %v2629 = vadd.f32 %v2335, %v2505
        %v2630 = vadd.f32 %v2336, %v2510
        %v2631 = vadd.f32 %v2337, %v2513
        %v2632 = vadd.f32 %v2338, %v2518
        %v2633 = vadd.f32 %v2339, %v2521
        %v2634 = vadd.f32 %v2340, %v2526
        %v2635 = vadd.f32 %v2341, %v2529
        %v2636 = vadd.f32 %v2342, %v2534
        %v2637 = vadd.f32 %v2343, %v2537
        %v2638 = vadd.f32 %v2344, %v2542
        %v2639 = vadd.f32 %v2345, %v2545
        %v2640 = vadd.f32 %v2346, %v2550
        %v2641 = vadd.f32 %v2347, %v2553
        %v2642 = vadd.f32 %v2348, %v2558
        %v2643 = vadd.f32 %v2349, %v2561
        %v2644 = vadd.f32 %v2350, %v2566
        %v2645 = vadd.f32 %v2351, %v2569
        %v2646 = vadd.f32 %v2352, %v2574
        %v2647 = vadd.f32 %v2353, %v2577
        %v2648 = vadd.f32 %v2354, %v2582
        %v2649 = vadd.f32 %v2355, %v2585
        %v2650 = vadd.f32 %v2356, %v2590
        %v2651 = vadd.f32 %v2357, %v2593
        %v2652 = vadd.f32 %v2358, %v2598
        %v2653 = vadd.f32 %v2359, %v2601
        %v2654 = vadd.f32 %v2360, %v2606
        %v2655 = vadd.f32 %v2361, %v2609
        %v2656 = vadd.f32 %v2362, %v2614
        %v2657 = vadd.f32 %v2363, %v2617
        %v2658 = vadd.f32 %v2364, %v2622
        %v2659 = vadd.f32 %v2365, %v2625
        %v2660 = vld [vmem:[%s2071 + $0x9] sm:$0xff]
        %v2661 = vld [vmem:[%s2071 + $0x11] sm:$0xff]
        %v2662 = vld [vmem:[%s2071 + $0x29] sm:$0xff]
        %v2663 = vld [vmem:[%s2071 + $0x31] sm:$0xff]
        %v2664 = vld [vmem:[%s2071 + $0x49] sm:$0xff]
        %v2665 = vld [vmem:[%s2071 + $0x51] sm:$0xff]
        %v2666 = vld [vmem:[%s2071 + $0x69] sm:$0xff]
        %v2667 = vld [vmem:[%s2071 + $0x71] sm:$0xff]
        %v2668 = vld [vmem:[%s2071 + $0x89] sm:$0xff]
        %v2669 = vld [vmem:[%s2071 + $0x91] sm:$0xff]
        %v2670 = vld [vmem:[%s2071 + $0xa9] sm:$0xff]
        %v2671 = vld [vmem:[%s2071 + $0xb1] sm:$0xff]
        %v2672 = vld [vmem:[%s2071 + $0xc9] sm:$0xff]
        %v2673 = vld [vmem:[%s2071 + $0xd1] sm:$0xff]
        %v2674 = vld [vmem:[%s2071 + $0xe9] sm:$0xff]
        %v2675 = vld [vmem:[%s2071 + $0xf1] sm:$0xff]
        %v2676 = vld [vmem:[%s2071 + $0x109] sm:$0xff]
        %v2677 = vld [vmem:[%s2071 + $0x111] sm:$0xff]
        %v2678 = vld [vmem:[%s2071 + $0x129] sm:$0xff]
        %v2679 = vld [vmem:[%s2071 + $0x131] sm:$0xff]
        %v2680 = vld [vmem:[%s2071 + $0x149] sm:$0xff]
        %v2681 = vld [vmem:[%s2071 + $0x151] sm:$0xff]
        %v2682 = vld [vmem:[%s2071 + $0x169] sm:$0xff]
        %v2683 = vld [vmem:[%s2071 + $0x171] sm:$0xff]
        %v2684 = vld [vmem:[%s2071 + $0x189] sm:$0xff]
        %v2685 = vld [vmem:[%s2071 + $0x191] sm:$0xff]
        %v2686 = vld [vmem:[%s2071 + $0x1a9] sm:$0xff]
        %v2687 = vld [vmem:[%s2071 + $0x1b1] sm:$0xff]
        %v2688 = vld [vmem:[%s2071 + $0x1c9] sm:$0xff]
        %v2689 = vld [vmem:[%s2071 + $0x1d1] sm:$0xff]
        %v2690 = vld [vmem:[%s2071 + $0x1e9] sm:$0xff]
        %v2691 = vld [vmem:[%s2071 + $0x1f1] sm:$0xff]
        %v2692 = vpack.c.bf16 %v2661, %v2660
        %v2693 = vpack.c.bf16 %v2663, %v2662
        %v2694 = vpack.c.bf16 %v2665, %v2664
        %v2695 = vpack.c.bf16 %v2667, %v2666
        %v2696 = vpack.c.bf16 %v2669, %v2668
        %v2697 = vpack.c.bf16 %v2671, %v2670
        %v2698 = vpack.c.bf16 %v2673, %v2672
        %v2699 = vpack.c.bf16 %v2675, %v2674
        %v2700 = vpack.c.bf16 %v2677, %v2676
        %v2701 = vpack.c.bf16 %v2679, %v2678
        %v2702 = vpack.c.bf16 %v2681, %v2680
        %v2703 = vpack.c.bf16 %v2683, %v2682
        %v2704 = vpack.c.bf16 %v2685, %v2684
        %v2705 = vpack.c.bf16 %v2687, %v2686
        %v2706 = vpack.c.bf16 %v2689, %v2688
        %v2707 = vpack.c.bf16 %v2691, %v2690
        %s2708 = scalar_lea.vmem %s1, 16
        %v2709 = vld [vmem:[%s2708] sm:$0x3]
        %v2711 = vsel %vm197, %v2692, 0
        %v2714 = vsel %vm197, %v2693, 0
        %v2717 = vsel %vm197, %v2694, 0
        %v2720 = vsel %vm197, %v2695, 0
        %v2723 = vsel %vm197, %v2696, 0
        %v2726 = vsel %vm197, %v2697, 0
        %v2729 = vsel %vm197, %v2698, 0
        %v2732 = vsel %vm197, %v2699, 0
        %v2735 = vsel %vm197, %v2700, 0
        %v2738 = vsel %vm197, %v2701, 0
        %v2741 = vsel %vm197, %v2702, 0
        %v2744 = vsel %vm197, %v2703, 0
        %v2747 = vsel %vm197, %v2704, 0
        %v2750 = vsel %vm197, %v2705, 0
        %v2753 = vsel %vm197, %v2706, 0
        %v2756 = vsel %vm197, %v2707, 0
        %v2759 = vand.u32 %v2709, %v518
        %2761 = vmatprep.subr.bf16.mxu0 0
        %2762 = vmatpush1.bf16.msra.mxu0 %v2759
        %2763 = vmatprep.subr.bf16.mxu0 0
        %2764 = vmatpush1.bf16.msra.mxu0 0
        %2765 = vmatprep.subr.bf16.mxu0 0
        %2766 = vmatpush1.bf16.msra.mxu0 0
        %2767 = vmatprep.subr.bf16.mxu0 0
        %2768 = vmatpush1.bf16.msra.mxu0 0
        %2769 = vmatprep.subr.bf16.mxu0 0
        %2770 = vmatpush1.bf16.msra.mxu0 0
        %2771 = vmatprep.subr.bf16.mxu0 0
        %2772 = vmatpush1.bf16.msra.mxu0 0
        %2773 = vmatprep.subr.bf16.mxu0 0
        %2774 = vmatpush1.bf16.msra.mxu0 0
        %2775 = vmatprep.subr.bf16.mxu0 0
        %2776 = vmatpush1.bf16.msra.mxu0 0
        %2777 = vmatprep.subr.bf16.mxu0 0
        %2778 = vmatpush1.bf16.msra.mxu0 0
        %2779 = vmatprep.subr.bf16.mxu0 0
        %2780 = vmatpush1.bf16.msra.mxu0 0
        %2781 = vmatprep.subr.bf16.mxu0 0
        %2782 = vmatpush1.bf16.msra.mxu0 0
        %2783 = vmatprep.subr.bf16.mxu0 0
        %2784 = vmatpush1.bf16.msra.mxu0 0
        %2785 = vmatprep.subr.bf16.mxu0 0
        %2786 = vmatpush1.bf16.msra.mxu0 0
        %2787 = vmatprep.subr.bf16.mxu0 0
        %2788 = vmatpush1.bf16.msra.mxu0 0
        %2789 = vmatprep.subr.bf16.mxu0 0
        %2790 = vmatpush1.bf16.msra.mxu0 0
        %2791 = vmatprep.subr.bf16.mxu0 0
        %2792 = vmatpush1.bf16.msra.mxu0 0
        %2793 = vmatprep.mubr.bf16.mxu0 0
        %2794 = vmatmul.mubr.bf16.gmra.mrb[0].mxu0 %v2711
        %v2795 = vpop.f32.mrb[0].mxu0
        %v2796 = vadd.f32 0.0, %v2795
        %v2797 = vpop.f32.mrb[0].mxu0
        %v2798 = vpop.f32.mrb[0].mxu0
        %v2799 = vadd.f32 0.0, %v2798
        %v2800 = vpop.f32.mrb[0].mxu0
        %2801 = vmatprep.mubr.bf16.mxu0 0
        %2802 = vmatmul.mubr.bf16.gmra.mrb[0].mxu0 %v2714
        %v2803 = vpop.f32.mrb[0].mxu0
        %v2804 = vadd.f32 0.0, %v2803
        %v2805 = vpop.f32.mrb[0].mxu0
        %v2806 = vpop.f32.mrb[0].mxu0
        %v2807 = vadd.f32 0.0, %v2806
        %v2808 = vpop.f32.mrb[0].mxu0
        %2809 = vmatprep.mubr.bf16.mxu0 0
        %2810 = vmatmul.mubr.bf16.gmra.mrb[0].mxu0 %v2717
        %v2811 = vpop.f32.mrb[0].mxu0
        %v2812 = vadd.f32 0.0, %v2811
        %v2813 = vpop.f32.mrb[0].mxu0
        %v2814 = vpop.f32.mrb[0].mxu0
        %v2815 = vadd.f32 0.0, %v2814
        %v2816 = vpop.f32.mrb[0].mxu0
        %2817 = vmatprep.mubr.bf16.mxu0 0
        %2818 = vmatmul.mubr.bf16.gmra.mrb[0].mxu0 %v2720
        %v2819 = vpop.f32.mrb[0].mxu0
        %v2820 = vadd.f32 0.0, %v2819
        %v2821 = vpop.f32.mrb[0].mxu0
        %v2822 = vpop.f32.mrb[0].mxu0
        %v2823 = vadd.f32 0.0, %v2822
        %v2824 = vpop.f32.mrb[0].mxu0
        %2825 = vmatprep.mubr.bf16.mxu0 0
        %2826 = vmatmul.mubr.bf16.gmra.mrb[0].mxu0 %v2723
        %v2827 = vpop.f32.mrb[0].mxu0
        %v2828 = vadd.f32 0.0, %v2827
        %v2829 = vpop.f32.mrb[0].mxu0
        %v2830 = vpop.f32.mrb[0].mxu0
        %v2831 = vadd.f32 0.0, %v2830
        %v2832 = vpop.f32.mrb[0].mxu0
        %2833 = vmatprep.mubr.bf16.mxu0 0
        %2834 = vmatmul.mubr.bf16.gmra.mrb[0].mxu0 %v2726
        %v2835 = vpop.f32.mrb[0].mxu0
        %v2836 = vadd.f32 0.0, %v2835
        %v2837 = vpop.f32.mrb[0].mxu0
        %v2838 = vpop.f32.mrb[0].mxu0
        %v2839 = vadd.f32 0.0, %v2838
        %v2840 = vpop.f32.mrb[0].mxu0
        %2841 = vmatprep.mubr.bf16.mxu0 0
        %2842 = vmatmul.mubr.bf16.gmra.mrb[0].mxu0 %v2729
        %v2843 = vpop.f32.mrb[0].mxu0
        %v2844 = vadd.f32 0.0, %v2843
        %v2845 = vpop.f32.mrb[0].mxu0
        %v2846 = vpop.f32.mrb[0].mxu0
        %v2847 = vadd.f32 0.0, %v2846
        %v2848 = vpop.f32.mrb[0].mxu0
        %2849 = vmatprep.mubr.bf16.mxu0 0
        %2850 = vmatmul.mubr.bf16.gmra.mrb[0].mxu0 %v2732
        %v2851 = vpop.f32.mrb[0].mxu0
        %v2852 = vadd.f32 0.0, %v2851
        %v2853 = vpop.f32.mrb[0].mxu0
        %v2854 = vpop.f32.mrb[0].mxu0
        %v2855 = vadd.f32 0.0, %v2854
        %v2856 = vpop.f32.mrb[0].mxu0
        %2857 = vmatprep.mubr.bf16.mxu0 0
        %2858 = vmatmul.mubr.bf16.gmra.mrb[0].mxu0 %v2735
        %v2859 = vpop.f32.mrb[0].mxu0
        %v2860 = vadd.f32 0.0, %v2859
        %v2861 = vpop.f32.mrb[0].mxu0
        %v2862 = vpop.f32.mrb[0].mxu0
        %v2863 = vadd.f32 0.0, %v2862
        %v2864 = vpop.f32.mrb[0].mxu0
        %2865 = vmatprep.mubr.bf16.mxu0 0
        %2866 = vmatmul.mubr.bf16.gmra.mrb[0].mxu0 %v2738
        %v2867 = vpop.f32.mrb[0].mxu0
        %v2868 = vadd.f32 0.0, %v2867
        %v2869 = vpop.f32.mrb[0].mxu0
        %v2870 = vpop.f32.mrb[0].mxu0
        %v2871 = vadd.f32 0.0, %v2870
        %v2872 = vpop.f32.mrb[0].mxu0
        %2873 = vmatprep.mubr.bf16.mxu0 0
        %2874 = vmatmul.mubr.bf16.gmra.mrb[0].mxu0 %v2741
        %v2875 = vpop.f32.mrb[0].mxu0
        %v2876 = vadd.f32 0.0, %v2875
        %v2877 = vpop.f32.mrb[0].mxu0
        %v2878 = vpop.f32.mrb[0].mxu0
        %v2879 = vadd.f32 0.0, %v2878
        %v2880 = vpop.f32.mrb[0].mxu0
        %2881 = vmatprep.mubr.bf16.mxu0 0
        %2882 = vmatmul.mubr.bf16.gmra.mrb[0].mxu0 %v2744
        %v2883 = vpop.f32.mrb[0].mxu0
        %v2884 = vadd.f32 0.0, %v2883
        %v2885 = vpop.f32.mrb[0].mxu0
        %v2886 = vpop.f32.mrb[0].mxu0
        %v2887 = vadd.f32 0.0, %v2886
        %v2888 = vpop.f32.mrb[0].mxu0
        %2889 = vmatprep.mubr.bf16.mxu0 0
        %2890 = vmatmul.mubr.bf16.gmra.mrb[0].mxu0 %v2747
        %v2891 = vpop.f32.mrb[0].mxu0
        %v2892 = vadd.f32 0.0, %v2891
        %v2893 = vpop.f32.mrb[0].mxu0
        %v2894 = vpop.f32.mrb[0].mxu0
        %v2895 = vadd.f32 0.0, %v2894
        %v2896 = vpop.f32.mrb[0].mxu0
        %2897 = vmatprep.mubr.bf16.mxu0 0
        %2898 = vmatmul.mubr.bf16.gmra.mrb[0].mxu0 %v2750
        %v2899 = vpop.f32.mrb[0].mxu0
        %v2900 = vadd.f32 0.0, %v2899
        %v2901 = vpop.f32.mrb[0].mxu0
        %v2902 = vpop.f32.mrb[0].mxu0
        %v2903 = vadd.f32 0.0, %v2902
        %v2904 = vpop.f32.mrb[0].mxu0
        %2905 = vmatprep.mubr.bf16.mxu0 0
        %2906 = vmatmul.mubr.bf16.gmra.mrb[0].mxu0 %v2753
        %v2907 = vpop.f32.mrb[0].mxu0
        %v2908 = vadd.f32 0.0, %v2907
        %v2909 = vpop.f32.mrb[0].mxu0
        %v2910 = vpop.f32.mrb[0].mxu0
        %v2911 = vadd.f32 0.0, %v2910
        %v2912 = vpop.f32.mrb[0].mxu0
        %2913 = vmatprep.mubr.bf16.mxu0 0
        %2914 = vmatmul.mubr.bf16.gmra.mrb[0].mxu0 %v2756
        %v2915 = vpop.f32.mrb[0].mxu0
        %v2916 = vadd.f32 0.0, %v2915
        %v2917 = vpop.f32.mrb[0].mxu0
        %v2918 = vpop.f32.mrb[0].mxu0
        %v2919 = vadd.f32 0.0, %v2918
        %v2920 = vpop.f32.mrb[0].mxu0
        %2921 = vdwg.mxu0
        %v2922 = vadd.f32 %v2628, %v2796
        %v2923 = vadd.f32 %v2629, %v2799
        %v2924 = vadd.f32 %v2630, %v2804
        %v2925 = vadd.f32 %v2631, %v2807
        %v2926 = vadd.f32 %v2632, %v2812
        %v2927 = vadd.f32 %v2633, %v2815
        %v2928 = vadd.f32 %v2634, %v2820
        %v2929 = vadd.f32 %v2635, %v2823
        %v2930 = vadd.f32 %v2636, %v2828
        %v2931 = vadd.f32 %v2637, %v2831
        %v2932 = vadd.f32 %v2638, %v2836
        %v2933 = vadd.f32 %v2639, %v2839
        %v2934 = vadd.f32 %v2640, %v2844
        %v2935 = vadd.f32 %v2641, %v2847
        %v2936 = vadd.f32 %v2642, %v2852
        %v2937 = vadd.f32 %v2643, %v2855
        %v2938 = vadd.f32 %v2644, %v2860
        %v2939 = vadd.f32 %v2645, %v2863
        %v2940 = vadd.f32 %v2646, %v2868
        %v2941 = vadd.f32 %v2647, %v2871
        %v2942 = vadd.f32 %v2648, %v2876
        %v2943 = vadd.f32 %v2649, %v2879
        %v2944 = vadd.f32 %v2650, %v2884
        %v2945 = vadd.f32 %v2651, %v2887
        %v2946 = vadd.f32 %v2652, %v2892
        %v2947 = vadd.f32 %v2653, %v2895
        %v2948 = vadd.f32 %v2654, %v2900
        %v2949 = vadd.f32 %v2655, %v2903
        %v2950 = vadd.f32 %v2656, %v2908
        %v2951 = vadd.f32 %v2657, %v2911
        %v2952 = vadd.f32 %v2658, %v2916
        %v2953 = vadd.f32 %v2659, %v2919
        %v2954 = vld [vmem:[%s2] sm:$0x1]
        %v2956 = vlaneseq
        %v2957 = vshrl.u32 %v2956, 7
        %v2958 = vsub.s32 0, %v2957
        %v2959 = vrot.slane %v2954, %v2958
        %v2961 = vmul.f32 %v2922, %v2959
        %v2962 = vmul.f32 %v2923, %v2959
        %v2963 = vmul.f32 %v2924, %v2959
        %v2964 = vmul.f32 %v2925, %v2959
        %v2965 = vmul.f32 %v2926, %v2959
        %v2966 = vmul.f32 %v2927, %v2959
        %v2967 = vmul.f32 %v2928, %v2959
        %v2968 = vmul.f32 %v2929, %v2959
        %v2969 = vmul.f32 %v2930, %v2959
        %v2970 = vmul.f32 %v2931, %v2959
        %v2971 = vmul.f32 %v2932, %v2959
        %v2972 = vmul.f32 %v2933, %v2959
        %v2973 = vmul.f32 %v2934, %v2959
        %v2974 = vmul.f32 %v2935, %v2959
        %v2975 = vmul.f32 %v2936, %v2959
        %v2976 = vmul.f32 %v2937, %v2959
        %v2977 = vmul.f32 %v2938, %v2959
        %v2978 = vmul.f32 %v2939, %v2959
        %v2979 = vmul.f32 %v2940, %v2959
        %v2980 = vmul.f32 %v2941, %v2959
        %v2981 = vmul.f32 %v2942, %v2959
        %v2982 = vmul.f32 %v2943, %v2959
        %v2983 = vmul.f32 %v2944, %v2959
        %v2984 = vmul.f32 %v2945, %v2959
        %v2985 = vmul.f32 %v2946, %v2959
        %v2986 = vmul.f32 %v2947, %v2959
        %v2987 = vmul.f32 %v2948, %v2959
        %v2988 = vmul.f32 %v2949, %v2959
        %v2989 = vmul.f32 %v2950, %v2959
        %v2990 = vmul.f32 %v2951, %v2959
        %v2991 = vmul.f32 %v2952, %v2959
        %v2992 = vmul.f32 %v2953, %v2959
        %v2993 = vld [vmem:[%s3] sm:$0x1]
        %v2995 = vlaneseq
        %v2996 = vshrl.u32 %v2995, 7
        %v2997 = vsub.s32 0, %v2996
        %v2998 = vrot.slane %v2993, %v2997
        %v3000 = vadd.f32 %v2961, %v2998
        %v3001 = vadd.f32 %v2962, %v2998
        %v3002 = vadd.f32 %v2963, %v2998
        %v3003 = vadd.f32 %v2964, %v2998
        %v3004 = vadd.f32 %v2965, %v2998
        %v3005 = vadd.f32 %v2966, %v2998
        %v3006 = vadd.f32 %v2967, %v2998
        %v3007 = vadd.f32 %v2968, %v2998
        %v3008 = vadd.f32 %v2969, %v2998
        %v3009 = vadd.f32 %v2970, %v2998
        %v3010 = vadd.f32 %v2971, %v2998
        %v3011 = vadd.f32 %v2972, %v2998
        %v3012 = vadd.f32 %v2973, %v2998
        %v3013 = vadd.f32 %v2974, %v2998
        %v3014 = vadd.f32 %v2975, %v2998
        %v3015 = vadd.f32 %v2976, %v2998
        %v3016 = vadd.f32 %v2977, %v2998
        %v3017 = vadd.f32 %v2978, %v2998
        %v3018 = vadd.f32 %v2979, %v2998
        %v3019 = vadd.f32 %v2980, %v2998
        %v3020 = vadd.f32 %v2981, %v2998
        %v3021 = vadd.f32 %v2982, %v2998
        %v3022 = vadd.f32 %v2983, %v2998
        %v3023 = vadd.f32 %v2984, %v2998
        %v3024 = vadd.f32 %v2985, %v2998
        %v3025 = vadd.f32 %v2986, %v2998
        %v3026 = vadd.f32 %v2987, %v2998
        %v3027 = vadd.f32 %v2988, %v2998
        %v3028 = vadd.f32 %v2989, %v2998
        %v3029 = vadd.f32 %v2990, %v2998
        %v3030 = vadd.f32 %v2991, %v2998
        %v3031 = vadd.f32 %v2992, %v2998
        %v3032 = vmax.f32 %v3000, 0.0
        %v3033 = vmax.f32 %v3001, 0.0
        %v3034 = vmax.f32 %v3002, 0.0
        %v3035 = vmax.f32 %v3003, 0.0
        %v3036 = vmax.f32 %v3004, 0.0
        %v3037 = vmax.f32 %v3005, 0.0
        %v3038 = vmax.f32 %v3006, 0.0
        %v3039 = vmax.f32 %v3007, 0.0
        %v3040 = vmax.f32 %v3008, 0.0
        %v3041 = vmax.f32 %v3009, 0.0
        %v3042 = vmax.f32 %v3010, 0.0
        %v3043 = vmax.f32 %v3011, 0.0
        %v3044 = vmax.f32 %v3012, 0.0
        %v3045 = vmax.f32 %v3013, 0.0
        %v3046 = vmax.f32 %v3014, 0.0
        %v3047 = vmax.f32 %v3015, 0.0
        %v3048 = vmax.f32 %v3016, 0.0
        %v3049 = vmax.f32 %v3017, 0.0
        %v3050 = vmax.f32 %v3018, 0.0
        %v3051 = vmax.f32 %v3019, 0.0
        %v3052 = vmax.f32 %v3020, 0.0
        %v3053 = vmax.f32 %v3021, 0.0
        %v3054 = vmax.f32 %v3022, 0.0
        %v3055 = vmax.f32 %v3023, 0.0
        %v3056 = vmax.f32 %v3024, 0.0
        %v3057 = vmax.f32 %v3025, 0.0
        %v3058 = vmax.f32 %v3026, 0.0
        %v3059 = vmax.f32 %v3027, 0.0
        %v3060 = vmax.f32 %v3028, 0.0
        %v3061 = vmax.f32 %v3029, 0.0
        %v3062 = vmax.f32 %v3030, 0.0
        %v3063 = vmax.f32 %v3031, 0.0
        %v3064 = vpack.c.bf16 %v3033, %v3032
        %v3065 = vpack.c.bf16 %v3035, %v3034
        %v3066 = vpack.c.bf16 %v3037, %v3036
        %v3067 = vpack.c.bf16 %v3039, %v3038
        %v3068 = vpack.c.bf16 %v3041, %v3040
        %v3069 = vpack.c.bf16 %v3043, %v3042
        %v3070 = vpack.c.bf16 %v3045, %v3044
        %v3071 = vpack.c.bf16 %v3047, %v3046
        %v3072 = vpack.c.bf16 %v3049, %v3048
        %v3073 = vpack.c.bf16 %v3051, %v3050
        %v3074 = vpack.c.bf16 %v3053, %v3052
        %v3075 = vpack.c.bf16 %v3055, %v3054
        %v3076 = vpack.c.bf16 %v3057, %v3056
        %v3077 = vpack.c.bf16 %v3059, %v3058
        %v3078 = vpack.c.bf16 %v3061, %v3060
        %v3079 = vpack.c.bf16 %v3063, %v3062
        %v3096 = vunpack.c.l.b16 %v3064
        %v3097 = vunpack.c.h.b16 %v3064
        %v3098 = vunpack.c.l.b16 %v3065
        %v3099 = vunpack.c.h.b16 %v3065
        %v3100 = vunpack.c.l.b16 %v3066
        %v3101 = vunpack.c.h.b16 %v3066
        %v3102 = vunpack.c.l.b16 %v3067
        %v3103 = vunpack.c.h.b16 %v3067
        %v3104 = vunpack.c.l.b16 %v3068
        %v3105 = vunpack.c.h.b16 %v3068
        %v3106 = vunpack.c.l.b16 %v3069
        %v3107 = vunpack.c.h.b16 %v3069
        %v3108 = vunpack.c.l.b16 %v3070
        %v3109 = vunpack.c.h.b16 %v3070
        %v3110 = vunpack.c.l.b16 %v3071
        %v3111 = vunpack.c.h.b16 %v3071
        %v3112 = vunpack.c.l.b16 %v3072
        %v3113 = vunpack.c.h.b16 %v3072
        %v3114 = vunpack.c.l.b16 %v3073
        %v3115 = vunpack.c.h.b16 %v3073
        %v3116 = vunpack.c.l.b16 %v3074
        %v3117 = vunpack.c.h.b16 %v3074
        %v3118 = vunpack.c.l.b16 %v3075
        %v3119 = vunpack.c.h.b16 %v3075
        %v3120 = vunpack.c.l.b16 %v3076
        %v3121 = vunpack.c.h.b16 %v3076
        %v3122 = vunpack.c.l.b16 %v3077
        %v3123 = vunpack.c.h.b16 %v3077
        %v3124 = vunpack.c.l.b16 %v3078
        %v3125 = vunpack.c.h.b16 %v3078
        %v3126 = vunpack.c.l.b16 %v3079
        %v3127 = vunpack.c.h.b16 %v3079
        %v3128 = vpack.c.b16 %v3096, %v3096
        %v3129 = vpack.c.b16 %v3097, %v3097
        %v3130 = vpack.c.b16 %v3098, %v3098
        %v3131 = vpack.c.b16 %v3099, %v3099
        %v3132 = vpack.c.b16 %v3100, %v3100
        %v3133 = vpack.c.b16 %v3101, %v3101
        %v3134 = vpack.c.b16 %v3102, %v3102
        %v3135 = vpack.c.b16 %v3103, %v3103
        %v3136 = vpack.c.b16 %v3104, %v3104
        %v3137 = vpack.c.b16 %v3105, %v3105
        %v3138 = vpack.c.b16 %v3106, %v3106
        %v3139 = vpack.c.b16 %v3107, %v3107
        %v3140 = vpack.c.b16 %v3108, %v3108
        %v3141 = vpack.c.b16 %v3109, %v3109
        %v3142 = vpack.c.b16 %v3110, %v3110
        %v3143 = vpack.c.b16 %v3111, %v3111
        %v3144 = vpack.c.b16 %v3112, %v3112
        %v3145 = vpack.c.b16 %v3113, %v3113
        %v3146 = vpack.c.b16 %v3114, %v3114
        %v3147 = vpack.c.b16 %v3115, %v3115
        %v3148 = vpack.c.b16 %v3116, %v3116
        %v3149 = vpack.c.b16 %v3117, %v3117
        %v3150 = vpack.c.b16 %v3118, %v3118
        %v3151 = vpack.c.b16 %v3119, %v3119
        %v3152 = vpack.c.b16 %v3120, %v3120
        %v3153 = vpack.c.b16 %v3121, %v3121
        %v3154 = vpack.c.b16 %v3122, %v3122
        %v3155 = vpack.c.b16 %v3123, %v3123
        %v3156 = vpack.c.b16 %v3124, %v3124
        %v3157 = vpack.c.b16 %v3125, %v3125
        %v3158 = vpack.c.b16 %v3126, %v3126
        %v3159 = vpack.c.b16 %v3127, %v3127
        %vm3192 = vcmask 519168
        %3193 = vst.msk [vmem:[%s190] sm:$0xf] %vm3192, %v3128
        %3194 = vst.msk [vmem:[%s190 + $0x4] sm:$0xf] %vm3192, %v3129
        %3195 = vst.msk [vmem:[%s190 + $0x8] sm:$0xf] %vm3192, %v3130
        %3196 = vst.msk [vmem:[%s190 + $0xc] sm:$0xf] %vm3192, %v3131
        %3197 = vst.msk [vmem:[%s190 + $0x10] sm:$0xf] %vm3192, %v3132
        %3198 = vst.msk [vmem:[%s190 + $0x14] sm:$0xf] %vm3192, %v3133
        %3199 = vst.msk [vmem:[%s190 + $0x18] sm:$0xf] %vm3192, %v3134
        %3200 = vst.msk [vmem:[%s190 + $0x1c] sm:$0xf] %vm3192, %v3135
        %3201 = vst.msk [vmem:[%s190 + $0x20] sm:$0xf] %vm3192, %v3136
        %3202 = vst.msk [vmem:[%s190 + $0x24] sm:$0xf] %vm3192, %v3137
        %3203 = vst.msk [vmem:[%s190 + $0x28] sm:$0xf] %vm3192, %v3138
        %3204 = vst.msk [vmem:[%s190 + $0x2c] sm:$0xf] %vm3192, %v3139
        %3205 = vst.msk [vmem:[%s190 + $0x30] sm:$0xf] %vm3192, %v3140
        %3206 = vst.msk [vmem:[%s190 + $0x34] sm:$0xf] %vm3192, %v3141
        %3207 = vst.msk [vmem:[%s190 + $0x38] sm:$0xf] %vm3192, %v3142
        %3208 = vst.msk [vmem:[%s190 + $0x3c] sm:$0xf] %vm3192, %v3143
        %3209 = vst.msk [vmem:[%s190 + $0x40] sm:$0xf] %vm3192, %v3144
        %3210 = vst.msk [vmem:[%s190 + $0x44] sm:$0xf] %vm3192, %v3145
        %3211 = vst.msk [vmem:[%s190 + $0x48] sm:$0xf] %vm3192, %v3146
        %3212 = vst.msk [vmem:[%s190 + $0x4c] sm:$0xf] %vm3192, %v3147
        %3213 = vst.msk [vmem:[%s190 + $0x50] sm:$0xf] %vm3192, %v3148
        %3214 = vst.msk [vmem:[%s190 + $0x54] sm:$0xf] %vm3192, %v3149
        %3215 = vst.msk [vmem:[%s190 + $0x58] sm:$0xf] %vm3192, %v3150
        %3216 = vst.msk [vmem:[%s190 + $0x5c] sm:$0xf] %vm3192, %v3151
        %3217 = vst.msk [vmem:[%s190 + $0x60] sm:$0xf] %vm3192, %v3152
        %3218 = vst.msk [vmem:[%s190 + $0x64] sm:$0xf] %vm3192, %v3153
        %3219 = vst.msk [vmem:[%s190 + $0x68] sm:$0xf] %vm3192, %v3154
        %3220 = vst.msk [vmem:[%s190 + $0x6c] sm:$0xf] %vm3192, %v3155
        %3221 = vst.msk [vmem:[%s190 + $0x70] sm:$0xf] %vm3192, %v3156
        %3222 = vst.msk [vmem:[%s190 + $0x74] sm:$0xf] %vm3192, %v3157
        %3223 = vst.msk [vmem:[%s190 + $0x78] sm:$0xf] %vm3192, %v3158
        %3224 = vst.msk [vmem:[%s190 + $0x7c] sm:$0xf] %vm3192, %v3159
        %s3225 = sand.u32 %s115, 1
        %s3226 = scalar_lea.sflag [#allocation4], %s3225
        %s3227 = sand.u32 %s115, 1
        %s3228 = smul.addr %s3227, 128
        %s3229 = scalar_lea.vmem [#allocation3], %s3228
        // Predicated region
        $region37: #{tpu_custom_call.1} parent=35 // pred_check
          %p3230 = pneg %p125
        $region38: #{tpu_custom_call.1} parent=35 // pred_check_branch
          %3232 = sbr.rel (%p3230) target = $region40
        $region39: #{tpu_custom_call.1} parent=35 // pred_region
          %s3234 = ssub.s32 2048, 2048
          %3235 = vsyncadd %s3226, %s3234
          %s3236 = smul.addr %s18, 32
          %s3237 = smul.addr %s3236, 64
          %s3238 = scalar_lea.hbm %s4, %s3237
          %s3239 = sshll.u32 %s3229, 4
          %s3240 = int_to_ptr.vmem [resolvable:$true] %s3239
          %3245 = dma.vmem_to_hbm [thread:$0]  %s3240, 2048, %s3238, %s3226, 64, 64, 4
        $region40: #{tpu_custom_call.1} parent=35 // pred_fallthru
          _
      $region36: #{tpu_custom_call.1} parent=5 // pred_fallthru
        _
      %p3246 = scmp.le.s32.totalorder 2, %s13
      // Predicated region
      $region41: #{tpu_custom_call.1} parent=5 // pred_check
        %p3247 = pneg %p3246
      $region42: #{tpu_custom_call.1} parent=5 // pred_check_branch
        %3249 = sbr.rel (%p3247) target = $region44
      $region43: #{tpu_custom_call.1} parent=5 // pred_region
        %s3250 = ssub.s32 %s13, 2
        // Predicated region
        $region45: #{tpu_custom_call.1} parent=43 // pred_check
          %p3251 = pneg %p131
        $region46: #{tpu_custom_call.1} parent=43 // pred_check_branch
          %3253 = sbr.rel (%p3251) target = $region48
        $region47: #{tpu_custom_call.1} parent=43 // pred_region
          %s3254 = sand.u32 %s116, 1
          %s3255 = scalar_lea.sflag [#allocation4], %s3254
          %s3256 = sand.u32 %s116, 1
          %s3257 = smul.addr %s3256, 128
          %s3258 = scalar_lea.vmem [#allocation3], %s3257
          %3259 = dma.done %s3255, 2048
        $region48: #{tpu_custom_call.1} parent=43 // pred_fallthru
          _
      $region44: #{tpu_custom_call.1} parent=5 // pred_fallthru
        _
    $region6: #{tpu_custom_call.1} parent=1 // loop_footer
      %s17 = sadd.s32 1, %s13
    $region7: #{tpu_custom_call.1} parent=1 // loop_footer_branch
      %12 = sbr.rel target = $region3
    $region8: #{tpu_custom_call.1} parent=1 // loop_exit
      _
    %3260 = vsyncpa [#allocation4], 1
    %s3261 = scalar_lea.sflag [#allocation4], 1
    %3262 = vsyncpa %s3261, 1

</llo_original>
